<compile_context>
chip_gen: v7x
topology: tpu7x:2x2x1
jax: 0.10.0
libtpu: 0.0.40
codegen_flags: <defaults>
</compile_context>

<pallas_src>
import math
import numpy as np

import jax
import jax.numpy as jnp
from jax import lax
from jax.experimental import pallas as pl
from jax.experimental.pallas import tpu as pltpu

# ----------------------------- configuration -------------------------------
L = 3
REP_DIM = 2 * L + 1            # 7
BATCH = 2
SEQ_LEN = 4                    # robot_state_len == object_state_len
ROBOT_FIELDS = 2               # fields per timestep of robot_state_type
OBJECT_FIELDS = 3              # fields per timestep of object_state_type
MODEL_FIELDS = 8               # model_dim (in fields)
TRANS_OUT_FIELDS = 4           # trans_out_dim (in fields)
NUM_HEADS = 2                  # trans_heads
NUM_LAYERS = 2                 # trans_layers
FF_FIELDS = 2 * MODEL_FIELDS   # transformer feed-forward hidden fields
Z_FIELDS = 8                   # z_dim (in fields)

MODEL_DIM = MODEL_FIELDS * REP_DIM            # 56
HEAD_DIM = MODEL_DIM // NUM_HEADS             # 28
TRANS_OUT_DIM = TRANS_OUT_FIELDS * REP_DIM    # 28
FLAT_DIM = SEQ_LEN * TRANS_OUT_DIM            # 112
FF_DIM = FF_FIELDS * REP_DIM                  # 112
Z_DIM = Z_FIELDS * REP_DIM                    # 56
BS = BATCH * SEQ_LEN                          # 8

ROBOT_DIM = ROBOT_FIELDS * REP_DIM            # 14
OBJECT_DIM = OBJECT_FIELDS * REP_DIM          # 21

ATTN_SCALE = 1.0 / math.sqrt(HEAD_DIM)
PACK_LANES = 128


# ------------------------ packed-parameter layout ---------------------------
def _round8(n):
    return ((n + 7) // 8) * 8


def _param_layout():
    e = [
        ("w_re", (ROBOT_DIM, MODEL_DIM)), ("b_re", (1, MODEL_DIM)),
        ("w_oe", (OBJECT_DIM, MODEL_DIM)), ("b_oe", (1, MODEL_DIM)),
    ]
    for l in range(NUM_LAYERS):
        e += [
            (f"wq{l}", (MODEL_DIM, MODEL_DIM)), (f"bq{l}", (1, MODEL_DIM)),
            (f"wkv{l}", (MODEL_DIM, 2 * MODEL_DIM)), (f"bkv{l}", (1, 2 * MODEL_DIM)),
            (f"wo{l}", (MODEL_DIM, MODEL_DIM)), (f"bo{l}", (1, MODEL_DIM)),
            (f"wff1{l}", (MODEL_DIM, FF_DIM)), (f"bff1{l}", (1, FF_DIM)),
            (f"wff2{l}", (FF_DIM, MODEL_DIM)), (f"bff2{l}", (1, MODEL_DIM)),
        ]
    e += [
        ("w_to", (MODEL_DIM, TRANS_OUT_DIM)), ("b_to", (1, TRANS_OUT_DIM)),
        ("w_m1", (FLAT_DIM, Z_DIM)), ("b_m1", (1, Z_DIM)),
        ("w_m2", (Z_DIM, Z_DIM)), ("b_m2", (1, Z_DIM)),
        ("bs_ff", (FF_DIM, FF_FIELDS)),
        ("bs_z", (Z_DIM, Z_FIELDS)),
        ("attn_mask", (BS, BS)),
        ("flat_mask", (BS, FLAT_DIM)),
        ("sel_b", (BATCH, BS)),
    ]
    return e


_LAYOUT = _param_layout()
_OFFSETS = {}
_cursor = 0
for _name, (_r, _c) in _LAYOUT:
    _OFFSETS[_name] = (_cursor, _r, _c)
    _cursor += _round8(_r)       # 8-row alignment -> aligned sublane slices
PACK_ROWS = _cursor


# ------------------------------ fused kernel --------------------------------
def fused_forward_kernel(robot_ref, object_ref, params_ref, out_ref):
    """Entire SO2RobotStateObjectPoseEncoder forward in one kernel, no scratch."""

    def P(name):
        o, r, c = _OFFSETS[name]
        return params_ref[o:o + r, 0:c]          # static, 8-row-aligned slice

    def linear(x, wn, bn):
        return jnp.dot(x, P(wn), preferred_element_type=jnp.float32) + P(bn)

    def norm_gate(x, bsn):
        # SO(2)-equivariant norm nonlinearity, lane-dense: per-field squared
        # norms via a constant 0/1 block-sum matrix on the MXU.
        bs = P(bsn)                                                    # (D, F)
        nsq = jnp.dot(x * x, bs, preferred_element_type=jnp.float32)  # (N, F)
        g = jax.nn.sigmoid(jnp.sqrt(nsq + 1e-6) - 1.0)                # (N, F)
        g_full = lax.dot_general(g, bs, (((1,), (1,)), ((), ())),
                                 preferred_element_type=jnp.float32)  # (N, D)
        return x * g_full

    # equivariant embeddings (FieldDropout is identity in eval mode)
    robot_embed = linear(robot_ref[...], "w_re", "b_re")     # (BS, MODEL_DIM)
    x = linear(object_ref[...], "w_oe", "b_oe")              # query stream

    attn_mask = P("attn_mask")                               # (BS, BS) block-diag 0 / -1e30

    # SO2Transformer(robot_embed, query=object_embed)
    for l in range(NUM_LAYERS):
        q = linear(x, f"wq{l}", f"bq{l}")                    # scale folded into wq/bq
        kv = linear(robot_embed, f"wkv{l}", f"bkv{l}")       # (BS, 2*MODEL_DIM)

        head_outs = []
        for h in range(NUM_HEADS):
            c0 = h * HEAD_DIM
            qh = q[:, c0:c0 + HEAD_DIM]                                    # (BS, HD)
            kh = kv[:, c0:c0 + HEAD_DIM]                                   # (BS, HD)
            vh = kv[:, MODEL_DIM + c0:MODEL_DIM + c0 + HEAD_DIM]           # (BS, HD)
            sc = lax.dot_general(qh, kh, (((1,), (1,)), ((), ())),
                                 preferred_element_type=jnp.float32)       # (BS, BS)
            sc = sc + attn_mask                                            # kill cross-batch
            sc = sc - jnp.max(sc, axis=-1, keepdims=True)
            p = jnp.exp(sc)
            p = p / jnp.sum(p, axis=-1, keepdims=True)                     # exact recip
            head_outs.append(jnp.dot(p, vh, preferred_element_type=jnp.float32))
        attn = jnp.concatenate(head_outs, axis=1)                          # (BS, MODEL_DIM)

        x = x + linear(attn, f"wo{l}", f"bo{l}")                           # residual
        hdn = norm_gate(linear(x, f"wff1{l}", f"bff1{l}"), "bs_ff")        # (BS, FF_DIM)
        x = x + linear(hdn, f"wff2{l}", f"bff2{l}")                        # residual

    # per-token projection to trans_out_type, then lane-dense sequence flatten
    y = linear(x, "w_to", "b_to")                                          # (BS, TRANS_OUT_DIM)
    y_wide = jnp.concatenate([y] * SEQ_LEN, axis=1) * P("flat_mask")       # (BS, FLAT_DIM)
    x_flat = jnp.dot(P("sel_b"), y_wide,
                     preferred_element_type=jnp.float32)                   # (BATCH, FLAT_DIM)

    # SO2MLP(trans_type -> out_type), act_out=False
    h1 = norm_gate(linear(x_flat, "w_m1", "b_m1"), "bs_z")
    out_ref[...] = linear(h1, "w_m2", "b_m2")                              # (BATCH, Z_DIM)


# ------------------------ SO(2)-equivariant weights -------------------------
def build_so2_linear(key, c_in, c_out, bl=L):
    """Dense (c_in*R, c_out*R) weight with SO(2)-equivariant block structure."""
    r = 2 * bl + 1
    keys = jax.random.split(key, 2 * bl + 2)
    scale = 1.0 / np.sqrt(c_in)
    w = np.zeros((c_in * r, c_out * r), np.float32)
    w0 = np.asarray(jax.random.normal(keys[0], (c_in, c_out), jnp.float32)) * scale
    w[0::r, 0::r] = w0
    for f in range(1, bl + 1):
        a = np.asarray(jax.random.normal(keys[2 * f - 1], (c_in, c_out), jnp.float32)) * scale
        b = np.asarray(jax.random.normal(keys[2 * f], (c_in, c_out), jnp.float32)) * scale
        c, s = 2 * f - 1, 2 * f
        w[c::r, c::r] = a
        w[s::r, s::r] = a
        w[c::r, s::r] = -b
        w[s::r, c::r] = b
    bias = np.zeros((c_out * r,), np.float32)
    bias[0::r] = np.asarray(jax.random.normal(keys[-1], (c_out,), jnp.float32)) * 0.01
    return w, bias


def make_blocksum(n_fields, rep_dim=REP_DIM):
    """(n_fields*rep_dim, n_fields) 0/1 block matrix summing channels per field."""
    m = np.zeros((n_fields * rep_dim, n_fields), np.float32)
    for f in range(n_fields):
        m[f * rep_dim:(f + 1) * rep_dim, f] = 1.0
    return m


def init_params(key):
    keys = iter(jax.random.split(key, 64))
    params = {
        "robot_emb": build_so2_linear(next(keys), ROBOT_FIELDS, MODEL_FIELDS),
        "object_emb": build_so2_linear(next(keys), OBJECT_FIELDS, MODEL_FIELDS),
        "layers": [],
        "trans_out": build_so2_linear(next(keys), MODEL_FIELDS, TRANS_OUT_FIELDS),
        "mlp1": build_so2_linear(next(keys), TRANS_OUT_FIELDS * SEQ_LEN, Z_FIELDS),
        "mlp2": build_so2_linear(next(keys), Z_FIELDS, Z_FIELDS),
    }
    for _ in range(NUM_LAYERS):
        lp = {name: build_so2_linear(next(keys), MODEL_FIELDS, MODEL_FIELDS)
              for name in ("q", "k", "v", "o")}
        lp["ff1"] = build_so2_linear(next(keys), MODEL_FIELDS, FF_FIELDS)
        lp["ff2"] = build_so2_linear(next(keys), FF_FIELDS, MODEL_FIELDS)
        params["layers"].append(lp)
    return params


def pack_params(params):
    """Pack all weights/biases/constants into one (PACK_ROWS, 128) f32 array."""
    buf = np.zeros((PACK_ROWS, PACK_LANES), np.float32)

    def put(name, arr):
        arr = np.asarray(arr, np.float32)
        if arr.ndim == 1:
            arr = arr.reshape(1, -1)
        o, r, c = _OFFSETS[name]
        assert arr.shape == (r, c), (name, arr.shape, (r, c))
        buf[o:o + r, :c] = arr

    w, b = params["robot_emb"];  put("w_re", w); put("b_re", b)
    w, b = params["object_emb"]; put("w_oe", w); put("b_oe", b)
    for l, lp in enumerate(params["layers"]):
        wq, bq = lp["q"]
        put(f"wq{l}", wq * ATTN_SCALE)          # fold attention scale
        put(f"bq{l}", bq * ATTN_SCALE)
        wk, bk = lp["k"]
        wv, bv = lp["v"]
        put(f"wkv{l}", np.concatenate([wk, wv], axis=1))
        put(f"bkv{l}", np.concatenate([bk, bv], axis=0))
        wo, bo = lp["o"];   put(f"wo{l}", wo);   put(f"bo{l}", bo)
        w1, b1 = lp["ff1"]; put(f"wff1{l}", w1); put(f"bff1{l}", b1)
        w2, b2 = lp["ff2"]; put(f"wff2{l}", w2); put(f"bff2{l}", b2)
    w, b = params["trans_out"]; put("w_to", w); put("b_to", b)
    w, b = params["mlp1"];      put("w_m1", w); put("b_m1", b)
    w, b = params["mlp2"];      put("w_m2", w); put("b_m2", b)
    put("bs_ff", make_blocksum(FF_FIELDS))
    put("bs_z", make_blocksum(Z_FIELDS))

    # constant cross-batch attention mask (block-diagonal 0 / -1e30)
    attn_mask = np.full((BS, BS), -1e30, np.float32)
    for i in range(BS):
        for j in range(BS):
            if i // SEQ_LEN == j // SEQ_LEN:
                attn_mask[i, j] = 0.0
    put("attn_mask", attn_mask)

    # constant row-placement mask for the lane-dense sequence flatten
    flat_mask = np.zeros((BS, FLAT_DIM), np.float32)
    for r_ in range(BS):
        t = r_ % SEQ_LEN
        flat_mask[r_, t * TRANS_OUT_DIM:(t + 1) * TRANS_OUT_DIM] = 1.0
    put("flat_mask", flat_mask)

    # constant batch-selection matrix (BATCH, BS)
    sel_b = np.zeros((BATCH, BS), np.float32)
    for r_ in range(BS):
        sel_b[r_ // SEQ_LEN, r_] = 1.0
    put("sel_b", sel_b)

    return jnp.asarray(buf)


# --------------------------------- forward ----------------------------------
@jax.jit
def forward(robot_state, object_state, packed_params):
    b, s, dr = robot_state.shape
    robot2d = robot_state.reshape(b * s, dr)
    object2d = object_state.reshape(b * s, object_state.shape[-1])

    vmem = pl.BlockSpec(memory_space=pltpu.MemorySpace.VMEM)
    return pl.pallas_call(
        fused_forward_kernel,
        out_shape=jax.ShapeDtypeStruct((BATCH, Z_DIM), jnp.float32),
        in_specs=[vmem, vmem, vmem],
        out_specs=vmem,
    )(robot2d, object2d, packed_params)


# --------------------------- pure-JAX reference ------------------------------
def reference_forward(params, robot_state, object_state):
    b, s, _ = robot_state.shape
    robot2d = robot_state.reshape(b * s, -1)
    object2d = object_state.reshape(b * s, -1)

    def lin(p, x):
        w, bb = p
        return x @ jnp.asarray(w) + jnp.asarray(bb)

    def gate(x, nf):
        bs = jnp.asarray(make_blocksum(nf))
        nsq = (x * x) @ bs
        g = jax.nn.sigmoid(jnp.sqrt(nsq + 1e-6) - 1.0)
        return x * (g @ bs.T)

    re = lin(params["robot_emb"], robot2d)
    x = lin(params["object_emb"], object2d)
    for lp in params["layers"]:
        q = lin(lp["q"], x) * ATTN_SCALE
        k = lin(lp["k"], re)
        v = lin(lp["v"], re)
        rows = []
        for bi in range(BATCH):
            r0 = bi * SEQ_LEN
            outs = []
            for h in range(NUM_HEADS):
                c0 = h * HEAD_DIM
                qh = q[r0:r0 + SEQ_LEN, c0:c0 + HEAD_DIM]
                kh = k[r0:r0 + SEQ_LEN, c0:c0 + HEAD_DIM]
                vh = v[r0:r0 + SEQ_LEN, c0:c0 + HEAD_DIM]
                p = jax.nn.softmax(qh @ kh.T, axis=-1)
                outs.append(p @ vh)
            rows.append(jnp.concatenate(outs, axis=1))
        attn = jnp.concatenate(rows, axis=0)
        x = x + lin(lp["o"], attn)
        hdn = gate(lin(lp["ff1"], x), FF_FIELDS)
        x = x + lin(lp["ff2"], hdn)
    y = lin(params["trans_out"], x)
    x_flat = y.reshape(BATCH, FLAT_DIM)
    h1 = gate(lin(params["mlp1"], x_flat), Z_FIELDS)
    return lin(params["mlp2"], h1)


# ----------------------------------- main ------------------------------------
if __name__ == "__main__":
    root = jax.random.PRNGKey(0)
    k_par, k_rob, k_obj = jax.random.split(root, 3)

    params = init_params(k_par)
    packed = pack_params(params)

    robot_state = jax.random.normal(k_rob, (BATCH, SEQ_LEN, ROBOT_DIM), jnp.float32)
    object_state = jax.random.normal(k_obj, (BATCH, SEQ_LEN, OBJECT_DIM), jnp.float32)

    out = forward(robot_state, object_state, packed)
    out = jax.block_until_ready(out)

    assert out.shape == (BATCH, Z_DIM), out.shape
    assert bool(jnp.all(jnp.isfinite(out)))

    ref = reference_forward(params, robot_state, object_state)
    err = float(jnp.max(jnp.abs(out - ref)))
    assert err < 1e-2, f"kernel/reference mismatch, max abs err = {err}"

    print("KERNEL_OK")
</pallas_src>

<mosaic_0001>
module attributes {stable_mosaic.version = 11 : i64} {
  func.func @fused_forward_kernel(%arg0: memref<8x14xf32, #tpu.memory_space<vmem>>, %arg1: memref<8x21xf32, #tpu.memory_space<vmem>>, %arg2: memref<1248x128xf32, #tpu.memory_space<vmem>>, %arg3: memref<2x56xf32, #tpu.memory_space<vmem>>) attributes {dimension_semantics = [], scalar_prefetch = 0 : i64, scratch_operands = 0 : i64, tpu.core_type = #tpu.core_type<tc>} {
    %c0 = arith.constant 0 : index
    %c0_0 = arith.constant 0 : index
    %0 = vector.load %arg0[%c0, %c0_0] : memref<8x14xf32, #tpu.memory_space<vmem>>, vector<8x14xf32>
    %c0_1 = arith.constant 0 : index
    %c0_2 = arith.constant 0 : index
    %1 = vector.load %arg2[%c0_1, %c0_2] : memref<1248x128xf32, #tpu.memory_space<vmem>>, vector<14x56xf32>
    %cst = arith.constant dense<0.000000e+00> : vector<8x56xf32>
    %2 = tpu.matmul %0, %1, %cst {dimension_numbers = #tpu.dot_dimension_numbers<[1], [0], [0], [1], [0, 0, 1, 1], [], []>} : vector<8x14xf32>, vector<14x56xf32>, vector<8x56xf32> -> vector<8x56xf32>
    %c16 = arith.constant 16 : index
    %c0_3 = arith.constant 0 : index
    %3 = vector.load %arg2[%c16, %c0_3] : memref<1248x128xf32, #tpu.memory_space<vmem>>, vector<1x56xf32>
    %4 = vector.broadcast %3 : vector<1x56xf32> to vector<8x56xf32>
    %5 = arith.addf %2, %4 : vector<8x56xf32>
    %c0_4 = arith.constant 0 : index
    %c0_5 = arith.constant 0 : index
    %6 = vector.load %arg1[%c0_4, %c0_5] : memref<8x21xf32, #tpu.memory_space<vmem>>, vector<8x21xf32>
    %c24 = arith.constant 24 : index
    %c0_6 = arith.constant 0 : index
    %7 = vector.load %arg2[%c24, %c0_6] : memref<1248x128xf32, #tpu.memory_space<vmem>>, vector<21x56xf32>
    %cst_7 = arith.constant dense<0.000000e+00> : vector<8x56xf32>
    %8 = tpu.matmul %6, %7, %cst_7 {dimension_numbers = #tpu.dot_dimension_numbers<[1], [0], [0], [1], [0, 0, 1, 1], [], []>} : vector<8x21xf32>, vector<21x56xf32>, vector<8x56xf32> -> vector<8x56xf32>
    %c48 = arith.constant 48 : index
    %c0_8 = arith.constant 0 : index
    %9 = vector.load %arg2[%c48, %c0_8] : memref<1248x128xf32, #tpu.memory_space<vmem>>, vector<1x56xf32>
    %10 = vector.broadcast %9 : vector<1x56xf32> to vector<8x56xf32>
    %11 = arith.addf %8, %10 : vector<8x56xf32>
    %c1224 = arith.constant 1224 : index
    %c0_9 = arith.constant 0 : index
    %12 = vector.load %arg2[%c1224, %c0_9] : memref<1248x128xf32, #tpu.memory_space<vmem>>, vector<8x8xf32>
    %c56 = arith.constant 56 : index
    %c0_10 = arith.constant 0 : index
    %13 = vector.load %arg2[%c56, %c0_10] : memref<1248x128xf32, #tpu.memory_space<vmem>>, vector<56x56xf32>
    %cst_11 = arith.constant dense<0.000000e+00> : vector<8x56xf32>
    %14 = tpu.matmul %11, %13, %cst_11 {dimension_numbers = #tpu.dot_dimension_numbers<[1], [0], [0], [1], [0, 0, 1, 1], [], []>} : vector<8x56xf32>, vector<56x56xf32>, vector<8x56xf32> -> vector<8x56xf32>
    %c112 = arith.constant 112 : index
    %c0_12 = arith.constant 0 : index
    %15 = vector.load %arg2[%c112, %c0_12] : memref<1248x128xf32, #tpu.memory_space<vmem>>, vector<1x56xf32>
    %16 = vector.broadcast %15 : vector<1x56xf32> to vector<8x56xf32>
    %17 = arith.addf %14, %16 : vector<8x56xf32>
    %c120 = arith.constant 120 : index
    %c0_13 = arith.constant 0 : index
    %18 = vector.load %arg2[%c120, %c0_13] : memref<1248x128xf32, #tpu.memory_space<vmem>>, vector<56x112xf32>
    %cst_14 = arith.constant dense<0.000000e+00> : vector<8x112xf32>
    %19 = tpu.matmul %5, %18, %cst_14 {dimension_numbers = #tpu.dot_dimension_numbers<[1], [0], [0], [1], [0, 0, 1, 1], [], []>} : vector<8x56xf32>, vector<56x112xf32>, vector<8x112xf32> -> vector<8x112xf32>
    %c176 = arith.constant 176 : index
    %c0_15 = arith.constant 0 : index
    %20 = vector.load %arg2[%c176, %c0_15] : memref<1248x128xf32, #tpu.memory_space<vmem>>, vector<1x112xf32>
    %21 = vector.broadcast %20 : vector<1x112xf32> to vector<8x112xf32>
    %22 = arith.addf %19, %21 : vector<8x112xf32>
    %23 = vector.extract_strided_slice %17 {offsets = [0, 0], sizes = [8, 28], strides = [1, 1]} : vector<8x56xf32> to vector<8x28xf32>
    %24 = vector.extract_strided_slice %22 {offsets = [0, 0], sizes = [8, 28], strides = [1, 1]} : vector<8x112xf32> to vector<8x28xf32>
    %25 = vector.extract_strided_slice %22 {offsets = [0, 56], sizes = [8, 28], strides = [1, 1]} : vector<8x112xf32> to vector<8x28xf32>
    %cst_16 = arith.constant dense<0.000000e+00> : vector<8x8xf32>
    %26 = tpu.matmul %23, %24, %cst_16 {dimension_numbers = #tpu.dot_dimension_numbers<[1], [1], [0], [0], [0, 0, 1, 0], [], []>} : vector<8x28xf32>, vector<8x28xf32>, vector<8x8xf32> -> vector<8x8xf32>
    %27 = arith.addf %26, %12 : vector<8x8xf32>
    %cst_17 = arith.constant dense<0xFF800000> : vector<8xf32>
    %28 = vector.multi_reduction <maximumf>, %27, %cst_17 [1] : vector<8x8xf32> to vector<8xf32>
    %29 = vector.shape_cast %28 : vector<8xf32> to vector<8x1xf32>
    %30 = vector.broadcast %29 : vector<8x1xf32> to vector<8x8xf32>
    %31 = arith.subf %27, %30 : vector<8x8xf32>
    %32 = math.exp %31 : vector<8x8xf32>
    %cst_18 = arith.constant dense<0.000000e+00> : vector<8xf32>
    %33 = vector.multi_reduction <add>, %32, %cst_18 [1] : vector<8x8xf32> to vector<8xf32>
    %34 = vector.shape_cast %33 : vector<8xf32> to vector<8x1xf32>
    %35 = vector.broadcast %34 : vector<8x1xf32> to vector<8x8xf32>
    %36 = arith.divf %32, %35 : vector<8x8xf32>
    %cst_19 = arith.constant dense<0.000000e+00> : vector<8x28xf32>
    %37 = tpu.matmul %36, %25, %cst_19 {dimension_numbers = #tpu.dot_dimension_numbers<[1], [0], [0], [1], [0, 0, 1, 1], [], []>} : vector<8x8xf32>, vector<8x28xf32>, vector<8x28xf32> -> vector<8x28xf32>
    %38 = vector.extract_strided_slice %17 {offsets = [0, 28], sizes = [8, 28], strides = [1, 1]} : vector<8x56xf32> to vector<8x28xf32>
    %39 = vector.extract_strided_slice %22 {offsets = [0, 28], sizes = [8, 28], strides = [1, 1]} : vector<8x112xf32> to vector<8x28xf32>
    %40 = vector.extract_strided_slice %22 {offsets = [0, 84], sizes = [8, 28], strides = [1, 1]} : vector<8x112xf32> to vector<8x28xf32>
    %cst_20 = arith.constant dense<0.000000e+00> : vector<8x8xf32>
    %41 = tpu.matmul %38, %39, %cst_20 {dimension_numbers = #tpu.dot_dimension_numbers<[1], [1], [0], [0], [0, 0, 1, 0], [], []>} : vector<8x28xf32>, vector<8x28xf32>, vector<8x8xf32> -> vector<8x8xf32>
    %42 = arith.addf %41, %12 : vector<8x8xf32>
    %cst_21 = arith.constant dense<0xFF800000> : vector<8xf32>
    %43 = vector.multi_reduction <maximumf>, %42, %cst_21 [1] : vector<8x8xf32> to vector<8xf32>
    %44 = vector.shape_cast %43 : vector<8xf32> to vector<8x1xf32>
    %45 = vector.broadcast %44 : vector<8x1xf32> to vector<8x8xf32>
    %46 = arith.subf %42, %45 : vector<8x8xf32>
    %47 = math.exp %46 : vector<8x8xf32>
    %cst_22 = arith.constant dense<0.000000e+00> : vector<8xf32>
    %48 = vector.multi_reduction <add>, %47, %cst_22 [1] : vector<8x8xf32> to vector<8xf32>
    %49 = vector.shape_cast %48 : vector<8xf32> to vector<8x1xf32>
    %50 = vector.broadcast %49 : vector<8x1xf32> to vector<8x8xf32>
    %51 = arith.divf %47, %50 : vector<8x8xf32>
    %cst_23 = arith.constant dense<0.000000e+00> : vector<8x28xf32>
    %52 = tpu.matmul %51, %40, %cst_23 {dimension_numbers = #tpu.dot_dimension_numbers<[1], [0], [0], [1], [0, 0, 1, 1], [], []>} : vector<8x8xf32>, vector<8x28xf32>, vector<8x28xf32> -> vector<8x28xf32>
    %53 = tpu.concatenate %37, %52 in 1 : vector<8x28xf32>, vector<8x28xf32> -> vector<8x56xf32>
    %c184 = arith.constant 184 : index
    %c0_24 = arith.constant 0 : index
    %54 = vector.load %arg2[%c184, %c0_24] : memref<1248x128xf32, #tpu.memory_space<vmem>>, vector<56x56xf32>
    %cst_25 = arith.constant dense<0.000000e+00> : vector<8x56xf32>
    %55 = tpu.matmul %53, %54, %cst_25 {dimension_numbers = #tpu.dot_dimension_numbers<[1], [0], [0], [1], [0, 0, 1, 1], [], []>} : vector<8x56xf32>, vector<56x56xf32>, vector<8x56xf32> -> vector<8x56xf32>
    %c240 = arith.constant 240 : index
    %c0_26 = arith.constant 0 : index
    %56 = vector.load %arg2[%c240, %c0_26] : memref<1248x128xf32, #tpu.memory_space<vmem>>, vector<1x56xf32>
    %57 = vector.broadcast %56 : vector<1x56xf32> to vector<8x56xf32>
    %58 = arith.addf %55, %57 : vector<8x56xf32>
    %59 = arith.addf %11, %58 : vector<8x56xf32>
    %c248 = arith.constant 248 : index
    %c0_27 = arith.constant 0 : index
    %60 = vector.load %arg2[%c248, %c0_27] : memref<1248x128xf32, #tpu.memory_space<vmem>>, vector<56x112xf32>
    %cst_28 = arith.constant dense<0.000000e+00> : vector<8x112xf32>
    %61 = tpu.matmul %59, %60, %cst_28 {dimension_numbers = #tpu.dot_dimension_numbers<[1], [0], [0], [1], [0, 0, 1, 1], [], []>} : vector<8x56xf32>, vector<56x112xf32>, vector<8x112xf32> -> vector<8x112xf32>
    %c304 = arith.constant 304 : index
    %c0_29 = arith.constant 0 : index
    %62 = vector.load %arg2[%c304, %c0_29] : memref<1248x128xf32, #tpu.memory_space<vmem>>, vector<1x112xf32>
    %63 = vector.broadcast %62 : vector<1x112xf32> to vector<8x112xf32>
    %64 = arith.addf %61, %63 : vector<8x112xf32>
    %c1056 = arith.constant 1056 : index
    %c0_30 = arith.constant 0 : index
    %65 = vector.load %arg2[%c1056, %c0_30] : memref<1248x128xf32, #tpu.memory_space<vmem>>, vector<112x16xf32>
    %66 = arith.mulf %64, %64 : vector<8x112xf32>
    %cst_31 = arith.constant dense<0.000000e+00> : vector<8x16xf32>
    %67 = tpu.matmul %66, %65, %cst_31 {dimension_numbers = #tpu.dot_dimension_numbers<[1], [0], [0], [1], [0, 0, 1, 1], [], []>} : vector<8x112xf32>, vector<112x16xf32>, vector<8x16xf32> -> vector<8x16xf32>
    %cst_32 = arith.constant 9.99999997E-7 : f32
    %68 = vector.broadcast %cst_32 : f32 to vector<8x16xf32>
    %69 = arith.addf %67, %68 : vector<8x16xf32>
    %70 = math.sqrt %69 : vector<8x16xf32>
    %cst_33 = arith.constant 1.000000e+00 : f32
    %71 = vector.broadcast %cst_33 : f32 to vector<8x16xf32>
    %72 = arith.subf %70, %71 : vector<8x16xf32>
    %73 = arith.negf %72 : vector<8x16xf32>
    %74 = math.exp %73 : vector<8x16xf32>
    %cst_34 = arith.constant 1.000000e+00 : f32
    %75 = vector.broadcast %cst_34 : f32 to vector<8x16xf32>
    %76 = arith.addf %75, %74 : vector<8x16xf32>
    %77 = arith.divf %75, %76 : vector<8x16xf32>
    %cst_35 = arith.constant dense<0.000000e+00> : vector<8x112xf32>
    %78 = tpu.matmul %77, %65, %cst_35 {dimension_numbers = #tpu.dot_dimension_numbers<[1], [1], [0], [0], [0, 0, 1, 0], [], []>} : vector<8x16xf32>, vector<112x16xf32>, vector<8x112xf32> -> vector<8x112xf32>
    %79 = arith.mulf %64, %78 : vector<8x112xf32>
    %c312 = arith.constant 312 : index
    %c0_36 = arith.constant 0 : index
    %80 = vector.load %arg2[%c312, %c0_36] : memref<1248x128xf32, #tpu.memory_space<vmem>>, vector<112x56xf32>
    %cst_37 = arith.constant dense<0.000000e+00> : vector<8x56xf32>
    %81 = tpu.matmul %79, %80, %cst_37 {dimension_numbers = #tpu.dot_dimension_numbers<[1], [0], [0], [1], [0, 0, 1, 1], [], []>} : vector<8x112xf32>, vector<112x56xf32>, vector<8x56xf32> -> vector<8x56xf32>
    %c424 = arith.constant 424 : index
    %c0_38 = arith.constant 0 : index
    %82 = vector.load %arg2[%c424, %c0_38] : memref<1248x128xf32, #tpu.memory_space<vmem>>, vector<1x56xf32>
    %83 = vector.broadcast %82 : vector<1x56xf32> to vector<8x56xf32>
    %84 = arith.addf %81, %83 : vector<8x56xf32>
    %85 = arith.addf %59, %84 : vector<8x56xf32>
    %c432 = arith.constant 432 : index
    %c0_39 = arith.constant 0 : index
    %86 = vector.load %arg2[%c432, %c0_39] : memref<1248x128xf32, #tpu.memory_space<vmem>>, vector<56x56xf32>
    %cst_40 = arith.constant dense<0.000000e+00> : vector<8x56xf32>
    %87 = tpu.matmul %85, %86, %cst_40 {dimension_numbers = #tpu.dot_dimension_numbers<[1], [0], [0], [1], [0, 0, 1, 1], [], []>} : vector<8x56xf32>, vector<56x56xf32>, vector<8x56xf32> -> vector<8x56xf32>
    %c488 = arith.constant 488 : index
    %c0_41 = arith.constant 0 : index
    %88 = vector.load %arg2[%c488, %c0_41] : memref<1248x128xf32, #tpu.memory_space<vmem>>, vector<1x56xf32>
    %89 = vector.broadcast %88 : vector<1x56xf32> to vector<8x56xf32>
    %90 = arith.addf %87, %89 : vector<8x56xf32>
    %c496 = arith.constant 496 : index
    %c0_42 = arith.constant 0 : index
    %91 = vector.load %arg2[%c496, %c0_42] : memref<1248x128xf32, #tpu.memory_space<vmem>>, vector<56x112xf32>
    %cst_43 = arith.constant dense<0.000000e+00> : vector<8x112xf32>
    %92 = tpu.matmul %5, %91, %cst_43 {dimension_numbers = #tpu.dot_dimension_numbers<[1], [0], [0], [1], [0, 0, 1, 1], [], []>} : vector<8x56xf32>, vector<56x112xf32>, vector<8x112xf32> -> vector<8x112xf32>
    %c552 = arith.constant 552 : index
    %c0_44 = arith.constant 0 : index
    %93 = vector.load %arg2[%c552, %c0_44] : memref<1248x128xf32, #tpu.memory_space<vmem>>, vector<1x112xf32>
    %94 = vector.broadcast %93 : vector<1x112xf32> to vector<8x112xf32>
    %95 = arith.addf %92, %94 : vector<8x112xf32>
    %96 = vector.extract_strided_slice %90 {offsets = [0, 0], sizes = [8, 28], strides = [1, 1]} : vector<8x56xf32> to vector<8x28xf32>
    %97 = vector.extract_strided_slice %95 {offsets = [0, 0], sizes = [8, 28], strides = [1, 1]} : vector<8x112xf32> to vector<8x28xf32>
    %98 = vector.extract_strided_slice %95 {offsets = [0, 56], sizes = [8, 28], strides = [1, 1]} : vector<8x112xf32> to vector<8x28xf32>
    %cst_45 = arith.constant dense<0.000000e+00> : vector<8x8xf32>
    %99 = tpu.matmul %96, %97, %cst_45 {dimension_numbers = #tpu.dot_dimension_numbers<[1], [1], [0], [0], [0, 0, 1, 0], [], []>} : vector<8x28xf32>, vector<8x28xf32>, vector<8x8xf32> -> vector<8x8xf32>
    %100 = arith.addf %99, %12 : vector<8x8xf32>
    %cst_46 = arith.constant dense<0xFF800000> : vector<8xf32>
    %101 = vector.multi_reduction <maximumf>, %100, %cst_46 [1] : vector<8x8xf32> to vector<8xf32>
    %102 = vector.shape_cast %101 : vector<8xf32> to vector<8x1xf32>
    %103 = vector.broadcast %102 : vector<8x1xf32> to vector<8x8xf32>
    %104 = arith.subf %100, %103 : vector<8x8xf32>
    %105 = math.exp %104 : vector<8x8xf32>
    %cst_47 = arith.constant dense<0.000000e+00> : vector<8xf32>
    %106 = vector.multi_reduction <add>, %105, %cst_47 [1] : vector<8x8xf32> to vector<8xf32>
    %107 = vector.shape_cast %106 : vector<8xf32> to vector<8x1xf32>
    %108 = vector.broadcast %107 : vector<8x1xf32> to vector<8x8xf32>
    %109 = arith.divf %105, %108 : vector<8x8xf32>
    %cst_48 = arith.constant dense<0.000000e+00> : vector<8x28xf32>
    %110 = tpu.matmul %109, %98, %cst_48 {dimension_numbers = #tpu.dot_dimension_numbers<[1], [0], [0], [1], [0, 0, 1, 1], [], []>} : vector<8x8xf32>, vector<8x28xf32>, vector<8x28xf32> -> vector<8x28xf32>
    %111 = vector.extract_strided_slice %90 {offsets = [0, 28], sizes = [8, 28], strides = [1, 1]} : vector<8x56xf32> to vector<8x28xf32>
    %112 = vector.extract_strided_slice %95 {offsets = [0, 28], sizes = [8, 28], strides = [1, 1]} : vector<8x112xf32> to vector<8x28xf32>
    %113 = vector.extract_strided_slice %95 {offsets = [0, 84], sizes = [8, 28], strides = [1, 1]} : vector<8x112xf32> to vector<8x28xf32>
    %cst_49 = arith.constant dense<0.000000e+00> : vector<8x8xf32>
    %114 = tpu.matmul %111, %112, %cst_49 {dimension_numbers = #tpu.dot_dimension_numbers<[1], [1], [0], [0], [0, 0, 1, 0], [], []>} : vector<8x28xf32>, vector<8x28xf32>, vector<8x8xf32> -> vector<8x8xf32>
    %115 = arith.addf %114, %12 : vector<8x8xf32>
    %cst_50 = arith.constant dense<0xFF800000> : vector<8xf32>
    %116 = vector.multi_reduction <maximumf>, %115, %cst_50 [1] : vector<8x8xf32> to vector<8xf32>
    %117 = vector.shape_cast %116 : vector<8xf32> to vector<8x1xf32>
    %118 = vector.broadcast %117 : vector<8x1xf32> to vector<8x8xf32>
    %119 = arith.subf %115, %118 : vector<8x8xf32>
    %120 = math.exp %119 : vector<8x8xf32>
    %cst_51 = arith.constant dense<0.000000e+00> : vector<8xf32>
    %121 = vector.multi_reduction <add>, %120, %cst_51 [1] : vector<8x8xf32> to vector<8xf32>
    %122 = vector.shape_cast %121 : vector<8xf32> to vector<8x1xf32>
    %123 = vector.broadcast %122 : vector<8x1xf32> to vector<8x8xf32>
    %124 = arith.divf %120, %123 : vector<8x8xf32>
    %cst_52 = arith.constant dense<0.000000e+00> : vector<8x28xf32>
    %125 = tpu.matmul %124, %113, %cst_52 {dimension_numbers = #tpu.dot_dimension_numbers<[1], [0], [0], [1], [0, 0, 1, 1], [], []>} : vector<8x8xf32>, vector<8x28xf32>, vector<8x28xf32> -> vector<8x28xf32>
    %126 = tpu.concatenate %110, %125 in 1 : vector<8x28xf32>, vector<8x28xf32> -> vector<8x56xf32>
    %c560 = arith.constant 560 : index
    %c0_53 = arith.constant 0 : index
    %127 = vector.load %arg2[%c560, %c0_53] : memref<1248x128xf32, #tpu.memory_space<vmem>>, vector<56x56xf32>
    %cst_54 = arith.constant dense<0.000000e+00> : vector<8x56xf32>
    %128 = tpu.matmul %126, %127, %cst_54 {dimension_numbers = #tpu.dot_dimension_numbers<[1], [0], [0], [1], [0, 0, 1, 1], [], []>} : vector<8x56xf32>, vector<56x56xf32>, vector<8x56xf32> -> vector<8x56xf32>
    %c616 = arith.constant 616 : index
    %c0_55 = arith.constant 0 : index
    %129 = vector.load %arg2[%c616, %c0_55] : memref<1248x128xf32, #tpu.memory_space<vmem>>, vector<1x56xf32>
    %130 = vector.broadcast %129 : vector<1x56xf32> to vector<8x56xf32>
    %131 = arith.addf %128, %130 : vector<8x56xf32>
    %132 = arith.addf %85, %131 : vector<8x56xf32>
    %c624 = arith.constant 624 : index
    %c0_56 = arith.constant 0 : index
    %133 = vector.load %arg2[%c624, %c0_56] : memref<1248x128xf32, #tpu.memory_space<vmem>>, vector<56x112xf32>
    %cst_57 = arith.constant dense<0.000000e+00> : vector<8x112xf32>
    %134 = tpu.matmul %132, %133, %cst_57 {dimension_numbers = #tpu.dot_dimension_numbers<[1], [0], [0], [1], [0, 0, 1, 1], [], []>} : vector<8x56xf32>, vector<56x112xf32>, vector<8x112xf32> -> vector<8x112xf32>
    %c680 = arith.constant 680 : index
    %c0_58 = arith.constant 0 : index
    %135 = vector.load %arg2[%c680, %c0_58] : memref<1248x128xf32, #tpu.memory_space<vmem>>, vector<1x112xf32>
    %136 = vector.broadcast %135 : vector<1x112xf32> to vector<8x112xf32>
    %137 = arith.addf %134, %136 : vector<8x112xf32>
    %c1056_59 = arith.constant 1056 : index
    %c0_60 = arith.constant 0 : index
    %138 = vector.load %arg2[%c1056_59, %c0_60] : memref<1248x128xf32, #tpu.memory_space<vmem>>, vector<112x16xf32>
    %139 = arith.mulf %137, %137 : vector<8x112xf32>
    %cst_61 = arith.constant dense<0.000000e+00> : vector<8x16xf32>
    %140 = tpu.matmul %139, %138, %cst_61 {dimension_numbers = #tpu.dot_dimension_numbers<[1], [0], [0], [1], [0, 0, 1, 1], [], []>} : vector<8x112xf32>, vector<112x16xf32>, vector<8x16xf32> -> vector<8x16xf32>
    %cst_62 = arith.constant 9.99999997E-7 : f32
    %141 = vector.broadcast %cst_62 : f32 to vector<8x16xf32>
    %142 = arith.addf %140, %141 : vector<8x16xf32>
    %143 = math.sqrt %142 : vector<8x16xf32>
    %cst_63 = arith.constant 1.000000e+00 : f32
    %144 = vector.broadcast %cst_63 : f32 to vector<8x16xf32>
    %145 = arith.subf %143, %144 : vector<8x16xf32>
    %146 = arith.negf %145 : vector<8x16xf32>
    %147 = math.exp %146 : vector<8x16xf32>
    %cst_64 = arith.constant 1.000000e+00 : f32
    %148 = vector.broadcast %cst_64 : f32 to vector<8x16xf32>
    %149 = arith.addf %148, %147 : vector<8x16xf32>
    %150 = arith.divf %148, %149 : vector<8x16xf32>
    %cst_65 = arith.constant dense<0.000000e+00> : vector<8x112xf32>
    %151 = tpu.matmul %150, %138, %cst_65 {dimension_numbers = #tpu.dot_dimension_numbers<[1], [1], [0], [0], [0, 0, 1, 0], [], []>} : vector<8x16xf32>, vector<112x16xf32>, vector<8x112xf32> -> vector<8x112xf32>
    %152 = arith.mulf %137, %151 : vector<8x112xf32>
    %c688 = arith.constant 688 : index
    %c0_66 = arith.constant 0 : index
    %153 = vector.load %arg2[%c688, %c0_66] : memref<1248x128xf32, #tpu.memory_space<vmem>>, vector<112x56xf32>
    %cst_67 = arith.constant dense<0.000000e+00> : vector<8x56xf32>
    %154 = tpu.matmul %152, %153, %cst_67 {dimension_numbers = #tpu.dot_dimension_numbers<[1], [0], [0], [1], [0, 0, 1, 1], [], []>} : vector<8x112xf32>, vector<112x56xf32>, vector<8x56xf32> -> vector<8x56xf32>
    %c800 = arith.constant 800 : index
    %c0_68 = arith.constant 0 : index
    %155 = vector.load %arg2[%c800, %c0_68] : memref<1248x128xf32, #tpu.memory_space<vmem>>, vector<1x56xf32>
    %156 = vector.broadcast %155 : vector<1x56xf32> to vector<8x56xf32>
    %157 = arith.addf %154, %156 : vector<8x56xf32>
    %158 = arith.addf %132, %157 : vector<8x56xf32>
    %c808 = arith.constant 808 : index
    %c0_69 = arith.constant 0 : index
    %159 = vector.load %arg2[%c808, %c0_69] : memref<1248x128xf32, #tpu.memory_space<vmem>>, vector<56x28xf32>
    %cst_70 = arith.constant dense<0.000000e+00> : vector<8x28xf32>
    %160 = tpu.matmul %158, %159, %cst_70 {dimension_numbers = #tpu.dot_dimension_numbers<[1], [0], [0], [1], [0, 0, 1, 1], [], []>} : vector<8x56xf32>, vector<56x28xf32>, vector<8x28xf32> -> vector<8x28xf32>
    %c864 = arith.constant 864 : index
    %c0_71 = arith.constant 0 : index
    %161 = vector.load %arg2[%c864, %c0_71] : memref<1248x128xf32, #tpu.memory_space<vmem>>, vector<1x28xf32>
    %162 = vector.broadcast %161 : vector<1x28xf32> to vector<8x28xf32>
    %163 = arith.addf %160, %162 : vector<8x28xf32>
    %164 = tpu.concatenate %163, %163, %163, %163 in 1 : vector<8x28xf32>, vector<8x28xf32>, vector<8x28xf32>, vector<8x28xf32> -> vector<8x112xf32>
    %c1232 = arith.constant 1232 : index
    %c0_72 = arith.constant 0 : index
    %165 = vector.load %arg2[%c1232, %c0_72] : memref<1248x128xf32, #tpu.memory_space<vmem>>, vector<8x112xf32>
    %166 = arith.mulf %164, %165 : vector<8x112xf32>
    %c1240 = arith.constant 1240 : index
    %c0_73 = arith.constant 0 : index
    %167 = vector.load %arg2[%c1240, %c0_73] : memref<1248x128xf32, #tpu.memory_space<vmem>>, vector<2x8xf32>
    %cst_74 = arith.constant dense<0.000000e+00> : vector<2x112xf32>
    %168 = tpu.matmul %167, %166, %cst_74 {dimension_numbers = #tpu.dot_dimension_numbers<[1], [0], [0], [1], [0, 0, 1, 1], [], []>} : vector<2x8xf32>, vector<8x112xf32>, vector<2x112xf32> -> vector<2x112xf32>
    %c872 = arith.constant 872 : index
    %c0_75 = arith.constant 0 : index
    %169 = vector.load %arg2[%c872, %c0_75] : memref<1248x128xf32, #tpu.memory_space<vmem>>, vector<112x56xf32>
    %cst_76 = arith.constant dense<0.000000e+00> : vector<2x56xf32>
    %170 = tpu.matmul %168, %169, %cst_76 {dimension_numbers = #tpu.dot_dimension_numbers<[1], [0], [0], [1], [0, 0, 1, 1], [], []>} : vector<2x112xf32>, vector<112x56xf32>, vector<2x56xf32> -> vector<2x56xf32>
    %c984 = arith.constant 984 : index
    %c0_77 = arith.constant 0 : index
    %171 = vector.load %arg2[%c984, %c0_77] : memref<1248x128xf32, #tpu.memory_space<vmem>>, vector<1x56xf32>
    %172 = vector.broadcast %171 : vector<1x56xf32> to vector<2x56xf32>
    %173 = arith.addf %170, %172 : vector<2x56xf32>
    %c1168 = arith.constant 1168 : index
    %c0_78 = arith.constant 0 : index
    %174 = vector.load %arg2[%c1168, %c0_78] : memref<1248x128xf32, #tpu.memory_space<vmem>>, vector<56x8xf32>
    %175 = arith.mulf %173, %173 : vector<2x56xf32>
    %cst_79 = arith.constant dense<0.000000e+00> : vector<2x8xf32>
    %176 = tpu.matmul %175, %174, %cst_79 {dimension_numbers = #tpu.dot_dimension_numbers<[1], [0], [0], [1], [0, 0, 1, 1], [], []>} : vector<2x56xf32>, vector<56x8xf32>, vector<2x8xf32> -> vector<2x8xf32>
    %cst_80 = arith.constant 9.99999997E-7 : f32
    %177 = vector.broadcast %cst_80 : f32 to vector<2x8xf32>
    %178 = arith.addf %176, %177 : vector<2x8xf32>
    %179 = math.sqrt %178 : vector<2x8xf32>
    %cst_81 = arith.constant 1.000000e+00 : f32
    %180 = vector.broadcast %cst_81 : f32 to vector<2x8xf32>
    %181 = arith.subf %179, %180 : vector<2x8xf32>
    %182 = arith.negf %181 : vector<2x8xf32>
    %183 = math.exp %182 : vector<2x8xf32>
    %cst_82 = arith.constant 1.000000e+00 : f32
    %184 = vector.broadcast %cst_82 : f32 to vector<2x8xf32>
    %185 = arith.addf %184, %183 : vector<2x8xf32>
    %186 = arith.divf %184, %185 : vector<2x8xf32>
    %cst_83 = arith.constant dense<0.000000e+00> : vector<2x56xf32>
    %187 = tpu.matmul %186, %174, %cst_83 {dimension_numbers = #tpu.dot_dimension_numbers<[1], [1], [0], [0], [0, 0, 1, 0], [], []>} : vector<2x8xf32>, vector<56x8xf32>, vector<2x56xf32> -> vector<2x56xf32>
    %188 = arith.mulf %173, %187 : vector<2x56xf32>
    %c992 = arith.constant 992 : index
    %c0_84 = arith.constant 0 : index
    %189 = vector.load %arg2[%c992, %c0_84] : memref<1248x128xf32, #tpu.memory_space<vmem>>, vector<56x56xf32>
    %cst_85 = arith.constant dense<0.000000e+00> : vector<2x56xf32>
    %190 = tpu.matmul %188, %189, %cst_85 {dimension_numbers = #tpu.dot_dimension_numbers<[1], [0], [0], [1], [0, 0, 1, 1], [], []>} : vector<2x56xf32>, vector<56x56xf32>, vector<2x56xf32> -> vector<2x56xf32>
    %c1048 = arith.constant 1048 : index
    %c0_86 = arith.constant 0 : index
    %191 = vector.load %arg2[%c1048, %c0_86] : memref<1248x128xf32, #tpu.memory_space<vmem>>, vector<1x56xf32>
    %192 = vector.broadcast %191 : vector<1x56xf32> to vector<2x56xf32>
    %193 = arith.addf %190, %192 : vector<2x56xf32>
    %c0_87 = arith.constant 0 : index
    %c0_88 = arith.constant 0 : index
    %194 = vector.load %arg3[%c0_87, %c0_88] : memref<2x56xf32, #tpu.memory_space<vmem>>, vector<2x56xf32>
    tpu.vector_store %arg3[%c0_87, %c0_88], %193 {strides = array<i32>} : memref<2x56xf32, #tpu.memory_space<vmem>>, vector<2x56xf32>,
    return
  }
}

</mosaic_0001>

<llo_original>
// kernel: forward.1
$region0: #{forward.1}
  #allocation0 [shape = 'u32[]', space=smem, size = 0x4, offset = 0x4, fixed_abs, tag = 'smem constant byte address 0x4 - core index']
  #allocation1 [shape = 'u32[144,128]{1,0:T(1,128)}', space=vmem, size = 0x12000, scoped, tag = 'internal scratch']
  %s0 = inlined_call_operand.hbm [shape: f32[8,14], index: 0, kind: input, shape index: {}]
  %s1 = inlined_call_operand.vmem [shape: f32[8,21], index: 1, kind: input, shape index: {}]
  %s2 = inlined_call_operand.hbm [shape: f32[1248,128], index: 2, kind: input, shape index: {}]
  %s3 = inlined_call_operand.hbm [shape: f32[2,56], index: 3, kind: output, shape index: {}]
  %s4 = sld [smem:[#allocation0]]
  $region30: #{forward.1} parent=0
    _
  %s6 = ssub.s32 1, %s4
  %s7 = scalar_select 0, %s6, %s4
  $region1: #{forward.1} parent=0
    #allocation2 [shape = 'u8[4096]{0}', space=vmem, size = 0x1000, scoped, tag = 'input window, operand 0, single buffered']
    #allocation3 [shape = 's32[1]{0}', space=sflag, size = 0x4, scoped, tag = 'scoped memory for forward.1']
    #allocation4 [shape = 's32[1]{0}', space=sflag, size = 0x4, scoped, tag = 'scoped memory for forward.1']
    #allocation5 [shape = 'u8[638976]{0}', space=vmem, size = 0x9c000, scoped, tag = 'input window, operand 2, single buffered']
    #allocation6 [shape = 's32[1]{0}', space=sflag, size = 0x4, scoped, tag = 'scoped memory for forward.1']
    #allocation7 [shape = 'u8[1024]{0}', space=vmem, size = 0x400, scoped, tag = 'output window, operand 0, single buffered']
    %8 = vsyncpa [#allocation3], 0
    %9 = vsyncpa [#allocation6], 0
    %10 = vsyncpa [#allocation4], 0
    // Predicated region
    $region2: #{forward.1} parent=1 // pred_check
      _
    $region3: #{forward.1} parent=1 // pred_check_branch
      %12 = sbr.rel (0) target = $region5
    $region4: #{forward.1} parent=1 // pred_region
      %s14 = ssub.s32 128, 128
      %15 = vsyncadd [#allocation3], %s14
      %s17 = sshll.u32 [#allocation2], 4
      %s18 = int_to_ptr.vmem [resolvable:$true] %s17
      %20 = dma.hbm_to_vmem [thread:$0]  %s0, 128, %s18, [#allocation3]
    $region5: #{forward.1} parent=1 // pred_fallthru
      _
    // Predicated region
    $region6: #{forward.1} parent=1 // pred_check
      _
    $region7: #{forward.1} parent=1 // pred_check_branch
      %22 = sbr.rel (0) target = $region9
    $region8: #{forward.1} parent=1 // pred_region
      _
    $region9: #{forward.1} parent=1 // pred_fallthru
      _
    // Predicated region
    $region10: #{forward.1} parent=1 // pred_check
      _
    $region11: #{forward.1} parent=1 // pred_check_branch
      %24 = sbr.rel (0) target = $region13
    $region12: #{forward.1} parent=1 // pred_region
      %s26 = ssub.s32 19968, 19968
      %27 = vsyncadd [#allocation6], %s26
      %s28 = sshll.u32 [#allocation5], 4
      %s29 = int_to_ptr.vmem [resolvable:$true] %s28
      %34 = dma.hbm_to_vmem [thread:$0]  %s2, 19968, %s29, [#allocation6], 128, 128, 8
    $region13: #{forward.1} parent=1 // pred_fallthru
      _
    // Predicated region
    $region14: #{forward.1} parent=1 // pred_check
      _
    $region15: #{forward.1} parent=1 // pred_check_branch
      %36 = sbr.rel (0) target = $region17
    $region16: #{forward.1} parent=1 // pred_region
      %37 = dma.done [#allocation3], 128
    $region17: #{forward.1} parent=1 // pred_fallthru
      _
    // Predicated region
    $region18: #{forward.1} parent=1 // pred_check
      _
    $region19: #{forward.1} parent=1 // pred_check_branch
      %39 = sbr.rel (0) target = $region21
    $region20: #{forward.1} parent=1 // pred_region
      %40 = dma.done [#allocation6], 19968
    $region21: #{forward.1} parent=1 // pred_fallthru
      _
    %v41 = vld [vmem:[#allocation2] sm:$0xff]
    %v42 = vld [vmem:[#allocation5] sm:$0xff]
    %v43 = vld [vmem:[#allocation5 + $0x8] sm:$0x3f]
    %v44 = vld [vmem:[#allocation5 + $0x10] sm:$0x1]
    %v45 = vlaneseq
    %v46 = vshrl.u32 %v45, 7
    %v47 = vsub.s32 0, %v46
    %v48 = vrot.slane %v44, %v47
    %vm49 = vcmask 113664
    %v51 = vsel %vm49, %v41, 0
    %vm53 = vcmask 1045504
    %v55 = vsel %vm53, %v43, 0
    %57 = vmatprep.subr.mxu0 0.0
    %58 = vmatpush1.msra.mxu0 %v42
    %59 = vmatprep.subr.mxu0 0.0
    %60 = vmatpush1.msra.mxu0 %v55
    %61 = vmatprep.subr.mxu0 0.0
    %62 = vmatpush1.msra.mxu0 0.0
    %63 = vmatprep.subr.mxu0 0.0
    %64 = vmatpush1.msra.mxu0 0.0
    %65 = vmatprep.subr.mxu0 0.0
    %66 = vmatpush1.msra.mxu0 0.0
    %67 = vmatprep.subr.mxu0 0.0
    %68 = vmatpush1.msra.mxu0 0.0
    %69 = vmatprep.subr.mxu0 0.0
    %70 = vmatpush1.msra.mxu0 0.0
    %71 = vmatprep.subr.mxu0 0.0
    %72 = vmatpush1.msra.mxu0 0.0
    %73 = vmatprep.subr.mxu0 0.0
    %74 = vmatpush1.msra.mxu0 0.0
    %75 = vmatprep.subr.mxu0 0.0
    %76 = vmatpush1.msra.mxu0 0.0
    %77 = vmatprep.subr.mxu0 0.0
    %78 = vmatpush1.msra.mxu0 0.0
    %79 = vmatprep.subr.mxu0 0.0
    %80 = vmatpush1.msra.mxu0 0.0
    %81 = vmatprep.subr.mxu0 0.0
    %82 = vmatpush1.msra.mxu0 0.0
    %83 = vmatprep.subr.mxu0 0.0
    %84 = vmatpush1.msra.mxu0 0.0
    %85 = vmatprep.subr.mxu0 0.0
    %86 = vmatpush1.msra.mxu0 0.0
    %87 = vmatprep.subr.mxu0 0.0
    %88 = vmatpush1.msra.mxu0 0.0
    %89 = vmatprep.subr.mxu0 0.0
    %90 = vmatpush1.msra.mxu0 0.0
    %91 = vmatprep.subr.mxu0 0.0
    %92 = vmatpush1.msra.mxu0 0.0
    %93 = vmatprep.subr.mxu0 0.0
    %94 = vmatpush1.msra.mxu0 0.0
    %95 = vmatprep.subr.mxu0 0.0
    %96 = vmatpush1.msra.mxu0 0.0
    %97 = vmatprep.subr.mxu0 0.0
    %98 = vmatpush1.msra.mxu0 0.0
    %99 = vmatprep.subr.mxu0 0.0
    %100 = vmatpush1.msra.mxu0 0.0
    %101 = vmatprep.subr.mxu0 0.0
    %102 = vmatpush1.msra.mxu0 0.0
    %103 = vmatprep.subr.mxu0 0.0
    %104 = vmatpush1.msra.mxu0 0.0
    %105 = vmatprep.subr.mxu0 0.0
    %106 = vmatpush1.msra.mxu0 0.0
    %107 = vmatprep.subr.mxu0 0.0
    %108 = vmatpush1.msra.mxu0 0.0
    %109 = vmatprep.subr.mxu0 0.0
    %110 = vmatpush1.msra.mxu0 0.0
    %111 = vmatprep.subr.mxu0 0.0
    %112 = vmatpush1.msra.mxu0 0.0
    %113 = vmatprep.subr.mxu0 0.0
    %114 = vmatpush1.msra.mxu0 0.0
    %115 = vmatprep.subr.mxu0 0.0
    %116 = vmatpush1.msra.mxu0 0.0
    %117 = vmatprep.subr.mxu0 0.0
    %118 = vmatpush1.msra.mxu0 0.0
    %119 = vmatprep.subr.mxu0 0.0
    %120 = vmatpush1.msra.mxu0 0.0
    %121 = vmatprep.mubr.f32.mxu0 0.0
    %122 = vmatmul.mubr.f32.gmra.mrb[0].mxu0 %v51
    %v123 = vpop.f32.mrb[0].mxu0
    %v124 = vadd.f32 %v48, %v123
    %v125 = vpop.f32.mrb[0].mxu0
    %126 = vdwg.mxu0
    %v127 = vld [vmem:[%s1] sm:$0xff]
    %v128 = vld [vmem:[#allocation5 + $0x18] sm:$0xff]
    %v129 = vld [vmem:[#allocation5 + $0x20] sm:$0xff]
    %v130 = vld [vmem:[#allocation5 + $0x28] sm:$0x1f]
    %v131 = vld [vmem:[#allocation5 + $0x30] sm:$0x1]
    %v132 = vlaneseq
    %v133 = vshrl.u32 %v132, 7
    %v134 = vsub.s32 0, %v133
    %v135 = vrot.slane %v131, %v134
    %vm136 = vcmask 171008
    %v138 = vsel %vm136, %v127, 0
    %vm140 = vcmask 1044480
    %v142 = vsel %vm140, %v130, 0
    %144 = vmatprep.subr.mxu0 0.0
    %145 = vmatpush1.msra.mxu0 %v128
    %146 = vmatprep.subr.mxu0 0.0
    %147 = vmatpush1.msra.mxu0 %v129
    %148 = vmatprep.subr.mxu0 0.0
    %149 = vmatpush1.msra.mxu0 %v142
    %150 = vmatprep.subr.mxu0 0.0
    %151 = vmatpush1.msra.mxu0 0.0
    %152 = vmatprep.subr.mxu0 0.0
    %153 = vmatpush1.msra.mxu0 0.0
    %154 = vmatprep.subr.mxu0 0.0
    %155 = vmatpush1.msra.mxu0 0.0
    %156 = vmatprep.subr.mxu0 0.0
    %157 = vmatpush1.msra.mxu0 0.0
    %158 = vmatprep.subr.mxu0 0.0
    %159 = vmatpush1.msra.mxu0 0.0
    %160 = vmatprep.subr.mxu0 0.0
    %161 = vmatpush1.msra.mxu0 0.0
    %162 = vmatprep.subr.mxu0 0.0
    %163 = vmatpush1.msra.mxu0 0.0
    %164 = vmatprep.subr.mxu0 0.0
    %165 = vmatpush1.msra.mxu0 0.0
    %166 = vmatprep.subr.mxu0 0.0
    %167 = vmatpush1.msra.mxu0 0.0
    %168 = vmatprep.subr.mxu0 0.0
    %169 = vmatpush1.msra.mxu0 0.0
    %170 = vmatprep.subr.mxu0 0.0
    %171 = vmatpush1.msra.mxu0 0.0
    %172 = vmatprep.subr.mxu0 0.0
    %173 = vmatpush1.msra.mxu0 0.0
    %174 = vmatprep.subr.mxu0 0.0
    %175 = vmatpush1.msra.mxu0 0.0
    %176 = vmatprep.subr.mxu0 0.0
    %177 = vmatpush1.msra.mxu0 0.0
    %178 = vmatprep.subr.mxu0 0.0
    %179 = vmatpush1.msra.mxu0 0.0
    %180 = vmatprep.subr.mxu0 0.0
    %181 = vmatpush1.msra.mxu0 0.0
    %182 = vmatprep.subr.mxu0 0.0
    %183 = vmatpush1.msra.mxu0 0.0
    %184 = vmatprep.subr.mxu0 0.0
    %185 = vmatpush1.msra.mxu0 0.0
    %186 = vmatprep.subr.mxu0 0.0
    %187 = vmatpush1.msra.mxu0 0.0
    %188 = vmatprep.subr.mxu0 0.0
    %189 = vmatpush1.msra.mxu0 0.0
    %190 = vmatprep.subr.mxu0 0.0
    %191 = vmatpush1.msra.mxu0 0.0
    %192 = vmatprep.subr.mxu0 0.0
    %193 = vmatpush1.msra.mxu0 0.0
    %194 = vmatprep.subr.mxu0 0.0
    %195 = vmatpush1.msra.mxu0 0.0
    %196 = vmatprep.subr.mxu0 0.0
    %197 = vmatpush1.msra.mxu0 0.0
    %198 = vmatprep.subr.mxu0 0.0
    %199 = vmatpush1.msra.mxu0 0.0
    %200 = vmatprep.subr.mxu0 0.0
    %201 = vmatpush1.msra.mxu0 0.0
    %202 = vmatprep.subr.mxu0 0.0
    %203 = vmatpush1.msra.mxu0 0.0
    %204 = vmatprep.subr.mxu0 0.0
    %205 = vmatpush1.msra.mxu0 0.0
    %206 = vmatprep.subr.mxu0 0.0
    %207 = vmatpush1.msra.mxu0 0.0
    %208 = vmatprep.mubr.f32.mxu0 0.0
    %209 = vmatmul.mubr.f32.gmra.mrb[0].mxu0 %v138
    %v210 = vpop.f32.mrb[0].mxu0
    %v211 = vadd.f32 %v135, %v210
    %v212 = vpop.f32.mrb[0].mxu0
    %213 = vdwg.mxu0
    %v214 = vld [vmem:[#allocation5 + $0x4c8] sm:$0xff]
    %v215 = vld [vmem:[#allocation5 + $0x38] sm:$0xff]
    %v216 = vld [vmem:[#allocation5 + $0x40] sm:$0xff]
    %v217 = vld [vmem:[#allocation5 + $0x48] sm:$0xff]
    %v218 = vld [vmem:[#allocation5 + $0x50] sm:$0xff]
    %v219 = vld [vmem:[#allocation5 + $0x58] sm:$0xff]
    %v220 = vld [vmem:[#allocation5 + $0x60] sm:$0xff]
    %v221 = vld [vmem:[#allocation5 + $0x68] sm:$0xff]
    %v222 = vld [vmem:[#allocation5 + $0x70] sm:$0x1]
    %v223 = vlaneseq
    %v224 = vshrl.u32 %v223, 7
    %v225 = vsub.s32 0, %v224
    %v226 = vrot.slane %v222, %v225
    %vm227 = vcmask 457728
    %v229 = vsel %vm227, %v211, 0
    %231 = vmatprep.subr.mxu0 0.0
    %232 = vmatpush1.msra.mxu0 %v215
    %233 = vmatprep.subr.mxu0 0.0
    %234 = vmatpush1.msra.mxu0 %v216
    %235 = vmatprep.subr.mxu0 0.0
    %236 = vmatpush1.msra.mxu0 %v217
    %237 = vmatprep.subr.mxu0 0.0
    %238 = vmatpush1.msra.mxu0 %v218
    %239 = vmatprep.subr.mxu0 0.0
    %240 = vmatpush1.msra.mxu0 %v219
    %241 = vmatprep.subr.mxu0 0.0
    %242 = vmatpush1.msra.mxu0 %v220
    %243 = vmatprep.subr.mxu0 0.0
    %244 = vmatpush1.msra.mxu0 %v221
    %245 = vmatprep.subr.mxu0 0.0
    %246 = vmatpush1.msra.mxu0 0.0
    %247 = vmatprep.subr.mxu0 0.0
    %248 = vmatpush1.msra.mxu0 0.0
    %249 = vmatprep.subr.mxu0 0.0
    %250 = vmatpush1.msra.mxu0 0.0
    %251 = vmatprep.subr.mxu0 0.0
    %252 = vmatpush1.msra.mxu0 0.0
    %253 = vmatprep.subr.mxu0 0.0
    %254 = vmatpush1.msra.mxu0 0.0
    %255 = vmatprep.subr.mxu0 0.0
    %256 = vmatpush1.msra.mxu0 0.0
    %257 = vmatprep.subr.mxu0 0.0
    %258 = vmatpush1.msra.mxu0 0.0
    %259 = vmatprep.subr.mxu0 0.0
    %260 = vmatpush1.msra.mxu0 0.0
    %261 = vmatprep.subr.mxu0 0.0
    %262 = vmatpush1.msra.mxu0 0.0
    %263 = vmatprep.subr.mxu0 0.0
    %264 = vmatpush1.msra.mxu0 0.0
    %265 = vmatprep.subr.mxu0 0.0
    %266 = vmatpush1.msra.mxu0 0.0
    %267 = vmatprep.subr.mxu0 0.0
    %268 = vmatpush1.msra.mxu0 0.0
    %269 = vmatprep.subr.mxu0 0.0
    %270 = vmatpush1.msra.mxu0 0.0
    %271 = vmatprep.subr.mxu0 0.0
    %272 = vmatpush1.msra.mxu0 0.0
    %273 = vmatprep.subr.mxu0 0.0
    %274 = vmatpush1.msra.mxu0 0.0
    %275 = vmatprep.subr.mxu0 0.0
    %276 = vmatpush1.msra.mxu0 0.0
    %277 = vmatprep.subr.mxu0 0.0
    %278 = vmatpush1.msra.mxu0 0.0
    %279 = vmatprep.subr.mxu0 0.0
    %280 = vmatpush1.msra.mxu0 0.0
    %281 = vmatprep.subr.mxu0 0.0
    %282 = vmatpush1.msra.mxu0 0.0
    %283 = vmatprep.subr.mxu0 0.0
    %284 = vmatpush1.msra.mxu0 0.0
    %285 = vmatprep.subr.mxu0 0.0
    %286 = vmatpush1.msra.mxu0 0.0
    %287 = vmatprep.subr.mxu0 0.0
    %288 = vmatpush1.msra.mxu0 0.0
    %289 = vmatprep.subr.mxu0 0.0
    %290 = vmatpush1.msra.mxu0 0.0
    %291 = vmatprep.subr.mxu0 0.0
    %292 = vmatpush1.msra.mxu0 0.0
    %293 = vmatprep.subr.mxu0 0.0
    %294 = vmatpush1.msra.mxu0 0.0
    %295 = vmatprep.mubr.f32.mxu0 0.0
    %296 = vmatmul.mubr.f32.gmra.mrb[0].mxu0 %v229
    %v297 = vpop.f32.mrb[0].mxu0
    %v298 = vadd.f32 %v226, %v297
    %v299 = vpop.f32.mrb[0].mxu0
    %300 = vdwg.mxu0
    %v301 = vld [vmem:[#allocation5 + $0x78] sm:$0xff]
    %v302 = vld [vmem:[#allocation5 + $0x80] sm:$0xff]
    %v303 = vld [vmem:[#allocation5 + $0x88] sm:$0xff]
    %v304 = vld [vmem:[#allocation5 + $0x90] sm:$0xff]
    %v305 = vld [vmem:[#allocation5 + $0x98] sm:$0xff]
    %v306 = vld [vmem:[#allocation5 + $0xa0] sm:$0xff]
    %v307 = vld [vmem:[#allocation5 + $0xa8] sm:$0xff]
    %v308 = vld [vmem:[#allocation5 + $0xb0] sm:$0x1]
    %v309 = vlaneseq
    %v310 = vshrl.u32 %v309, 7
    %v311 = vsub.s32 0, %v310
    %v312 = vrot.slane %v308, %v311
    %v314 = vsel %vm227, %v124, 0
    %316 = vmatprep.subr.mxu0 0.0
    %317 = vmatpush1.msra.mxu0 %v301
    %318 = vmatprep.subr.mxu0 0.0
    %319 = vmatpush1.msra.mxu0 %v302
    %320 = vmatprep.subr.mxu0 0.0
    %321 = vmatpush1.msra.mxu0 %v303
    %322 = vmatprep.subr.mxu0 0.0
    %323 = vmatpush1.msra.mxu0 %v304
    %324 = vmatprep.subr.mxu0 0.0
    %325 = vmatpush1.msra.mxu0 %v305
    %326 = vmatprep.subr.mxu0 0.0
    %327 = vmatpush1.msra.mxu0 %v306
    %328 = vmatprep.subr.mxu0 0.0
    %329 = vmatpush1.msra.mxu0 %v307
    %330 = vmatprep.subr.mxu0 0.0
    %331 = vmatpush1.msra.mxu0 0.0
    %332 = vmatprep.subr.mxu0 0.0
    %333 = vmatpush1.msra.mxu0 0.0
    %334 = vmatprep.subr.mxu0 0.0
    %335 = vmatpush1.msra.mxu0 0.0
    %336 = vmatprep.subr.mxu0 0.0
    %337 = vmatpush1.msra.mxu0 0.0
    %338 = vmatprep.subr.mxu0 0.0
    %339 = vmatpush1.msra.mxu0 0.0
    %340 = vmatprep.subr.mxu0 0.0
    %341 = vmatpush1.msra.mxu0 0.0
    %342 = vmatprep.subr.mxu0 0.0
    %343 = vmatpush1.msra.mxu0 0.0
    %344 = vmatprep.subr.mxu0 0.0
    %345 = vmatpush1.msra.mxu0 0.0
    %346 = vmatprep.subr.mxu0 0.0
    %347 = vmatpush1.msra.mxu0 0.0
    %348 = vmatprep.subr.mxu0 0.0
    %349 = vmatpush1.msra.mxu0 0.0
    %350 = vmatprep.subr.mxu0 0.0
    %351 = vmatpush1.msra.mxu0 0.0
    %352 = vmatprep.subr.mxu0 0.0
    %353 = vmatpush1.msra.mxu0 0.0
    %354 = vmatprep.subr.mxu0 0.0
    %355 = vmatpush1.msra.mxu0 0.0
    %356 = vmatprep.subr.mxu0 0.0
    %357 = vmatpush1.msra.mxu0 0.0
    %358 = vmatprep.subr.mxu0 0.0
    %359 = vmatpush1.msra.mxu0 0.0
    %360 = vmatprep.subr.mxu0 0.0
    %361 = vmatpush1.msra.mxu0 0.0
    %362 = vmatprep.subr.mxu0 0.0
    %363 = vmatpush1.msra.mxu0 0.0
    %364 = vmatprep.subr.mxu0 0.0
    %365 = vmatpush1.msra.mxu0 0.0
    %366 = vmatprep.subr.mxu0 0.0
    %367 = vmatpush1.msra.mxu0 0.0
    %368 = vmatprep.subr.mxu0 0.0
    %369 = vmatpush1.msra.mxu0 0.0
    %370 = vmatprep.subr.mxu0 0.0
    %371 = vmatpush1.msra.mxu0 0.0
    %372 = vmatprep.subr.mxu0 0.0
    %373 = vmatpush1.msra.mxu0 0.0
    %374 = vmatprep.subr.mxu0 0.0
    %375 = vmatpush1.msra.mxu0 0.0
    %376 = vmatprep.subr.mxu0 0.0
    %377 = vmatpush1.msra.mxu0 0.0
    %378 = vmatprep.subr.mxu0 0.0
    %379 = vmatpush1.msra.mxu0 0.0
    %380 = vmatprep.mubr.f32.mxu0 0.0
    %381 = vmatmul.mubr.f32.gmra.mrb[0].mxu0 %v314
    %v382 = vpop.f32.mrb[0].mxu0
    %v383 = vadd.f32 %v312, %v382
    %v384 = vpop.f32.mrb[0].mxu0
    %385 = vdwg.mxu0
    %vm386 = vcmask 228352
    %v388 = vsel %vm386, %v298, 0
    %v391 = vsel %vm386, %v383, 0
    %393 = vmatprep.subr.mxu0 0.0
    %394 = vmatpush1.xpose.msra.mxu0 %v391
    %395 = vmatprep.subr.mxu0 0.0
    %396 = vmatpush1.xpose.msra.mxu0 0.0
    %397 = vmatprep.subr.mxu0 0.0
    %398 = vmatpush1.xpose.msra.mxu0 0.0
    %399 = vmatprep.subr.mxu0 0.0
    %400 = vmatpush1.xpose.msra.mxu0 0.0
    %401 = vmatprep.subr.mxu0 0.0
    %402 = vmatpush1.xpose.msra.mxu0 0.0
    %403 = vmatprep.subr.mxu0 0.0
    %404 = vmatpush1.xpose.msra.mxu0 0.0
    %405 = vmatprep.subr.mxu0 0.0
    %406 = vmatpush1.xpose.msra.mxu0 0.0
    %407 = vmatprep.subr.mxu0 0.0
    %408 = vmatpush1.xpose.msra.mxu0 0.0
    %409 = vmatprep.subr.mxu0 0.0
    %410 = vmatpush1.xpose.msra.mxu0 0.0
    %411 = vmatprep.subr.mxu0 0.0
    %412 = vmatpush1.xpose.msra.mxu0 0.0
    %413 = vmatprep.subr.mxu0 0.0
    %414 = vmatpush1.xpose.msra.mxu0 0.0
    %415 = vmatprep.subr.mxu0 0.0
    %416 = vmatpush1.xpose.msra.mxu0 0.0
    %417 = vmatprep.subr.mxu0 0.0
    %418 = vmatpush1.xpose.msra.mxu0 0.0
    %419 = vmatprep.subr.mxu0 0.0
    %420 = vmatpush1.xpose.msra.mxu0 0.0
    %421 = vmatprep.subr.mxu0 0.0
    %422 = vmatpush1.xpose.msra.mxu0 0.0
    %423 = vmatprep.subr.mxu0 0.0
    %424 = vmatpush1.xpose.msra.mxu0 0.0
    %425 = vmatprep.subr.mxu0 0.0
    %426 = vmatpush1.xpose.msra.mxu0 0.0
    %427 = vmatprep.subr.mxu0 0.0
    %428 = vmatpush1.xpose.msra.mxu0 0.0
    %429 = vmatprep.subr.mxu0 0.0
    %430 = vmatpush1.xpose.msra.mxu0 0.0
    %431 = vmatprep.subr.mxu0 0.0
    %432 = vmatpush1.xpose.msra.mxu0 0.0
    %433 = vmatprep.subr.mxu0 0.0
    %434 = vmatpush1.xpose.msra.mxu0 0.0
    %435 = vmatprep.subr.mxu0 0.0
    %436 = vmatpush1.xpose.msra.mxu0 0.0
    %437 = vmatprep.subr.mxu0 0.0
    %438 = vmatpush1.xpose.msra.mxu0 0.0
    %439 = vmatprep.subr.mxu0 0.0
    %440 = vmatpush1.xpose.msra.mxu0 0.0
    %441 = vmatprep.subr.mxu0 0.0
    %442 = vmatpush1.xpose.msra.mxu0 0.0
    %443 = vmatprep.subr.mxu0 0.0
    %444 = vmatpush1.xpose.msra.mxu0 0.0
    %445 = vmatprep.subr.mxu0 0.0
    %446 = vmatpush1.xpose.msra.mxu0 0.0
    %447 = vmatprep.subr.mxu0 0.0
    %448 = vmatpush1.xpose.msra.mxu0 0.0
    %449 = vmatprep.subr.mxu0 0.0
    %450 = vmatpush1.xpose.msra.mxu0 0.0
    %451 = vmatprep.subr.mxu0 0.0
    %452 = vmatpush1.xpose.msra.mxu0 0.0
    %453 = vmatprep.subr.mxu0 0.0
    %454 = vmatpush1.xpose.msra.mxu0 0.0
    %455 = vmatprep.subr.mxu0 0.0
    %456 = vmatpush1.xpose.msra.mxu0 0.0
    %457 = vmatprep.mubr.f32.mxu0 0.0
    %458 = vmatmul.mubr.f32.gmra.mrb[0].mxu0 %v388
    %v459 = vpop.f32.mrb[0].mxu0
    %v460 = vadd.f32 %v214, %v459
    %v461 = vpop.f32.mrb[0].mxu0
    %462 = vdwg.mxu0
    %vm463 = vcmask 64512
    %v464 = vsel %vm463, %v460, -inf
    %465 = vmax.xlane.f32.xlu0 %v464
    %v466 = vpop.xlane.xlu0 %465
    %v467 = vsub.f32 %v460, %v466
    %v468 = vmul.f32 %v467, 1.442695
    %v469 = vpow.pop %v468
    %v470 = vsel %vm463, %v469, 0.0
    %471 = vadd.xlane.f32.xlu0 %v470
    %v472 = vpop.xlane.xlu0 %471
    %v473 = vrcp.pop %v472
    %v474 = vmul.f32 %v469, %v473
    %475 = vrot.lane.b32.xlu0 %v383, 72
    %v476 = vpop.permute.xlu0 %475
    %v479 = vsel %vm463, %v474, 0
    %481 = vmatprep.subr.mxu0 0.0
    %482 = vmatpush1.msra.mxu0 %v476
    %483 = vmatprep.subr.mxu0 0.0
    %484 = vmatpush1.msra.mxu0 0.0
    %485 = vmatprep.subr.mxu0 0.0
    %486 = vmatpush1.msra.mxu0 0.0
    %487 = vmatprep.subr.mxu0 0.0
    %488 = vmatpush1.msra.mxu0 0.0
    %489 = vmatprep.subr.mxu0 0.0
    %490 = vmatpush1.msra.mxu0 0.0
    %491 = vmatprep.subr.mxu0 0.0
    %492 = vmatpush1.msra.mxu0 0.0
    %493 = vmatprep.subr.mxu0 0.0
    %494 = vmatpush1.msra.mxu0 0.0
    %495 = vmatprep.subr.mxu0 0.0
    %496 = vmatpush1.msra.mxu0 0.0
    %497 = vmatprep.subr.mxu0 0.0
    %498 = vmatpush1.msra.mxu0 0.0
    %499 = vmatprep.subr.mxu0 0.0
    %500 = vmatpush1.msra.mxu0 0.0
    %501 = vmatprep.subr.mxu0 0.0
    %502 = vmatpush1.msra.mxu0 0.0
    %503 = vmatprep.subr.mxu0 0.0
    %504 = vmatpush1.msra.mxu0 0.0
    %505 = vmatprep.subr.mxu0 0.0
    %506 = vmatpush1.msra.mxu0 0.0
    %507 = vmatprep.subr.mxu0 0.0
    %508 = vmatpush1.msra.mxu0 0.0
    %509 = vmatprep.subr.mxu0 0.0
    %510 = vmatpush1.msra.mxu0 0.0
    %511 = vmatprep.subr.mxu0 0.0
    %512 = vmatpush1.msra.mxu0 0.0
    %513 = vmatprep.subr.mxu0 0.0
    %514 = vmatpush1.msra.mxu0 0.0
    %515 = vmatprep.subr.mxu0 0.0
    %516 = vmatpush1.msra.mxu0 0.0
    %517 = vmatprep.subr.mxu0 0.0
    %518 = vmatpush1.msra.mxu0 0.0
    %519 = vmatprep.subr.mxu0 0.0
    %520 = vmatpush1.msra.mxu0 0.0
    %521 = vmatprep.subr.mxu0 0.0
    %522 = vmatpush1.msra.mxu0 0.0
    %523 = vmatprep.subr.mxu0 0.0
    %524 = vmatpush1.msra.mxu0 0.0
    %525 = vmatprep.subr.mxu0 0.0
    %526 = vmatpush1.msra.mxu0 0.0
    %527 = vmatprep.subr.mxu0 0.0
    %528 = vmatpush1.msra.mxu0 0.0
    %529 = vmatprep.subr.mxu0 0.0
    %530 = vmatpush1.msra.mxu0 0.0
    %531 = vmatprep.subr.mxu0 0.0
    %532 = vmatpush1.msra.mxu0 0.0
    %533 = vmatprep.subr.mxu0 0.0
    %534 = vmatpush1.msra.mxu0 0.0
    %535 = vmatprep.subr.mxu0 0.0
    %536 = vmatpush1.msra.mxu0 0.0
    %537 = vmatprep.subr.mxu0 0.0
    %538 = vmatpush1.msra.mxu0 0.0
    %539 = vmatprep.subr.mxu0 0.0
    %540 = vmatpush1.msra.mxu0 0.0
    %541 = vmatprep.subr.mxu0 0.0
    %542 = vmatpush1.msra.mxu0 0.0
    %543 = vmatprep.subr.mxu0 0.0
    %544 = vmatpush1.msra.mxu0 0.0
    %545 = vmatprep.mubr.f32.mxu0 0.0
    %546 = vmatmul.mubr.f32.gmra.mrb[0].mxu0 %v479
    %v547 = vpop.f32.mrb[0].mxu0
    %v548 = vadd.f32 0.0, %v547
    %v549 = vpop.f32.mrb[0].mxu0
    %550 = vdwg.mxu0
    %551 = vrot.lane.b32.xlu0 %v298, 100
    %v552 = vpop.permute.xlu0 %551
    %553 = vrot.lane.b32.xlu0 %v383, 100
    %v554 = vpop.permute.xlu0 %553
    %v555 = vsel %vm386, %v552, 0
    %v557 = vsel %vm386, %v554, 0
    %559 = vmatprep.subr.mxu0 0.0
    %560 = vmatpush1.xpose.msra.mxu0 %v557
    %561 = vmatprep.subr.mxu0 0.0
    %562 = vmatpush1.xpose.msra.mxu0 0.0
    %563 = vmatprep.subr.mxu0 0.0
    %564 = vmatpush1.xpose.msra.mxu0 0.0
    %565 = vmatprep.subr.mxu0 0.0
    %566 = vmatpush1.xpose.msra.mxu0 0.0
    %567 = vmatprep.subr.mxu0 0.0
    %568 = vmatpush1.xpose.msra.mxu0 0.0
    %569 = vmatprep.subr.mxu0 0.0
    %570 = vmatpush1.xpose.msra.mxu0 0.0
    %571 = vmatprep.subr.mxu0 0.0
    %572 = vmatpush1.xpose.msra.mxu0 0.0
    %573 = vmatprep.subr.mxu0 0.0
    %574 = vmatpush1.xpose.msra.mxu0 0.0
    %575 = vmatprep.subr.mxu0 0.0
    %576 = vmatpush1.xpose.msra.mxu0 0.0
    %577 = vmatprep.subr.mxu0 0.0
    %578 = vmatpush1.xpose.msra.mxu0 0.0
    %579 = vmatprep.subr.mxu0 0.0
    %580 = vmatpush1.xpose.msra.mxu0 0.0
    %581 = vmatprep.subr.mxu0 0.0
    %582 = vmatpush1.xpose.msra.mxu0 0.0
    %583 = vmatprep.subr.mxu0 0.0
    %584 = vmatpush1.xpose.msra.mxu0 0.0
    %585 = vmatprep.subr.mxu0 0.0
    %586 = vmatpush1.xpose.msra.mxu0 0.0
    %587 = vmatprep.subr.mxu0 0.0
    %588 = vmatpush1.xpose.msra.mxu0 0.0
    %589 = vmatprep.subr.mxu0 0.0
    %590 = vmatpush1.xpose.msra.mxu0 0.0
    %591 = vmatprep.subr.mxu0 0.0
    %592 = vmatpush1.xpose.msra.mxu0 0.0
    %593 = vmatprep.subr.mxu0 0.0
    %594 = vmatpush1.xpose.msra.mxu0 0.0
    %595 = vmatprep.subr.mxu0 0.0
    %596 = vmatpush1.xpose.msra.mxu0 0.0
    %597 = vmatprep.subr.mxu0 0.0
    %598 = vmatpush1.xpose.msra.mxu0 0.0
    %599 = vmatprep.subr.mxu0 0.0
    %600 = vmatpush1.xpose.msra.mxu0 0.0
    %601 = vmatprep.subr.mxu0 0.0
    %602 = vmatpush1.xpose.msra.mxu0 0.0
    %603 = vmatprep.subr.mxu0 0.0
    %604 = vmatpush1.xpose.msra.mxu0 0.0
    %605 = vmatprep.subr.mxu0 0.0
    %606 = vmatpush1.xpose.msra.mxu0 0.0
    %607 = vmatprep.subr.mxu0 0.0
    %608 = vmatpush1.xpose.msra.mxu0 0.0
    %609 = vmatprep.subr.mxu0 0.0
    %610 = vmatpush1.xpose.msra.mxu0 0.0
    %611 = vmatprep.subr.mxu0 0.0
    %612 = vmatpush1.xpose.msra.mxu0 0.0
    %613 = vmatprep.subr.mxu0 0.0
    %614 = vmatpush1.xpose.msra.mxu0 0.0
    %615 = vmatprep.subr.mxu0 0.0
    %616 = vmatpush1.xpose.msra.mxu0 0.0
    %617 = vmatprep.subr.mxu0 0.0
    %618 = vmatpush1.xpose.msra.mxu0 0.0
    %619 = vmatprep.subr.mxu0 0.0
    %620 = vmatpush1.xpose.msra.mxu0 0.0
    %621 = vmatprep.subr.mxu0 0.0
    %622 = vmatpush1.xpose.msra.mxu0 0.0
    %623 = vmatprep.mubr.f32.mxu0 0.0
    %624 = vmatmul.mubr.f32.gmra.mrb[0].mxu0 %v555
    %v625 = vpop.f32.mrb[0].mxu0
    %v626 = vadd.f32 %v214, %v625
    %v627 = vpop.f32.mrb[0].mxu0
    %628 = vdwg.mxu0
    %v629 = vsel %vm463, %v626, -inf
    %630 = vmax.xlane.f32.xlu0 %v629
    %v631 = vpop.xlane.xlu0 %630
    %v632 = vsub.f32 %v626, %v631
    %v633 = vmul.f32 %v632, 1.442695
    %v634 = vpow.pop %v633
    %v635 = vsel %vm463, %v634, 0.0
    %636 = vadd.xlane.f32.xlu0 %v635
    %v637 = vpop.xlane.xlu0 %636
    %v638 = vrcp.pop %v637
    %v639 = vmul.f32 %v634, %v638
    %640 = vrot.lane.b32.xlu0 %v383, 44
    %v641 = vpop.permute.xlu0 %640
    %v644 = vsel %vm463, %v639, 0
    %646 = vmatprep.subr.mxu0 0.0
    %647 = vmatpush1.msra.mxu0 %v641
    %648 = vmatprep.subr.mxu0 0.0
    %649 = vmatpush1.msra.mxu0 0.0
    %650 = vmatprep.subr.mxu0 0.0
    %651 = vmatpush1.msra.mxu0 0.0
    %652 = vmatprep.subr.mxu0 0.0
    %653 = vmatpush1.msra.mxu0 0.0
    %654 = vmatprep.subr.mxu0 0.0
    %655 = vmatpush1.msra.mxu0 0.0
    %656 = vmatprep.subr.mxu0 0.0
    %657 = vmatpush1.msra.mxu0 0.0
    %658 = vmatprep.subr.mxu0 0.0
    %659 = vmatpush1.msra.mxu0 0.0
    %660 = vmatprep.subr.mxu0 0.0
    %661 = vmatpush1.msra.mxu0 0.0
    %662 = vmatprep.subr.mxu0 0.0
    %663 = vmatpush1.msra.mxu0 0.0
    %664 = vmatprep.subr.mxu0 0.0
    %665 = vmatpush1.msra.mxu0 0.0
    %666 = vmatprep.subr.mxu0 0.0
    %667 = vmatpush1.msra.mxu0 0.0
    %668 = vmatprep.subr.mxu0 0.0
    %669 = vmatpush1.msra.mxu0 0.0
    %670 = vmatprep.subr.mxu0 0.0
    %671 = vmatpush1.msra.mxu0 0.0
    %672 = vmatprep.subr.mxu0 0.0
    %673 = vmatpush1.msra.mxu0 0.0
    %674 = vmatprep.subr.mxu0 0.0
    %675 = vmatpush1.msra.mxu0 0.0
    %676 = vmatprep.subr.mxu0 0.0
    %677 = vmatpush1.msra.mxu0 0.0
    %678 = vmatprep.subr.mxu0 0.0
    %679 = vmatpush1.msra.mxu0 0.0
    %680 = vmatprep.subr.mxu0 0.0
    %681 = vmatpush1.msra.mxu0 0.0
    %682 = vmatprep.subr.mxu0 0.0
    %683 = vmatpush1.msra.mxu0 0.0
    %684 = vmatprep.subr.mxu0 0.0
    %685 = vmatpush1.msra.mxu0 0.0
    %686 = vmatprep.subr.mxu0 0.0
    %687 = vmatpush1.msra.mxu0 0.0
    %688 = vmatprep.subr.mxu0 0.0
    %689 = vmatpush1.msra.mxu0 0.0
    %690 = vmatprep.subr.mxu0 0.0
    %691 = vmatpush1.msra.mxu0 0.0
    %692 = vmatprep.subr.mxu0 0.0
    %693 = vmatpush1.msra.mxu0 0.0
    %694 = vmatprep.subr.mxu0 0.0
    %695 = vmatpush1.msra.mxu0 0.0
    %696 = vmatprep.subr.mxu0 0.0
    %697 = vmatpush1.msra.mxu0 0.0
    %698 = vmatprep.subr.mxu0 0.0
    %699 = vmatpush1.msra.mxu0 0.0
    %700 = vmatprep.subr.mxu0 0.0
    %701 = vmatpush1.msra.mxu0 0.0
    %702 = vmatprep.subr.mxu0 0.0
    %703 = vmatpush1.msra.mxu0 0.0
    %704 = vmatprep.subr.mxu0 0.0
    %705 = vmatpush1.msra.mxu0 0.0
    %706 = vmatprep.subr.mxu0 0.0
    %707 = vmatpush1.msra.mxu0 0.0
    %708 = vmatprep.subr.mxu0 0.0
    %709 = vmatpush1.msra.mxu0 0.0
    %710 = vmatprep.mubr.f32.mxu0 0.0
    %711 = vmatmul.mubr.f32.gmra.mrb[0].mxu0 %v644
    %v712 = vpop.f32.mrb[0].mxu0
    %v713 = vadd.f32 0.0, %v712
    %v714 = vpop.f32.mrb[0].mxu0
    %715 = vdwg.mxu0
    %717 = vrot.lane.b32.xlu0 %v713, 28
    %v718 = vpop.permute.xlu0 %717
    %v720 = vsel %vm386, %v548, %v718
    %v721 = vld [vmem:[#allocation5 + $0xb8] sm:$0xff]
    %v722 = vld [vmem:[#allocation5 + $0xc0] sm:$0xff]
    %v723 = vld [vmem:[#allocation5 + $0xc8] sm:$0xff]
    %v724 = vld [vmem:[#allocation5 + $0xd0] sm:$0xff]
    %v725 = vld [vmem:[#allocation5 + $0xd8] sm:$0xff]
    %v726 = vld [vmem:[#allocation5 + $0xe0] sm:$0xff]
    %v727 = vld [vmem:[#allocation5 + $0xe8] sm:$0xff]
    %v728 = vld [vmem:[#allocation5 + $0xf0] sm:$0x1]
    %v729 = vlaneseq
    %v730 = vshrl.u32 %v729, 7
    %v731 = vsub.s32 0, %v730
    %v732 = vrot.slane %v728, %v731
    %v734 = vsel %vm227, %v720, 0
    %736 = vmatprep.subr.mxu0 0.0
    %737 = vmatpush1.msra.mxu0 %v721
    %738 = vmatprep.subr.mxu0 0.0
    %739 = vmatpush1.msra.mxu0 %v722
    %740 = vmatprep.subr.mxu0 0.0
    %741 = vmatpush1.msra.mxu0 %v723
    %742 = vmatprep.subr.mxu0 0.0
    %743 = vmatpush1.msra.mxu0 %v724
    %744 = vmatprep.subr.mxu0 0.0
    %745 = vmatpush1.msra.mxu0 %v725
    %746 = vmatprep.subr.mxu0 0.0
    %747 = vmatpush1.msra.mxu0 %v726
    %748 = vmatprep.subr.mxu0 0.0
    %749 = vmatpush1.msra.mxu0 %v727
    %750 = vmatprep.subr.mxu0 0.0
    %751 = vmatpush1.msra.mxu0 0.0
    %752 = vmatprep.subr.mxu0 0.0
    %753 = vmatpush1.msra.mxu0 0.0
    %754 = vmatprep.subr.mxu0 0.0
    %755 = vmatpush1.msra.mxu0 0.0
    %756 = vmatprep.subr.mxu0 0.0
    %757 = vmatpush1.msra.mxu0 0.0
    %758 = vmatprep.subr.mxu0 0.0
    %759 = vmatpush1.msra.mxu0 0.0
    %760 = vmatprep.subr.mxu0 0.0
    %761 = vmatpush1.msra.mxu0 0.0
    %762 = vmatprep.subr.mxu0 0.0
    %763 = vmatpush1.msra.mxu0 0.0
    %764 = vmatprep.subr.mxu0 0.0
    %765 = vmatpush1.msra.mxu0 0.0
    %766 = vmatprep.subr.mxu0 0.0
    %767 = vmatpush1.msra.mxu0 0.0
    %768 = vmatprep.subr.mxu0 0.0
    %769 = vmatpush1.msra.mxu0 0.0
    %770 = vmatprep.subr.mxu0 0.0
    %771 = vmatpush1.msra.mxu0 0.0
    %772 = vmatprep.subr.mxu0 0.0
    %773 = vmatpush1.msra.mxu0 0.0
    %774 = vmatprep.subr.mxu0 0.0
    %775 = vmatpush1.msra.mxu0 0.0
    %776 = vmatprep.subr.mxu0 0.0
    %777 = vmatpush1.msra.mxu0 0.0
    %778 = vmatprep.subr.mxu0 0.0
    %779 = vmatpush1.msra.mxu0 0.0
    %780 = vmatprep.subr.mxu0 0.0
    %781 = vmatpush1.msra.mxu0 0.0
    %782 = vmatprep.subr.mxu0 0.0
    %783 = vmatpush1.msra.mxu0 0.0
    %784 = vmatprep.subr.mxu0 0.0
    %785 = vmatpush1.msra.mxu0 0.0
    %786 = vmatprep.subr.mxu0 0.0
    %787 = vmatpush1.msra.mxu0 0.0
    %788 = vmatprep.subr.mxu0 0.0
    %789 = vmatpush1.msra.mxu0 0.0
    %790 = vmatprep.subr.mxu0 0.0
    %791 = vmatpush1.msra.mxu0 0.0
    %792 = vmatprep.subr.mxu0 0.0
    %793 = vmatpush1.msra.mxu0 0.0
    %794 = vmatprep.subr.mxu0 0.0
    %795 = vmatpush1.msra.mxu0 0.0
    %796 = vmatprep.subr.mxu0 0.0
    %797 = vmatpush1.msra.mxu0 0.0
    %798 = vmatprep.subr.mxu0 0.0
    %799 = vmatpush1.msra.mxu0 0.0
    %800 = vmatprep.mubr.f32.mxu0 0.0
    %801 = vmatmul.mubr.f32.gmra.mrb[0].mxu0 %v734
    %v802 = vpop.f32.mrb[0].mxu0
    %v803 = vadd.f32 %v732, %v802
    %v804 = vpop.f32.mrb[0].mxu0
    %805 = vdwg.mxu0
    %v806 = vadd.f32 %v211, %v803
    %v807 = vld [vmem:[#allocation5 + $0xf8] sm:$0xff]
    %v808 = vld [vmem:[#allocation5 + $0x100] sm:$0xff]
    %v809 = vld [vmem:[#allocation5 + $0x108] sm:$0xff]
    %v810 = vld [vmem:[#allocation5 + $0x110] sm:$0xff]
    %v811 = vld [vmem:[#allocation5 + $0x118] sm:$0xff]
    %v812 = vld [vmem:[#allocation5 + $0x120] sm:$0xff]
    %v813 = vld [vmem:[#allocation5 + $0x128] sm:$0xff]
    %v814 = vld [vmem:[#allocation5 + $0x130] sm:$0x1]
    %v815 = vlaneseq
    %v816 = vshrl.u32 %v815, 7
    %v817 = vsub.s32 0, %v816
    %v818 = vrot.slane %v814, %v817
    %v820 = vsel %vm227, %v806, 0
    %822 = vmatprep.subr.mxu0 0.0
    %823 = vmatpush1.msra.mxu0 %v807
    %824 = vmatprep.subr.mxu0 0.0
    %825 = vmatpush1.msra.mxu0 %v808
    %826 = vmatprep.subr.mxu0 0.0
    %827 = vmatpush1.msra.mxu0 %v809
    %828 = vmatprep.subr.mxu0 0.0
    %829 = vmatpush1.msra.mxu0 %v810
    %830 = vmatprep.subr.mxu0 0.0
    %831 = vmatpush1.msra.mxu0 %v811
    %832 = vmatprep.subr.mxu0 0.0
    %833 = vmatpush1.msra.mxu0 %v812
    %834 = vmatprep.subr.mxu0 0.0
    %835 = vmatpush1.msra.mxu0 %v813
    %836 = vmatprep.subr.mxu0 0.0
    %837 = vmatpush1.msra.mxu0 0.0
    %838 = vmatprep.subr.mxu0 0.0
    %839 = vmatpush1.msra.mxu0 0.0
    %840 = vmatprep.subr.mxu0 0.0
    %841 = vmatpush1.msra.mxu0 0.0
    %842 = vmatprep.subr.mxu0 0.0
    %843 = vmatpush1.msra.mxu0 0.0
    %844 = vmatprep.subr.mxu0 0.0
    %845 = vmatpush1.msra.mxu0 0.0
    %846 = vmatprep.subr.mxu0 0.0
    %847 = vmatpush1.msra.mxu0 0.0
    %848 = vmatprep.subr.mxu0 0.0
    %849 = vmatpush1.msra.mxu0 0.0
    %850 = vmatprep.subr.mxu0 0.0
    %851 = vmatpush1.msra.mxu0 0.0
    %852 = vmatprep.subr.mxu0 0.0
    %853 = vmatpush1.msra.mxu0 0.0
    %854 = vmatprep.subr.mxu0 0.0
    %855 = vmatpush1.msra.mxu0 0.0
    %856 = vmatprep.subr.mxu0 0.0
    %857 = vmatpush1.msra.mxu0 0.0
    %858 = vmatprep.subr.mxu0 0.0
    %859 = vmatpush1.msra.mxu0 0.0
    %860 = vmatprep.subr.mxu0 0.0
    %861 = vmatpush1.msra.mxu0 0.0
    %862 = vmatprep.subr.mxu0 0.0
    %863 = vmatpush1.msra.mxu0 0.0
    %864 = vmatprep.subr.mxu0 0.0
    %865 = vmatpush1.msra.mxu0 0.0
    %866 = vmatprep.subr.mxu0 0.0
    %867 = vmatpush1.msra.mxu0 0.0
    %868 = vmatprep.subr.mxu0 0.0
    %869 = vmatpush1.msra.mxu0 0.0
    %870 = vmatprep.subr.mxu0 0.0
    %871 = vmatpush1.msra.mxu0 0.0
    %872 = vmatprep.subr.mxu0 0.0
    %873 = vmatpush1.msra.mxu0 0.0
    %874 = vmatprep.subr.mxu0 0.0
    %875 = vmatpush1.msra.mxu0 0.0
    %876 = vmatprep.subr.mxu0 0.0
    %877 = vmatpush1.msra.mxu0 0.0
    %878 = vmatprep.subr.mxu0 0.0
    %879 = vmatpush1.msra.mxu0 0.0
    %880 = vmatprep.subr.mxu0 0.0
    %881 = vmatpush1.msra.mxu0 0.0
    %882 = vmatprep.subr.mxu0 0.0
    %883 = vmatpush1.msra.mxu0 0.0
    %884 = vmatprep.subr.mxu0 0.0
    %885 = vmatpush1.msra.mxu0 0.0
    %886 = vmatprep.mubr.f32.mxu0 0.0
    %887 = vmatmul.mubr.f32.gmra.mrb[0].mxu0 %v820
    %v888 = vpop.f32.mrb[0].mxu0
    %v889 = vadd.f32 %v818, %v888
    %v890 = vpop.f32.mrb[0].mxu0
    %891 = vdwg.mxu0
    %v892 = vld [vmem:[#allocation5 + $0x420] sm:$0xff]
    %v893 = vld [vmem:[#allocation5 + $0x428] sm:$0xff]
    %v894 = vld [vmem:[#allocation5 + $0x430] sm:$0xff]
    %v895 = vld [vmem:[#allocation5 + $0x438] sm:$0xff]
    %v896 = vld [vmem:[#allocation5 + $0x440] sm:$0xff]
    %v897 = vld [vmem:[#allocation5 + $0x448] sm:$0xff]
    %v898 = vld [vmem:[#allocation5 + $0x450] sm:$0xff]
    %v899 = vld [vmem:[#allocation5 + $0x458] sm:$0xff]
    %v900 = vld [vmem:[#allocation5 + $0x460] sm:$0xff]
    %v901 = vld [vmem:[#allocation5 + $0x468] sm:$0xff]
    %v902 = vld [vmem:[#allocation5 + $0x470] sm:$0xff]
    %v903 = vld [vmem:[#allocation5 + $0x478] sm:$0xff]
    %v904 = vld [vmem:[#allocation5 + $0x480] sm:$0xff]
    %v905 = vld [vmem:[#allocation5 + $0x488] sm:$0xff]
    %v906 = vmul.f32 %v889, %v889
    %vm907 = vcmask 916480
    %v909 = vsel %vm907, %v906, 0
    %911 = vmatprep.subr.mxu0 0.0
    %912 = vmatpush1.msra.mxu0 %v892
    %913 = vmatprep.subr.mxu0 0.0
    %914 = vmatpush1.msra.mxu0 %v893
    %915 = vmatprep.subr.mxu0 0.0
    %916 = vmatpush1.msra.mxu0 %v894
    %917 = vmatprep.subr.mxu0 0.0
    %918 = vmatpush1.msra.mxu0 %v895
    %919 = vmatprep.subr.mxu0 0.0
    %920 = vmatpush1.msra.mxu0 %v896
    %921 = vmatprep.subr.mxu0 0.0
    %922 = vmatpush1.msra.mxu0 %v897
    %923 = vmatprep.subr.mxu0 0.0
    %924 = vmatpush1.msra.mxu0 %v898
    %925 = vmatprep.subr.mxu0 0.0
    %926 = vmatpush1.msra.mxu0 %v899
    %927 = vmatprep.subr.mxu0 0.0
    %928 = vmatpush1.msra.mxu0 %v900
    %929 = vmatprep.subr.mxu0 0.0
    %930 = vmatpush1.msra.mxu0 %v901
    %931 = vmatprep.subr.mxu0 0.0
    %932 = vmatpush1.msra.mxu0 %v902
    %933 = vmatprep.subr.mxu0 0.0
    %934 = vmatpush1.msra.mxu0 %v903
    %935 = vmatprep.subr.mxu0 0.0
    %936 = vmatpush1.msra.mxu0 %v904
    %937 = vmatprep.subr.mxu0 0.0
    %938 = vmatpush1.msra.mxu0 %v905
    %939 = vmatprep.subr.mxu0 0.0
    %940 = vmatpush1.msra.mxu0 0.0
    %941 = vmatprep.subr.mxu0 0.0
    %942 = vmatpush1.msra.mxu0 0.0
    %943 = vmatprep.subr.mxu0 0.0
    %944 = vmatpush1.msra.mxu0 0.0
    %945 = vmatprep.subr.mxu0 0.0
    %946 = vmatpush1.msra.mxu0 0.0
    %947 = vmatprep.subr.mxu0 0.0
    %948 = vmatpush1.msra.mxu0 0.0
    %949 = vmatprep.subr.mxu0 0.0
    %950 = vmatpush1.msra.mxu0 0.0
    %951 = vmatprep.subr.mxu0 0.0
    %952 = vmatpush1.msra.mxu0 0.0
    %953 = vmatprep.subr.mxu0 0.0
    %954 = vmatpush1.msra.mxu0 0.0
    %955 = vmatprep.subr.mxu0 0.0
    %956 = vmatpush1.msra.mxu0 0.0
    %957 = vmatprep.subr.mxu0 0.0
    %958 = vmatpush1.msra.mxu0 0.0
    %959 = vmatprep.subr.mxu0 0.0
    %960 = vmatpush1.msra.mxu0 0.0
    %961 = vmatprep.subr.mxu0 0.0
    %962 = vmatpush1.msra.mxu0 0.0
    %963 = vmatprep.subr.mxu0 0.0
    %964 = vmatpush1.msra.mxu0 0.0
    %965 = vmatprep.subr.mxu0 0.0
    %966 = vmatpush1.msra.mxu0 0.0
    %967 = vmatprep.subr.mxu0 0.0
    %968 = vmatpush1.msra.mxu0 0.0
    %969 = vmatprep.subr.mxu0 0.0
    %970 = vmatpush1.msra.mxu0 0.0
    %971 = vmatprep.subr.mxu0 0.0
    %972 = vmatpush1.msra.mxu0 0.0
    %973 = vmatprep.subr.mxu0 0.0
    %974 = vmatpush1.msra.mxu0 0.0
    %975 = vmatprep.mubr.f32.mxu0 0.0
    %976 = vmatmul.mubr.f32.gmra.mrb[0].mxu0 %v909
    %v977 = vpop.f32.mrb[0].mxu0
    %v978 = vadd.f32 1e-06, %v977
    %v979 = vpop.f32.mrb[0].mxu0
    %980 = vdwg.mxu0
    %v981 = vrsqrt.pop %v978
    %v982 = vmul.f32 %v978, %v981
    %vm983 = vcmp.eq.f32.partialorder %v978, inf
    %v984 = vsel %vm983, %v978, %v982
    %vm985 = vcmp.eq.f32.partialorder %v978, 0.0
    %v986 = vand.u32 %v978, 2147483648
    %v987 = vsel %vm985, %v986, %v984
    %v988 = vsub.f32 %v987, 1.0
    %v989 = vxor.u32 %v988, 2147483648
    %v990 = vmul.f32 %v989, 1.442695
    %v991 = vpow.pop %v990
    %v992 = vadd.f32 %v991, 1.0
    %v993 = vrcp.pop %v992
    %v994 = vmul.f32 1.0, %v993
    %vm995 = vcmask 130048
    %v997 = vsel %vm995, %v994, 0
    %v1000 = vsel %vm995, %v892, 0
    %v1003 = vsel %vm995, %v893, 0
    %v1006 = vsel %vm995, %v894, 0
    %v1009 = vsel %vm995, %v895, 0
    %v1012 = vsel %vm995, %v896, 0
    %v1015 = vsel %vm995, %v897, 0
    %v1018 = vsel %vm995, %v898, 0
    %v1021 = vsel %vm995, %v899, 0
    %v1024 = vsel %vm995, %v900, 0
    %v1027 = vsel %vm995, %v901, 0
    %v1030 = vsel %vm995, %v902, 0
    %v1033 = vsel %vm995, %v903, 0
    %v1036 = vsel %vm995, %v904, 0
    %v1039 = vsel %vm995, %v905, 0
    %1041 = vmatprep.subr.mxu0 0.0
    %1042 = vmatpush1.xpose.msra.mxu0 %v1000
    %1043 = vmatprep.subr.mxu0 0.0
    %1044 = vmatpush1.xpose.msra.mxu0 %v1003
    %1045 = vmatprep.subr.mxu0 0.0
    %1046 = vmatpush1.xpose.msra.mxu0 %v1006
    %1047 = vmatprep.subr.mxu0 0.0
    %1048 = vmatpush1.xpose.msra.mxu0 %v1009
    %1049 = vmatprep.subr.mxu0 0.0
    %1050 = vmatpush1.xpose.msra.mxu0 %v1012
    %1051 = vmatprep.subr.mxu0 0.0
    %1052 = vmatpush1.xpose.msra.mxu0 %v1015
    %1053 = vmatprep.subr.mxu0 0.0
    %1054 = vmatpush1.xpose.msra.mxu0 %v1018
    %1055 = vmatprep.subr.mxu0 0.0
    %1056 = vmatpush1.xpose.msra.mxu0 %v1021
    %1057 = vmatprep.subr.mxu0 0.0
    %1058 = vmatpush1.xpose.msra.mxu0 %v1024
    %1059 = vmatprep.subr.mxu0 0.0
    %1060 = vmatpush1.xpose.msra.mxu0 %v1027
    %1061 = vmatprep.subr.mxu0 0.0
    %1062 = vmatpush1.xpose.msra.mxu0 %v1030
    %1063 = vmatprep.subr.mxu0 0.0
    %1064 = vmatpush1.xpose.msra.mxu0 %v1033
    %1065 = vmatprep.subr.mxu0 0.0
    %1066 = vmatpush1.xpose.msra.mxu0 %v1036
    %1067 = vmatprep.subr.mxu0 0.0
    %1068 = vmatpush1.xpose.msra.mxu0 %v1039
    %1069 = vmatprep.subr.mxu0 0.0
    %1070 = vmatpush1.xpose.msra.mxu0 0.0
    %1071 = vmatprep.subr.mxu0 0.0
    %1072 = vmatpush1.xpose.msra.mxu0 0.0
    %1073 = vmatprep.subr.mxu0 0.0
    %1074 = vmatpush1.xpose.msra.mxu0 0.0
    %1075 = vmatprep.subr.mxu0 0.0
    %1076 = vmatpush1.xpose.msra.mxu0 0.0
    %1077 = vmatprep.subr.mxu0 0.0
    %1078 = vmatpush1.xpose.msra.mxu0 0.0
    %1079 = vmatprep.subr.mxu0 0.0
    %1080 = vmatpush1.xpose.msra.mxu0 0.0
    %1081 = vmatprep.subr.mxu0 0.0
    %1082 = vmatpush1.xpose.msra.mxu0 0.0
    %1083 = vmatprep.subr.mxu0 0.0
    %1084 = vmatpush1.xpose.msra.mxu0 0.0
    %1085 = vmatprep.subr.mxu0 0.0
    %1086 = vmatpush1.xpose.msra.mxu0 0.0
    %1087 = vmatprep.subr.mxu0 0.0
    %1088 = vmatpush1.xpose.msra.mxu0 0.0
    %1089 = vmatprep.subr.mxu0 0.0
    %1090 = vmatpush1.xpose.msra.mxu0 0.0
    %1091 = vmatprep.subr.mxu0 0.0
    %1092 = vmatpush1.xpose.msra.mxu0 0.0
    %1093 = vmatprep.subr.mxu0 0.0
    %1094 = vmatpush1.xpose.msra.mxu0 0.0
    %1095 = vmatprep.subr.mxu0 0.0
    %1096 = vmatpush1.xpose.msra.mxu0 0.0
    %1097 = vmatprep.subr.mxu0 0.0
    %1098 = vmatpush1.xpose.msra.mxu0 0.0
    %1099 = vmatprep.subr.mxu0 0.0
    %1100 = vmatpush1.xpose.msra.mxu0 0.0
    %1101 = vmatprep.subr.mxu0 0.0
    %1102 = vmatpush1.xpose.msra.mxu0 0.0
    %1103 = vmatprep.subr.mxu0 0.0
    %1104 = vmatpush1.xpose.msra.mxu0 0.0
    %1105 = vmatprep.mubr.f32.mxu0 0.0
    %1106 = vmatmul.mubr.f32.gmra.mrb[0].mxu0 %v997
    %v1107 = vpop.f32.mrb[0].mxu0
    %v1108 = vadd.f32 0.0, %v1107
    %v1109 = vpop.f32.mrb[0].mxu0
    %1110 = vdwg.mxu0
    %v1111 = vmul.f32 %v889, %v1108
    %v1112 = vld [vmem:[#allocation5 + $0x138] sm:$0xff]
    %v1113 = vld [vmem:[#allocation5 + $0x140] sm:$0xff]
    %v1114 = vld [vmem:[#allocation5 + $0x148] sm:$0xff]
    %v1115 = vld [vmem:[#allocation5 + $0x150] sm:$0xff]
    %v1116 = vld [vmem:[#allocation5 + $0x158] sm:$0xff]
    %v1117 = vld [vmem:[#allocation5 + $0x160] sm:$0xff]
    %v1118 = vld [vmem:[#allocation5 + $0x168] sm:$0xff]
    %v1119 = vld [vmem:[#allocation5 + $0x170] sm:$0xff]
    %v1120 = vld [vmem:[#allocation5 + $0x178] sm:$0xff]
    %v1121 = vld [vmem:[#allocation5 + $0x180] sm:$0xff]
    %v1122 = vld [vmem:[#allocation5 + $0x188] sm:$0xff]
    %v1123 = vld [vmem:[#allocation5 + $0x190] sm:$0xff]
    %v1124 = vld [vmem:[#allocation5 + $0x198] sm:$0xff]
    %v1125 = vld [vmem:[#allocation5 + $0x1a0] sm:$0xff]
    %v1126 = vld [vmem:[#allocation5 + $0x1a8] sm:$0x1]
    %v1127 = vlaneseq
    %v1128 = vshrl.u32 %v1127, 7
    %v1129 = vsub.s32 0, %v1128
    %v1130 = vrot.slane %v1126, %v1129
    %v1132 = vsel %vm907, %v1111, 0
    %1134 = vmatprep.subr.mxu0 0.0
    %1135 = vmatpush1.msra.mxu0 %v1112
    %1136 = vmatprep.subr.mxu0 0.0
    %1137 = vmatpush1.msra.mxu0 %v1113
    %1138 = vmatprep.subr.mxu0 0.0
    %1139 = vmatpush1.msra.mxu0 %v1114
    %1140 = vmatprep.subr.mxu0 0.0
    %1141 = vmatpush1.msra.mxu0 %v1115
    %1142 = vmatprep.subr.mxu0 0.0
    %1143 = vmatpush1.msra.mxu0 %v1116
    %1144 = vmatprep.subr.mxu0 0.0
    %1145 = vmatpush1.msra.mxu0 %v1117
    %1146 = vmatprep.subr.mxu0 0.0
    %1147 = vmatpush1.msra.mxu0 %v1118
    %1148 = vmatprep.subr.mxu0 0.0
    %1149 = vmatpush1.msra.mxu0 %v1119
    %1150 = vmatprep.subr.mxu0 0.0
    %1151 = vmatpush1.msra.mxu0 %v1120
    %1152 = vmatprep.subr.mxu0 0.0
    %1153 = vmatpush1.msra.mxu0 %v1121
    %1154 = vmatprep.subr.mxu0 0.0
    %1155 = vmatpush1.msra.mxu0 %v1122
    %1156 = vmatprep.subr.mxu0 0.0
    %1157 = vmatpush1.msra.mxu0 %v1123
    %1158 = vmatprep.subr.mxu0 0.0
    %1159 = vmatpush1.msra.mxu0 %v1124
    %1160 = vmatprep.subr.mxu0 0.0
    %1161 = vmatpush1.msra.mxu0 %v1125
    %1162 = vmatprep.subr.mxu0 0.0
    %1163 = vmatpush1.msra.mxu0 0.0
    %1164 = vmatprep.subr.mxu0 0.0
    %1165 = vmatpush1.msra.mxu0 0.0
    %1166 = vmatprep.subr.mxu0 0.0
    %1167 = vmatpush1.msra.mxu0 0.0
    %1168 = vmatprep.subr.mxu0 0.0
    %1169 = vmatpush1.msra.mxu0 0.0
    %1170 = vmatprep.subr.mxu0 0.0
    %1171 = vmatpush1.msra.mxu0 0.0
    %1172 = vmatprep.subr.mxu0 0.0
    %1173 = vmatpush1.msra.mxu0 0.0
    %1174 = vmatprep.subr.mxu0 0.0
    %1175 = vmatpush1.msra.mxu0 0.0
    %1176 = vmatprep.subr.mxu0 0.0
    %1177 = vmatpush1.msra.mxu0 0.0
    %1178 = vmatprep.subr.mxu0 0.0
    %1179 = vmatpush1.msra.mxu0 0.0
    %1180 = vmatprep.subr.mxu0 0.0
    %1181 = vmatpush1.msra.mxu0 0.0
    %1182 = vmatprep.subr.mxu0 0.0
    %1183 = vmatpush1.msra.mxu0 0.0
    %1184 = vmatprep.subr.mxu0 0.0
    %1185 = vmatpush1.msra.mxu0 0.0
    %1186 = vmatprep.subr.mxu0 0.0
    %1187 = vmatpush1.msra.mxu0 0.0
    %1188 = vmatprep.subr.mxu0 0.0
    %1189 = vmatpush1.msra.mxu0 0.0
    %1190 = vmatprep.subr.mxu0 0.0
    %1191 = vmatpush1.msra.mxu0 0.0
    %1192 = vmatprep.subr.mxu0 0.0
    %1193 = vmatpush1.msra.mxu0 0.0
    %1194 = vmatprep.subr.mxu0 0.0
    %1195 = vmatpush1.msra.mxu0 0.0
    %1196 = vmatprep.subr.mxu0 0.0
    %1197 = vmatpush1.msra.mxu0 0.0
    %1198 = vmatprep.mubr.f32.mxu0 0.0
    %1199 = vmatmul.mubr.f32.gmra.mrb[0].mxu0 %v1132
    %v1200 = vpop.f32.mrb[0].mxu0
    %v1201 = vadd.f32 %v1130, %v1200
    %v1202 = vpop.f32.mrb[0].mxu0
    %1203 = vdwg.mxu0
    %v1204 = vadd.f32 %v806, %v1201
    %v1205 = vld [vmem:[#allocation5 + $0x1b0] sm:$0xff]
    %v1206 = vld [vmem:[#allocation5 + $0x1b8] sm:$0xff]
    %v1207 = vld [vmem:[#allocation5 + $0x1c0] sm:$0xff]
    %v1208 = vld [vmem:[#allocation5 + $0x1c8] sm:$0xff]
    %v1209 = vld [vmem:[#allocation5 + $0x1d0] sm:$0xff]
    %v1210 = vld [vmem:[#allocation5 + $0x1d8] sm:$0xff]
    %v1211 = vld [vmem:[#allocation5 + $0x1e0] sm:$0xff]
    %v1212 = vld [vmem:[#allocation5 + $0x1e8] sm:$0x1]
    %v1213 = vlaneseq
    %v1214 = vshrl.u32 %v1213, 7
    %v1215 = vsub.s32 0, %v1214
    %v1216 = vrot.slane %v1212, %v1215
    %v1218 = vsel %vm227, %v1204, 0
    %1220 = vmatprep.subr.mxu0 0.0
    %1221 = vmatpush1.msra.mxu0 %v1205
    %1222 = vmatprep.subr.mxu0 0.0
    %1223 = vmatpush1.msra.mxu0 %v1206
    %1224 = vmatprep.subr.mxu0 0.0
    %1225 = vmatpush1.msra.mxu0 %v1207
    %1226 = vmatprep.subr.mxu0 0.0
    %1227 = vmatpush1.msra.mxu0 %v1208
    %1228 = vmatprep.subr.mxu0 0.0
    %1229 = vmatpush1.msra.mxu0 %v1209
    %1230 = vmatprep.subr.mxu0 0.0
    %1231 = vmatpush1.msra.mxu0 %v1210
    %1232 = vmatprep.subr.mxu0 0.0
    %1233 = vmatpush1.msra.mxu0 %v1211
    %1234 = vmatprep.subr.mxu0 0.0
    %1235 = vmatpush1.msra.mxu0 0.0
    %1236 = vmatprep.subr.mxu0 0.0
    %1237 = vmatpush1.msra.mxu0 0.0
    %1238 = vmatprep.subr.mxu0 0.0
    %1239 = vmatpush1.msra.mxu0 0.0
    %1240 = vmatprep.subr.mxu0 0.0
    %1241 = vmatpush1.msra.mxu0 0.0
    %1242 = vmatprep.subr.mxu0 0.0
    %1243 = vmatpush1.msra.mxu0 0.0
    %1244 = vmatprep.subr.mxu0 0.0
    %1245 = vmatpush1.msra.mxu0 0.0
    %1246 = vmatprep.subr.mxu0 0.0
    %1247 = vmatpush1.msra.mxu0 0.0
    %1248 = vmatprep.subr.mxu0 0.0
    %1249 = vmatpush1.msra.mxu0 0.0
    %1250 = vmatprep.subr.mxu0 0.0
    %1251 = vmatpush1.msra.mxu0 0.0
    %1252 = vmatprep.subr.mxu0 0.0
    %1253 = vmatpush1.msra.mxu0 0.0
    %1254 = vmatprep.subr.mxu0 0.0
    %1255 = vmatpush1.msra.mxu0 0.0
    %1256 = vmatprep.subr.mxu0 0.0
    %1257 = vmatpush1.msra.mxu0 0.0
    %1258 = vmatprep.subr.mxu0 0.0
    %1259 = vmatpush1.msra.mxu0 0.0
    %1260 = vmatprep.subr.mxu0 0.0
    %1261 = vmatpush1.msra.mxu0 0.0
    %1262 = vmatprep.subr.mxu0 0.0
    %1263 = vmatpush1.msra.mxu0 0.0
    %1264 = vmatprep.subr.mxu0 0.0
    %1265 = vmatpush1.msra.mxu0 0.0
    %1266 = vmatprep.subr.mxu0 0.0
    %1267 = vmatpush1.msra.mxu0 0.0
    %1268 = vmatprep.subr.mxu0 0.0
    %1269 = vmatpush1.msra.mxu0 0.0
    %1270 = vmatprep.subr.mxu0 0.0
    %1271 = vmatpush1.msra.mxu0 0.0
    %1272 = vmatprep.subr.mxu0 0.0
    %1273 = vmatpush1.msra.mxu0 0.0
    %1274 = vmatprep.subr.mxu0 0.0
    %1275 = vmatpush1.msra.mxu0 0.0
    %1276 = vmatprep.subr.mxu0 0.0
    %1277 = vmatpush1.msra.mxu0 0.0
    %1278 = vmatprep.subr.mxu0 0.0
    %1279 = vmatpush1.msra.mxu0 0.0
    %1280 = vmatprep.subr.mxu0 0.0
    %1281 = vmatpush1.msra.mxu0 0.0
    %1282 = vmatprep.subr.mxu0 0.0
    %1283 = vmatpush1.msra.mxu0 0.0
    %1284 = vmatprep.mubr.f32.mxu0 0.0
    %1285 = vmatmul.mubr.f32.gmra.mrb[0].mxu0 %v1218
    %v1286 = vpop.f32.mrb[0].mxu0
    %v1287 = vadd.f32 %v1216, %v1286
    %v1288 = vpop.f32.mrb[0].mxu0
    %1289 = vdwg.mxu0
    %v1290 = vld [vmem:[#allocation5 + $0x1f0] sm:$0xff]
    %v1291 = vld [vmem:[#allocation5 + $0x1f8] sm:$0xff]
    %v1292 = vld [vmem:[#allocation5 + $0x200] sm:$0xff]
    %v1293 = vld [vmem:[#allocation5 + $0x208] sm:$0xff]
    %v1294 = vld [vmem:[#allocation5 + $0x210] sm:$0xff]
    %v1295 = vld [vmem:[#allocation5 + $0x218] sm:$0xff]
    %v1296 = vld [vmem:[#allocation5 + $0x220] sm:$0xff]
    %v1297 = vld [vmem:[#allocation5 + $0x228] sm:$0x1]
    %v1298 = vlaneseq
    %v1299 = vshrl.u32 %v1298, 7
    %v1300 = vsub.s32 0, %v1299
    %v1301 = vrot.slane %v1297, %v1300
    %1302 = vmatprep.subr.mxu0 0.0
    %1303 = vmatpush1.msra.mxu0 %v1290
    %1304 = vmatprep.subr.mxu0 0.0
    %1305 = vmatpush1.msra.mxu0 %v1291
    %1306 = vmatprep.subr.mxu0 0.0
    %1307 = vmatpush1.msra.mxu0 %v1292
    %1308 = vmatprep.subr.mxu0 0.0
    %1309 = vmatpush1.msra.mxu0 %v1293
    %1310 = vmatprep.subr.mxu0 0.0
    %1311 = vmatpush1.msra.mxu0 %v1294
    %1312 = vmatprep.subr.mxu0 0.0
    %1313 = vmatpush1.msra.mxu0 %v1295
    %1314 = vmatprep.subr.mxu0 0.0
    %1315 = vmatpush1.msra.mxu0 %v1296
    %1316 = vmatprep.subr.mxu0 0.0
    %1317 = vmatpush1.msra.mxu0 0.0
    %1318 = vmatprep.subr.mxu0 0.0
    %1319 = vmatpush1.msra.mxu0 0.0
    %1320 = vmatprep.subr.mxu0 0.0
    %1321 = vmatpush1.msra.mxu0 0.0
    %1322 = vmatprep.subr.mxu0 0.0
    %1323 = vmatpush1.msra.mxu0 0.0
    %1324 = vmatprep.subr.mxu0 0.0
    %1325 = vmatpush1.msra.mxu0 0.0
    %1326 = vmatprep.subr.mxu0 0.0
    %1327 = vmatpush1.msra.mxu0 0.0
    %1328 = vmatprep.subr.mxu0 0.0
    %1329 = vmatpush1.msra.mxu0 0.0
    %1330 = vmatprep.subr.mxu0 0.0
    %1331 = vmatpush1.msra.mxu0 0.0
    %1332 = vmatprep.subr.mxu0 0.0
    %1333 = vmatpush1.msra.mxu0 0.0
    %1334 = vmatprep.subr.mxu0 0.0
    %1335 = vmatpush1.msra.mxu0 0.0
    %1336 = vmatprep.subr.mxu0 0.0
    %1337 = vmatpush1.msra.mxu0 0.0
    %1338 = vmatprep.subr.mxu0 0.0
    %1339 = vmatpush1.msra.mxu0 0.0
    %1340 = vmatprep.subr.mxu0 0.0
    %1341 = vmatpush1.msra.mxu0 0.0
    %1342 = vmatprep.subr.mxu0 0.0
    %1343 = vmatpush1.msra.mxu0 0.0
    %1344 = vmatprep.subr.mxu0 0.0
    %1345 = vmatpush1.msra.mxu0 0.0
    %1346 = vmatprep.subr.mxu0 0.0
    %1347 = vmatpush1.msra.mxu0 0.0
    %1348 = vmatprep.subr.mxu0 0.0
    %1349 = vmatpush1.msra.mxu0 0.0
    %1350 = vmatprep.subr.mxu0 0.0
    %1351 = vmatpush1.msra.mxu0 0.0
    %1352 = vmatprep.subr.mxu0 0.0
    %1353 = vmatpush1.msra.mxu0 0.0
    %1354 = vmatprep.subr.mxu0 0.0
    %1355 = vmatpush1.msra.mxu0 0.0
    %1356 = vmatprep.subr.mxu0 0.0
    %1357 = vmatpush1.msra.mxu0 0.0
    %1358 = vmatprep.subr.mxu0 0.0
    %1359 = vmatpush1.msra.mxu0 0.0
    %1360 = vmatprep.subr.mxu0 0.0
    %1361 = vmatpush1.msra.mxu0 0.0
    %1362 = vmatprep.subr.mxu0 0.0
    %1363 = vmatpush1.msra.mxu0 0.0
    %1364 = vmatprep.subr.mxu0 0.0
    %1365 = vmatpush1.msra.mxu0 0.0
    %1366 = vmatprep.mubr.f32.mxu0 0.0
    %1367 = vmatmul.mubr.f32.gmra.mrb[0].mxu0 %v314
    %v1368 = vpop.f32.mrb[0].mxu0
    %v1369 = vadd.f32 %v1301, %v1368
    %v1370 = vpop.f32.mrb[0].mxu0
    %1371 = vdwg.mxu0
    %v1373 = vsel %vm386, %v1287, 0
    %v1376 = vsel %vm386, %v1369, 0
    %1378 = vmatprep.subr.mxu0 0.0
    %1379 = vmatpush1.xpose.msra.mxu0 %v1376
    %1380 = vmatprep.subr.mxu0 0.0
    %1381 = vmatpush1.xpose.msra.mxu0 0.0
    %1382 = vmatprep.subr.mxu0 0.0
    %1383 = vmatpush1.xpose.msra.mxu0 0.0
    %1384 = vmatprep.subr.mxu0 0.0
    %1385 = vmatpush1.xpose.msra.mxu0 0.0
    %1386 = vmatprep.subr.mxu0 0.0
    %1387 = vmatpush1.xpose.msra.mxu0 0.0
    %1388 = vmatprep.subr.mxu0 0.0
    %1389 = vmatpush1.xpose.msra.mxu0 0.0
    %1390 = vmatprep.subr.mxu0 0.0
    %1391 = vmatpush1.xpose.msra.mxu0 0.0
    %1392 = vmatprep.subr.mxu0 0.0
    %1393 = vmatpush1.xpose.msra.mxu0 0.0
    %1394 = vmatprep.subr.mxu0 0.0
    %1395 = vmatpush1.xpose.msra.mxu0 0.0
    %1396 = vmatprep.subr.mxu0 0.0
    %1397 = vmatpush1.xpose.msra.mxu0 0.0
    %1398 = vmatprep.subr.mxu0 0.0
    %1399 = vmatpush1.xpose.msra.mxu0 0.0
    %1400 = vmatprep.subr.mxu0 0.0
    %1401 = vmatpush1.xpose.msra.mxu0 0.0
    %1402 = vmatprep.subr.mxu0 0.0
    %1403 = vmatpush1.xpose.msra.mxu0 0.0
    %1404 = vmatprep.subr.mxu0 0.0
    %1405 = vmatpush1.xpose.msra.mxu0 0.0
    %1406 = vmatprep.subr.mxu0 0.0
    %1407 = vmatpush1.xpose.msra.mxu0 0.0
    %1408 = vmatprep.subr.mxu0 0.0
    %1409 = vmatpush1.xpose.msra.mxu0 0.0
    %1410 = vmatprep.subr.mxu0 0.0
    %1411 = vmatpush1.xpose.msra.mxu0 0.0
    %1412 = vmatprep.subr.mxu0 0.0
    %1413 = vmatpush1.xpose.msra.mxu0 0.0
    %1414 = vmatprep.subr.mxu0 0.0
    %1415 = vmatpush1.xpose.msra.mxu0 0.0
    %1416 = vmatprep.subr.mxu0 0.0
    %1417 = vmatpush1.xpose.msra.mxu0 0.0
    %1418 = vmatprep.subr.mxu0 0.0
    %1419 = vmatpush1.xpose.msra.mxu0 0.0
    %1420 = vmatprep.subr.mxu0 0.0
    %1421 = vmatpush1.xpose.msra.mxu0 0.0
    %1422 = vmatprep.subr.mxu0 0.0
    %1423 = vmatpush1.xpose.msra.mxu0 0.0
    %1424 = vmatprep.subr.mxu0 0.0
    %1425 = vmatpush1.xpose.msra.mxu0 0.0
    %1426 = vmatprep.subr.mxu0 0.0
    %1427 = vmatpush1.xpose.msra.mxu0 0.0
    %1428 = vmatprep.subr.mxu0 0.0
    %1429 = vmatpush1.xpose.msra.mxu0 0.0
    %1430 = vmatprep.subr.mxu0 0.0
    %1431 = vmatpush1.xpose.msra.mxu0 0.0
    %1432 = vmatprep.subr.mxu0 0.0
    %1433 = vmatpush1.xpose.msra.mxu0 0.0
    %1434 = vmatprep.subr.mxu0 0.0
    %1435 = vmatpush1.xpose.msra.mxu0 0.0
    %1436 = vmatprep.subr.mxu0 0.0
    %1437 = vmatpush1.xpose.msra.mxu0 0.0
    %1438 = vmatprep.subr.mxu0 0.0
    %1439 = vmatpush1.xpose.msra.mxu0 0.0
    %1440 = vmatprep.subr.mxu0 0.0
    %1441 = vmatpush1.xpose.msra.mxu0 0.0
    %1442 = vmatprep.mubr.f32.mxu0 0.0
    %1443 = vmatmul.mubr.f32.gmra.mrb[0].mxu0 %v1373
    %v1444 = vpop.f32.mrb[0].mxu0
    %v1445 = vadd.f32 %v214, %v1444
    %v1446 = vpop.f32.mrb[0].mxu0
    %1447 = vdwg.mxu0
    %v1448 = vsel %vm463, %v1445, -inf
    %1449 = vmax.xlane.f32.xlu0 %v1448
    %v1450 = vpop.xlane.xlu0 %1449
    %v1451 = vsub.f32 %v1445, %v1450
    %v1452 = vmul.f32 %v1451, 1.442695
    %v1453 = vpow.pop %v1452
    %v1454 = vsel %vm463, %v1453, 0.0
    %1455 = vadd.xlane.f32.xlu0 %v1454
    %v1456 = vpop.xlane.xlu0 %1455
    %v1457 = vrcp.pop %v1456
    %v1458 = vmul.f32 %v1453, %v1457
    %1459 = vrot.lane.b32.xlu0 %v1369, 72
    %v1460 = vpop.permute.xlu0 %1459
    %v1463 = vsel %vm463, %v1458, 0
    %1465 = vmatprep.subr.mxu0 0.0
    %1466 = vmatpush1.msra.mxu0 %v1460
    %1467 = vmatprep.subr.mxu0 0.0
    %1468 = vmatpush1.msra.mxu0 0.0
    %1469 = vmatprep.subr.mxu0 0.0
    %1470 = vmatpush1.msra.mxu0 0.0
    %1471 = vmatprep.subr.mxu0 0.0
    %1472 = vmatpush1.msra.mxu0 0.0
    %1473 = vmatprep.subr.mxu0 0.0
    %1474 = vmatpush1.msra.mxu0 0.0
    %1475 = vmatprep.subr.mxu0 0.0
    %1476 = vmatpush1.msra.mxu0 0.0
    %1477 = vmatprep.subr.mxu0 0.0
    %1478 = vmatpush1.msra.mxu0 0.0
    %1479 = vmatprep.subr.mxu0 0.0
    %1480 = vmatpush1.msra.mxu0 0.0
    %1481 = vmatprep.subr.mxu0 0.0
    %1482 = vmatpush1.msra.mxu0 0.0
    %1483 = vmatprep.subr.mxu0 0.0
    %1484 = vmatpush1.msra.mxu0 0.0
    %1485 = vmatprep.subr.mxu0 0.0
    %1486 = vmatpush1.msra.mxu0 0.0
    %1487 = vmatprep.subr.mxu0 0.0
    %1488 = vmatpush1.msra.mxu0 0.0
    %1489 = vmatprep.subr.mxu0 0.0
    %1490 = vmatpush1.msra.mxu0 0.0
    %1491 = vmatprep.subr.mxu0 0.0
    %1492 = vmatpush1.msra.mxu0 0.0
    %1493 = vmatprep.subr.mxu0 0.0
    %1494 = vmatpush1.msra.mxu0 0.0
    %1495 = vmatprep.subr.mxu0 0.0
    %1496 = vmatpush1.msra.mxu0 0.0
    %1497 = vmatprep.subr.mxu0 0.0
    %1498 = vmatpush1.msra.mxu0 0.0
    %1499 = vmatprep.subr.mxu0 0.0
    %1500 = vmatpush1.msra.mxu0 0.0
    %1501 = vmatprep.subr.mxu0 0.0
    %1502 = vmatpush1.msra.mxu0 0.0
    %1503 = vmatprep.subr.mxu0 0.0
    %1504 = vmatpush1.msra.mxu0 0.0
    %1505 = vmatprep.subr.mxu0 0.0
    %1506 = vmatpush1.msra.mxu0 0.0
    %1507 = vmatprep.subr.mxu0 0.0
    %1508 = vmatpush1.msra.mxu0 0.0
    %1509 = vmatprep.subr.mxu0 0.0
    %1510 = vmatpush1.msra.mxu0 0.0
    %1511 = vmatprep.subr.mxu0 0.0
    %1512 = vmatpush1.msra.mxu0 0.0
    %1513 = vmatprep.subr.mxu0 0.0
    %1514 = vmatpush1.msra.mxu0 0.0
    %1515 = vmatprep.subr.mxu0 0.0
    %1516 = vmatpush1.msra.mxu0 0.0
    %1517 = vmatprep.subr.mxu0 0.0
    %1518 = vmatpush1.msra.mxu0 0.0
    %1519 = vmatprep.subr.mxu0 0.0
    %1520 = vmatpush1.msra.mxu0 0.0
    %1521 = vmatprep.subr.mxu0 0.0
    %1522 = vmatpush1.msra.mxu0 0.0
    %1523 = vmatprep.subr.mxu0 0.0
    %1524 = vmatpush1.msra.mxu0 0.0
    %1525 = vmatprep.subr.mxu0 0.0
    %1526 = vmatpush1.msra.mxu0 0.0
    %1527 = vmatprep.subr.mxu0 0.0
    %1528 = vmatpush1.msra.mxu0 0.0
    %1529 = vmatprep.mubr.f32.mxu0 0.0
    %1530 = vmatmul.mubr.f32.gmra.mrb[0].mxu0 %v1463
    %v1531 = vpop.f32.mrb[0].mxu0
    %v1532 = vadd.f32 0.0, %v1531
    %v1533 = vpop.f32.mrb[0].mxu0
    %1534 = vdwg.mxu0
    %1535 = vrot.lane.b32.xlu0 %v1287, 100
    %v1536 = vpop.permute.xlu0 %1535
    %1537 = vrot.lane.b32.xlu0 %v1369, 100
    %v1538 = vpop.permute.xlu0 %1537
    %v1539 = vsel %vm386, %v1536, 0
    %v1541 = vsel %vm386, %v1538, 0
    %1543 = vmatprep.subr.mxu0 0.0
    %1544 = vmatpush1.xpose.msra.mxu0 %v1541
    %1545 = vmatprep.subr.mxu0 0.0
    %1546 = vmatpush1.xpose.msra.mxu0 0.0
    %1547 = vmatprep.subr.mxu0 0.0
    %1548 = vmatpush1.xpose.msra.mxu0 0.0
    %1549 = vmatprep.subr.mxu0 0.0
    %1550 = vmatpush1.xpose.msra.mxu0 0.0
    %1551 = vmatprep.subr.mxu0 0.0
    %1552 = vmatpush1.xpose.msra.mxu0 0.0
    %1553 = vmatprep.subr.mxu0 0.0
    %1554 = vmatpush1.xpose.msra.mxu0 0.0
    %1555 = vmatprep.subr.mxu0 0.0
    %1556 = vmatpush1.xpose.msra.mxu0 0.0
    %1557 = vmatprep.subr.mxu0 0.0
    %1558 = vmatpush1.xpose.msra.mxu0 0.0
    %1559 = vmatprep.subr.mxu0 0.0
    %1560 = vmatpush1.xpose.msra.mxu0 0.0
    %1561 = vmatprep.subr.mxu0 0.0
    %1562 = vmatpush1.xpose.msra.mxu0 0.0
    %1563 = vmatprep.subr.mxu0 0.0
    %1564 = vmatpush1.xpose.msra.mxu0 0.0
    %1565 = vmatprep.subr.mxu0 0.0
    %1566 = vmatpush1.xpose.msra.mxu0 0.0
    %1567 = vmatprep.subr.mxu0 0.0
    %1568 = vmatpush1.xpose.msra.mxu0 0.0
    %1569 = vmatprep.subr.mxu0 0.0
    %1570 = vmatpush1.xpose.msra.mxu0 0.0
    %1571 = vmatprep.subr.mxu0 0.0
    %1572 = vmatpush1.xpose.msra.mxu0 0.0
    %1573 = vmatprep.subr.mxu0 0.0
    %1574 = vmatpush1.xpose.msra.mxu0 0.0
    %1575 = vmatprep.subr.mxu0 0.0
    %1576 = vmatpush1.xpose.msra.mxu0 0.0
    %1577 = vmatprep.subr.mxu0 0.0
    %1578 = vmatpush1.xpose.msra.mxu0 0.0
    %1579 = vmatprep.subr.mxu0 0.0
    %1580 = vmatpush1.xpose.msra.mxu0 0.0
    %1581 = vmatprep.subr.mxu0 0.0
    %1582 = vmatpush1.xpose.msra.mxu0 0.0
    %1583 = vmatprep.subr.mxu0 0.0
    %1584 = vmatpush1.xpose.msra.mxu0 0.0
    %1585 = vmatprep.subr.mxu0 0.0
    %1586 = vmatpush1.xpose.msra.mxu0 0.0
    %1587 = vmatprep.subr.mxu0 0.0
    %1588 = vmatpush1.xpose.msra.mxu0 0.0
    %1589 = vmatprep.subr.mxu0 0.0
    %1590 = vmatpush1.xpose.msra.mxu0 0.0
    %1591 = vmatprep.subr.mxu0 0.0
    %1592 = vmatpush1.xpose.msra.mxu0 0.0
    %1593 = vmatprep.subr.mxu0 0.0
    %1594 = vmatpush1.xpose.msra.mxu0 0.0
    %1595 = vmatprep.subr.mxu0 0.0
    %1596 = vmatpush1.xpose.msra.mxu0 0.0
    %1597 = vmatprep.subr.mxu0 0.0
    %1598 = vmatpush1.xpose.msra.mxu0 0.0
    %1599 = vmatprep.subr.mxu0 0.0
    %1600 = vmatpush1.xpose.msra.mxu0 0.0
    %1601 = vmatprep.subr.mxu0 0.0
    %1602 = vmatpush1.xpose.msra.mxu0 0.0
    %1603 = vmatprep.subr.mxu0 0.0
    %1604 = vmatpush1.xpose.msra.mxu0 0.0
    %1605 = vmatprep.subr.mxu0 0.0
    %1606 = vmatpush1.xpose.msra.mxu0 0.0
    %1607 = vmatprep.mubr.f32.mxu0 0.0
    %1608 = vmatmul.mubr.f32.gmra.mrb[0].mxu0 %v1539
    %v1609 = vpop.f32.mrb[0].mxu0
    %v1610 = vadd.f32 %v214, %v1609
    %v1611 = vpop.f32.mrb[0].mxu0
    %1612 = vdwg.mxu0
    %v1613 = vsel %vm463, %v1610, -inf
    %1614 = vmax.xlane.f32.xlu0 %v1613
    %v1615 = vpop.xlane.xlu0 %1614
    %v1616 = vsub.f32 %v1610, %v1615
    %v1617 = vmul.f32 %v1616, 1.442695
    %v1618 = vpow.pop %v1617
    %v1619 = vsel %vm463, %v1618, 0.0
    %1620 = vadd.xlane.f32.xlu0 %v1619
    %v1621 = vpop.xlane.xlu0 %1620
    %v1622 = vrcp.pop %v1621
    %v1623 = vmul.f32 %v1618, %v1622
    %1624 = vrot.lane.b32.xlu0 %v1369, 44
    %v1625 = vpop.permute.xlu0 %1624
    %v1628 = vsel %vm463, %v1623, 0
    %1630 = vmatprep.subr.mxu0 0.0
    %1631 = vmatpush1.msra.mxu0 %v1625
    %1632 = vmatprep.subr.mxu0 0.0
    %1633 = vmatpush1.msra.mxu0 0.0
    %1634 = vmatprep.subr.mxu0 0.0
    %1635 = vmatpush1.msra.mxu0 0.0
    %1636 = vmatprep.subr.mxu0 0.0
    %1637 = vmatpush1.msra.mxu0 0.0
    %1638 = vmatprep.subr.mxu0 0.0
    %1639 = vmatpush1.msra.mxu0 0.0
    %1640 = vmatprep.subr.mxu0 0.0
    %1641 = vmatpush1.msra.mxu0 0.0
    %1642 = vmatprep.subr.mxu0 0.0
    %1643 = vmatpush1.msra.mxu0 0.0
    %1644 = vmatprep.subr.mxu0 0.0
    %1645 = vmatpush1.msra.mxu0 0.0
    %1646 = vmatprep.subr.mxu0 0.0
    %1647 = vmatpush1.msra.mxu0 0.0
    %1648 = vmatprep.subr.mxu0 0.0
    %1649 = vmatpush1.msra.mxu0 0.0
    %1650 = vmatprep.subr.mxu0 0.0
    %1651 = vmatpush1.msra.mxu0 0.0
    %1652 = vmatprep.subr.mxu0 0.0
    %1653 = vmatpush1.msra.mxu0 0.0
    %1654 = vmatprep.subr.mxu0 0.0
    %1655 = vmatpush1.msra.mxu0 0.0
    %1656 = vmatprep.subr.mxu0 0.0
    %1657 = vmatpush1.msra.mxu0 0.0
    %1658 = vmatprep.subr.mxu0 0.0
    %1659 = vmatpush1.msra.mxu0 0.0
    %1660 = vmatprep.subr.mxu0 0.0
    %1661 = vmatpush1.msra.mxu0 0.0
    %1662 = vmatprep.subr.mxu0 0.0
    %1663 = vmatpush1.msra.mxu0 0.0
    %1664 = vmatprep.subr.mxu0 0.0
    %1665 = vmatpush1.msra.mxu0 0.0
    %1666 = vmatprep.subr.mxu0 0.0
    %1667 = vmatpush1.msra.mxu0 0.0
    %1668 = vmatprep.subr.mxu0 0.0
    %1669 = vmatpush1.msra.mxu0 0.0
    %1670 = vmatprep.subr.mxu0 0.0
    %1671 = vmatpush1.msra.mxu0 0.0
    %1672 = vmatprep.subr.mxu0 0.0
    %1673 = vmatpush1.msra.mxu0 0.0
    %1674 = vmatprep.subr.mxu0 0.0
    %1675 = vmatpush1.msra.mxu0 0.0
    %1676 = vmatprep.subr.mxu0 0.0
    %1677 = vmatpush1.msra.mxu0 0.0
    %1678 = vmatprep.subr.mxu0 0.0
    %1679 = vmatpush1.msra.mxu0 0.0
    %1680 = vmatprep.subr.mxu0 0.0
    %1681 = vmatpush1.msra.mxu0 0.0
    %1682 = vmatprep.subr.mxu0 0.0
    %1683 = vmatpush1.msra.mxu0 0.0
    %1684 = vmatprep.subr.mxu0 0.0
    %1685 = vmatpush1.msra.mxu0 0.0
    %1686 = vmatprep.subr.mxu0 0.0
    %1687 = vmatpush1.msra.mxu0 0.0
    %1688 = vmatprep.subr.mxu0 0.0
    %1689 = vmatpush1.msra.mxu0 0.0
    %1690 = vmatprep.subr.mxu0 0.0
    %1691 = vmatpush1.msra.mxu0 0.0
    %1692 = vmatprep.subr.mxu0 0.0
    %1693 = vmatpush1.msra.mxu0 0.0
    %1694 = vmatprep.mubr.f32.mxu0 0.0
    %1695 = vmatmul.mubr.f32.gmra.mrb[0].mxu0 %v1628
    %v1696 = vpop.f32.mrb[0].mxu0
    %v1697 = vadd.f32 0.0, %v1696
    %v1698 = vpop.f32.mrb[0].mxu0
    %1699 = vdwg.mxu0
    %1701 = vrot.lane.b32.xlu0 %v1697, 28
    %v1702 = vpop.permute.xlu0 %1701
    %v1704 = vsel %vm386, %v1532, %v1702
    %v1705 = vld [vmem:[#allocation5 + $0x230] sm:$0xff]
    %v1706 = vld [vmem:[#allocation5 + $0x238] sm:$0xff]
    %v1707 = vld [vmem:[#allocation5 + $0x240] sm:$0xff]
    %v1708 = vld [vmem:[#allocation5 + $0x248] sm:$0xff]
    %v1709 = vld [vmem:[#allocation5 + $0x250] sm:$0xff]
    %v1710 = vld [vmem:[#allocation5 + $0x258] sm:$0xff]
    %v1711 = vld [vmem:[#allocation5 + $0x260] sm:$0xff]
    %v1712 = vld [vmem:[#allocation5 + $0x268] sm:$0x1]
    %v1713 = vlaneseq
    %v1714 = vshrl.u32 %v1713, 7
    %v1715 = vsub.s32 0, %v1714
    %v1716 = vrot.slane %v1712, %v1715
    %v1718 = vsel %vm227, %v1704, 0
    %1720 = vmatprep.subr.mxu0 0.0
    %1721 = vmatpush1.msra.mxu0 %v1705
    %1722 = vmatprep.subr.mxu0 0.0
    %1723 = vmatpush1.msra.mxu0 %v1706
    %1724 = vmatprep.subr.mxu0 0.0
    %1725 = vmatpush1.msra.mxu0 %v1707
    %1726 = vmatprep.subr.mxu0 0.0
    %1727 = vmatpush1.msra.mxu0 %v1708
    %1728 = vmatprep.subr.mxu0 0.0
    %1729 = vmatpush1.msra.mxu0 %v1709
    %1730 = vmatprep.subr.mxu0 0.0
    %1731 = vmatpush1.msra.mxu0 %v1710
    %1732 = vmatprep.subr.mxu0 0.0
    %1733 = vmatpush1.msra.mxu0 %v1711
    %1734 = vmatprep.subr.mxu0 0.0
    %1735 = vmatpush1.msra.mxu0 0.0
    %1736 = vmatprep.subr.mxu0 0.0
    %1737 = vmatpush1.msra.mxu0 0.0
    %1738 = vmatprep.subr.mxu0 0.0
    %1739 = vmatpush1.msra.mxu0 0.0
    %1740 = vmatprep.subr.mxu0 0.0
    %1741 = vmatpush1.msra.mxu0 0.0
    %1742 = vmatprep.subr.mxu0 0.0
    %1743 = vmatpush1.msra.mxu0 0.0
    %1744 = vmatprep.subr.mxu0 0.0
    %1745 = vmatpush1.msra.mxu0 0.0
    %1746 = vmatprep.subr.mxu0 0.0
    %1747 = vmatpush1.msra.mxu0 0.0
    %1748 = vmatprep.subr.mxu0 0.0
    %1749 = vmatpush1.msra.mxu0 0.0
    %1750 = vmatprep.subr.mxu0 0.0
    %1751 = vmatpush1.msra.mxu0 0.0
    %1752 = vmatprep.subr.mxu0 0.0
    %1753 = vmatpush1.msra.mxu0 0.0
    %1754 = vmatprep.subr.mxu0 0.0
    %1755 = vmatpush1.msra.mxu0 0.0
    %1756 = vmatprep.subr.mxu0 0.0
    %1757 = vmatpush1.msra.mxu0 0.0
    %1758 = vmatprep.subr.mxu0 0.0
    %1759 = vmatpush1.msra.mxu0 0.0
    %1760 = vmatprep.subr.mxu0 0.0
    %1761 = vmatpush1.msra.mxu0 0.0
    %1762 = vmatprep.subr.mxu0 0.0
    %1763 = vmatpush1.msra.mxu0 0.0
    %1764 = vmatprep.subr.mxu0 0.0
    %1765 = vmatpush1.msra.mxu0 0.0
    %1766 = vmatprep.subr.mxu0 0.0
    %1767 = vmatpush1.msra.mxu0 0.0
    %1768 = vmatprep.subr.mxu0 0.0
    %1769 = vmatpush1.msra.mxu0 0.0
    %1770 = vmatprep.subr.mxu0 0.0
    %1771 = vmatpush1.msra.mxu0 0.0
    %1772 = vmatprep.subr.mxu0 0.0
    %1773 = vmatpush1.msra.mxu0 0.0
    %1774 = vmatprep.subr.mxu0 0.0
    %1775 = vmatpush1.msra.mxu0 0.0
    %1776 = vmatprep.subr.mxu0 0.0
    %1777 = vmatpush1.msra.mxu0 0.0
    %1778 = vmatprep.subr.mxu0 0.0
    %1779 = vmatpush1.msra.mxu0 0.0
    %1780 = vmatprep.subr.mxu0 0.0
    %1781 = vmatpush1.msra.mxu0 0.0
    %1782 = vmatprep.subr.mxu0 0.0
    %1783 = vmatpush1.msra.mxu0 0.0
    %1784 = vmatprep.mubr.f32.mxu0 0.0
    %1785 = vmatmul.mubr.f32.gmra.mrb[0].mxu0 %v1718
    %v1786 = vpop.f32.mrb[0].mxu0
    %v1787 = vadd.f32 %v1716, %v1786
    %v1788 = vpop.f32.mrb[0].mxu0
    %1789 = vdwg.mxu0
    %v1790 = vadd.f32 %v1204, %v1787
    %v1791 = vld [vmem:[#allocation5 + $0x270] sm:$0xff]
    %v1792 = vld [vmem:[#allocation5 + $0x278] sm:$0xff]
    %v1793 = vld [vmem:[#allocation5 + $0x280] sm:$0xff]
    %v1794 = vld [vmem:[#allocation5 + $0x288] sm:$0xff]
    %v1795 = vld [vmem:[#allocation5 + $0x290] sm:$0xff]
    %v1796 = vld [vmem:[#allocation5 + $0x298] sm:$0xff]
    %v1797 = vld [vmem:[#allocation5 + $0x2a0] sm:$0xff]
    %v1798 = vld [vmem:[#allocation5 + $0x2a8] sm:$0x1]
    %v1799 = vlaneseq
    %v1800 = vshrl.u32 %v1799, 7
    %v1801 = vsub.s32 0, %v1800
    %v1802 = vrot.slane %v1798, %v1801
    %v1804 = vsel %vm227, %v1790, 0
    %1806 = vmatprep.subr.mxu0 0.0
    %1807 = vmatpush1.msra.mxu0 %v1791
    %1808 = vmatprep.subr.mxu0 0.0
    %1809 = vmatpush1.msra.mxu0 %v1792
    %1810 = vmatprep.subr.mxu0 0.0
    %1811 = vmatpush1.msra.mxu0 %v1793
    %1812 = vmatprep.subr.mxu0 0.0
    %1813 = vmatpush1.msra.mxu0 %v1794
    %1814 = vmatprep.subr.mxu0 0.0
    %1815 = vmatpush1.msra.mxu0 %v1795
    %1816 = vmatprep.subr.mxu0 0.0
    %1817 = vmatpush1.msra.mxu0 %v1796
    %1818 = vmatprep.subr.mxu0 0.0
    %1819 = vmatpush1.msra.mxu0 %v1797
    %1820 = vmatprep.subr.mxu0 0.0
    %1821 = vmatpush1.msra.mxu0 0.0
    %1822 = vmatprep.subr.mxu0 0.0
    %1823 = vmatpush1.msra.mxu0 0.0
    %1824 = vmatprep.subr.mxu0 0.0
    %1825 = vmatpush1.msra.mxu0 0.0
    %1826 = vmatprep.subr.mxu0 0.0
    %1827 = vmatpush1.msra.mxu0 0.0
    %1828 = vmatprep.subr.mxu0 0.0
    %1829 = vmatpush1.msra.mxu0 0.0
    %1830 = vmatprep.subr.mxu0 0.0
    %1831 = vmatpush1.msra.mxu0 0.0
    %1832 = vmatprep.subr.mxu0 0.0
    %1833 = vmatpush1.msra.mxu0 0.0
    %1834 = vmatprep.subr.mxu0 0.0
    %1835 = vmatpush1.msra.mxu0 0.0
    %1836 = vmatprep.subr.mxu0 0.0
    %1837 = vmatpush1.msra.mxu0 0.0
    %1838 = vmatprep.subr.mxu0 0.0
    %1839 = vmatpush1.msra.mxu0 0.0
    %1840 = vmatprep.subr.mxu0 0.0
    %1841 = vmatpush1.msra.mxu0 0.0
    %1842 = vmatprep.subr.mxu0 0.0
    %1843 = vmatpush1.msra.mxu0 0.0
    %1844 = vmatprep.subr.mxu0 0.0
    %1845 = vmatpush1.msra.mxu0 0.0
    %1846 = vmatprep.subr.mxu0 0.0
    %1847 = vmatpush1.msra.mxu0 0.0
    %1848 = vmatprep.subr.mxu0 0.0
    %1849 = vmatpush1.msra.mxu0 0.0
    %1850 = vmatprep.subr.mxu0 0.0
    %1851 = vmatpush1.msra.mxu0 0.0
    %1852 = vmatprep.subr.mxu0 0.0
    %1853 = vmatpush1.msra.mxu0 0.0
    %1854 = vmatprep.subr.mxu0 0.0
    %1855 = vmatpush1.msra.mxu0 0.0
    %1856 = vmatprep.subr.mxu0 0.0
    %1857 = vmatpush1.msra.mxu0 0.0
    %1858 = vmatprep.subr.mxu0 0.0
    %1859 = vmatpush1.msra.mxu0 0.0
    %1860 = vmatprep.subr.mxu0 0.0
    %1861 = vmatpush1.msra.mxu0 0.0
    %1862 = vmatprep.subr.mxu0 0.0
    %1863 = vmatpush1.msra.mxu0 0.0
    %1864 = vmatprep.subr.mxu0 0.0
    %1865 = vmatpush1.msra.mxu0 0.0
    %1866 = vmatprep.subr.mxu0 0.0
    %1867 = vmatpush1.msra.mxu0 0.0
    %1868 = vmatprep.subr.mxu0 0.0
    %1869 = vmatpush1.msra.mxu0 0.0
    %1870 = vmatprep.mubr.f32.mxu0 0.0
    %1871 = vmatmul.mubr.f32.gmra.mrb[0].mxu0 %v1804
    %v1872 = vpop.f32.mrb[0].mxu0
    %v1873 = vadd.f32 %v1802, %v1872
    %v1874 = vpop.f32.mrb[0].mxu0
    %1875 = vdwg.mxu0
    %v1876 = vmul.f32 %v1873, %v1873
    %v1878 = vsel %vm907, %v1876, 0
    %1880 = vmatprep.subr.mxu0 0.0
    %1881 = vmatpush1.msra.mxu0 %v892
    %1882 = vmatprep.subr.mxu0 0.0
    %1883 = vmatpush1.msra.mxu0 %v893
    %1884 = vmatprep.subr.mxu0 0.0
    %1885 = vmatpush1.msra.mxu0 %v894
    %1886 = vmatprep.subr.mxu0 0.0
    %1887 = vmatpush1.msra.mxu0 %v895
    %1888 = vmatprep.subr.mxu0 0.0
    %1889 = vmatpush1.msra.mxu0 %v896
    %1890 = vmatprep.subr.mxu0 0.0
    %1891 = vmatpush1.msra.mxu0 %v897
    %1892 = vmatprep.subr.mxu0 0.0
    %1893 = vmatpush1.msra.mxu0 %v898
    %1894 = vmatprep.subr.mxu0 0.0
    %1895 = vmatpush1.msra.mxu0 %v899
    %1896 = vmatprep.subr.mxu0 0.0
    %1897 = vmatpush1.msra.mxu0 %v900
    %1898 = vmatprep.subr.mxu0 0.0
    %1899 = vmatpush1.msra.mxu0 %v901
    %1900 = vmatprep.subr.mxu0 0.0
    %1901 = vmatpush1.msra.mxu0 %v902
    %1902 = vmatprep.subr.mxu0 0.0
    %1903 = vmatpush1.msra.mxu0 %v903
    %1904 = vmatprep.subr.mxu0 0.0
    %1905 = vmatpush1.msra.mxu0 %v904
    %1906 = vmatprep.subr.mxu0 0.0
    %1907 = vmatpush1.msra.mxu0 %v905
    %1908 = vmatprep.subr.mxu0 0.0
    %1909 = vmatpush1.msra.mxu0 0.0
    %1910 = vmatprep.subr.mxu0 0.0
    %1911 = vmatpush1.msra.mxu0 0.0
    %1912 = vmatprep.subr.mxu0 0.0
    %1913 = vmatpush1.msra.mxu0 0.0
    %1914 = vmatprep.subr.mxu0 0.0
    %1915 = vmatpush1.msra.mxu0 0.0
    %1916 = vmatprep.subr.mxu0 0.0
    %1917 = vmatpush1.msra.mxu0 0.0
    %1918 = vmatprep.subr.mxu0 0.0
    %1919 = vmatpush1.msra.mxu0 0.0
    %1920 = vmatprep.subr.mxu0 0.0
    %1921 = vmatpush1.msra.mxu0 0.0
    %1922 = vmatprep.subr.mxu0 0.0
    %1923 = vmatpush1.msra.mxu0 0.0
    %1924 = vmatprep.subr.mxu0 0.0
    %1925 = vmatpush1.msra.mxu0 0.0
    %1926 = vmatprep.subr.mxu0 0.0
    %1927 = vmatpush1.msra.mxu0 0.0
    %1928 = vmatprep.subr.mxu0 0.0
    %1929 = vmatpush1.msra.mxu0 0.0
    %1930 = vmatprep.subr.mxu0 0.0
    %1931 = vmatpush1.msra.mxu0 0.0
    %1932 = vmatprep.subr.mxu0 0.0
    %1933 = vmatpush1.msra.mxu0 0.0
    %1934 = vmatprep.subr.mxu0 0.0
    %1935 = vmatpush1.msra.mxu0 0.0
    %1936 = vmatprep.subr.mxu0 0.0
    %1937 = vmatpush1.msra.mxu0 0.0
    %1938 = vmatprep.subr.mxu0 0.0
    %1939 = vmatpush1.msra.mxu0 0.0
    %1940 = vmatprep.subr.mxu0 0.0
    %1941 = vmatpush1.msra.mxu0 0.0
    %1942 = vmatprep.subr.mxu0 0.0
    %1943 = vmatpush1.msra.mxu0 0.0
    %1944 = vmatprep.mubr.f32.mxu0 0.0
    %1945 = vmatmul.mubr.f32.gmra.mrb[0].mxu0 %v1878
    %v1946 = vpop.f32.mrb[0].mxu0
    %v1947 = vadd.f32 1e-06, %v1946
    %v1948 = vpop.f32.mrb[0].mxu0
    %1949 = vdwg.mxu0
    %v1950 = vrsqrt.pop %v1947
    %v1951 = vmul.f32 %v1947, %v1950
    %vm1952 = vcmp.eq.f32.partialorder %v1947, inf
    %v1953 = vsel %vm1952, %v1947, %v1951
    %vm1954 = vcmp.eq.f32.partialorder %v1947, 0.0
    %v1955 = vand.u32 %v1947, 2147483648
    %v1956 = vsel %vm1954, %v1955, %v1953
    %v1957 = vsub.f32 %v1956, 1.0
    %v1958 = vxor.u32 %v1957, 2147483648
    %v1959 = vmul.f32 %v1958, 1.442695
    %v1960 = vpow.pop %v1959
    %v1961 = vadd.f32 %v1960, 1.0
    %v1962 = vrcp.pop %v1961
    %v1963 = vmul.f32 1.0, %v1962
    %v1965 = vsel %vm995, %v1963, 0
    %1967 = vmatprep.subr.mxu0 0.0
    %1968 = vmatpush1.xpose.msra.mxu0 %v1000
    %1969 = vmatprep.subr.mxu0 0.0
    %1970 = vmatpush1.xpose.msra.mxu0 %v1003
    %1971 = vmatprep.subr.mxu0 0.0
    %1972 = vmatpush1.xpose.msra.mxu0 %v1006
    %1973 = vmatprep.subr.mxu0 0.0
    %1974 = vmatpush1.xpose.msra.mxu0 %v1009
    %1975 = vmatprep.subr.mxu0 0.0
    %1976 = vmatpush1.xpose.msra.mxu0 %v1012
    %1977 = vmatprep.subr.mxu0 0.0
    %1978 = vmatpush1.xpose.msra.mxu0 %v1015
    %1979 = vmatprep.subr.mxu0 0.0
    %1980 = vmatpush1.xpose.msra.mxu0 %v1018
    %1981 = vmatprep.subr.mxu0 0.0
    %1982 = vmatpush1.xpose.msra.mxu0 %v1021
    %1983 = vmatprep.subr.mxu0 0.0
    %1984 = vmatpush1.xpose.msra.mxu0 %v1024
    %1985 = vmatprep.subr.mxu0 0.0
    %1986 = vmatpush1.xpose.msra.mxu0 %v1027
    %1987 = vmatprep.subr.mxu0 0.0
    %1988 = vmatpush1.xpose.msra.mxu0 %v1030
    %1989 = vmatprep.subr.mxu0 0.0
    %1990 = vmatpush1.xpose.msra.mxu0 %v1033
    %1991 = vmatprep.subr.mxu0 0.0
    %1992 = vmatpush1.xpose.msra.mxu0 %v1036
    %1993 = vmatprep.subr.mxu0 0.0
    %1994 = vmatpush1.xpose.msra.mxu0 %v1039
    %1995 = vmatprep.subr.mxu0 0.0
    %1996 = vmatpush1.xpose.msra.mxu0 0.0
    %1997 = vmatprep.subr.mxu0 0.0
    %1998 = vmatpush1.xpose.msra.mxu0 0.0
    %1999 = vmatprep.subr.mxu0 0.0
    %2000 = vmatpush1.xpose.msra.mxu0 0.0
    %2001 = vmatprep.subr.mxu0 0.0
    %2002 = vmatpush1.xpose.msra.mxu0 0.0
    %2003 = vmatprep.subr.mxu0 0.0
    %2004 = vmatpush1.xpose.msra.mxu0 0.0
    %2005 = vmatprep.subr.mxu0 0.0
    %2006 = vmatpush1.xpose.msra.mxu0 0.0
    %2007 = vmatprep.subr.mxu0 0.0
    %2008 = vmatpush1.xpose.msra.mxu0 0.0
    %2009 = vmatprep.subr.mxu0 0.0
    %2010 = vmatpush1.xpose.msra.mxu0 0.0
    %2011 = vmatprep.subr.mxu0 0.0
    %2012 = vmatpush1.xpose.msra.mxu0 0.0
    %2013 = vmatprep.subr.mxu0 0.0
    %2014 = vmatpush1.xpose.msra.mxu0 0.0
    %2015 = vmatprep.subr.mxu0 0.0
    %2016 = vmatpush1.xpose.msra.mxu0 0.0
    %2017 = vmatprep.subr.mxu0 0.0
    %2018 = vmatpush1.xpose.msra.mxu0 0.0
    %2019 = vmatprep.subr.mxu0 0.0
    %2020 = vmatpush1.xpose.msra.mxu0 0.0
    %2021 = vmatprep.subr.mxu0 0.0
    %2022 = vmatpush1.xpose.msra.mxu0 0.0
    %2023 = vmatprep.subr.mxu0 0.0
    %2024 = vmatpush1.xpose.msra.mxu0 0.0
    %2025 = vmatprep.subr.mxu0 0.0
    %2026 = vmatpush1.xpose.msra.mxu0 0.0
    %2027 = vmatprep.subr.mxu0 0.0
    %2028 = vmatpush1.xpose.msra.mxu0 0.0
    %2029 = vmatprep.subr.mxu0 0.0
    %2030 = vmatpush1.xpose.msra.mxu0 0.0
    %2031 = vmatprep.mubr.f32.mxu0 0.0
    %2032 = vmatmul.mubr.f32.gmra.mrb[0].mxu0 %v1965
    %v2033 = vpop.f32.mrb[0].mxu0
    %v2034 = vadd.f32 0.0, %v2033
    %v2035 = vpop.f32.mrb[0].mxu0
    %2036 = vdwg.mxu0
    %v2037 = vmul.f32 %v1873, %v2034
    %v2038 = vld [vmem:[#allocation5 + $0x2b0] sm:$0xff]
    %v2039 = vld [vmem:[#allocation5 + $0x2b8] sm:$0xff]
    %v2040 = vld [vmem:[#allocation5 + $0x2c0] sm:$0xff]
    %v2041 = vld [vmem:[#allocation5 + $0x2c8] sm:$0xff]
    %v2042 = vld [vmem:[#allocation5 + $0x2d0] sm:$0xff]
    %v2043 = vld [vmem:[#allocation5 + $0x2d8] sm:$0xff]
    %v2044 = vld [vmem:[#allocation5 + $0x2e0] sm:$0xff]
    %v2045 = vld [vmem:[#allocation5 + $0x2e8] sm:$0xff]
    %v2046 = vld [vmem:[#allocation5 + $0x2f0] sm:$0xff]
    %v2047 = vld [vmem:[#allocation5 + $0x2f8] sm:$0xff]
    %v2048 = vld [vmem:[#allocation5 + $0x300] sm:$0xff]
    %v2049 = vld [vmem:[#allocation5 + $0x308] sm:$0xff]
    %v2050 = vld [vmem:[#allocation5 + $0x310] sm:$0xff]
    %v2051 = vld [vmem:[#allocation5 + $0x318] sm:$0xff]
    %v2052 = vld [vmem:[#allocation5 + $0x320] sm:$0x1]
    %v2053 = vlaneseq
    %v2054 = vshrl.u32 %v2053, 7
    %v2055 = vsub.s32 0, %v2054
    %v2056 = vrot.slane %v2052, %v2055
    %v2058 = vsel %vm907, %v2037, 0
    %2060 = vmatprep.subr.mxu0 0.0
    %2061 = vmatpush1.msra.mxu0 %v2038
    %2062 = vmatprep.subr.mxu0 0.0
    %2063 = vmatpush1.msra.mxu0 %v2039
    %2064 = vmatprep.subr.mxu0 0.0
    %2065 = vmatpush1.msra.mxu0 %v2040
    %2066 = vmatprep.subr.mxu0 0.0
    %2067 = vmatpush1.msra.mxu0 %v2041
    %2068 = vmatprep.subr.mxu0 0.0
    %2069 = vmatpush1.msra.mxu0 %v2042
    %2070 = vmatprep.subr.mxu0 0.0
    %2071 = vmatpush1.msra.mxu0 %v2043
    %2072 = vmatprep.subr.mxu0 0.0
    %2073 = vmatpush1.msra.mxu0 %v2044
    %2074 = vmatprep.subr.mxu0 0.0
    %2075 = vmatpush1.msra.mxu0 %v2045
    %2076 = vmatprep.subr.mxu0 0.0
    %2077 = vmatpush1.msra.mxu0 %v2046
    %2078 = vmatprep.subr.mxu0 0.0
    %2079 = vmatpush1.msra.mxu0 %v2047
    %2080 = vmatprep.subr.mxu0 0.0
    %2081 = vmatpush1.msra.mxu0 %v2048
    %2082 = vmatprep.subr.mxu0 0.0
    %2083 = vmatpush1.msra.mxu0 %v2049
    %2084 = vmatprep.subr.mxu0 0.0
    %2085 = vmatpush1.msra.mxu0 %v2050
    %2086 = vmatprep.subr.mxu0 0.0
    %2087 = vmatpush1.msra.mxu0 %v2051
    %2088 = vmatprep.subr.mxu0 0.0
    %2089 = vmatpush1.msra.mxu0 0.0
    %2090 = vmatprep.subr.mxu0 0.0
    %2091 = vmatpush1.msra.mxu0 0.0
    %2092 = vmatprep.subr.mxu0 0.0
    %2093 = vmatpush1.msra.mxu0 0.0
    %2094 = vmatprep.subr.mxu0 0.0
    %2095 = vmatpush1.msra.mxu0 0.0
    %2096 = vmatprep.subr.mxu0 0.0
    %2097 = vmatpush1.msra.mxu0 0.0
    %2098 = vmatprep.subr.mxu0 0.0
    %2099 = vmatpush1.msra.mxu0 0.0
    %2100 = vmatprep.subr.mxu0 0.0
    %2101 = vmatpush1.msra.mxu0 0.0
    %2102 = vmatprep.subr.mxu0 0.0
    %2103 = vmatpush1.msra.mxu0 0.0
    %2104 = vmatprep.subr.mxu0 0.0
    %2105 = vmatpush1.msra.mxu0 0.0
    %2106 = vmatprep.subr.mxu0 0.0
    %2107 = vmatpush1.msra.mxu0 0.0
    %2108 = vmatprep.subr.mxu0 0.0
    %2109 = vmatpush1.msra.mxu0 0.0
    %2110 = vmatprep.subr.mxu0 0.0
    %2111 = vmatpush1.msra.mxu0 0.0
    %2112 = vmatprep.subr.mxu0 0.0
    %2113 = vmatpush1.msra.mxu0 0.0
    %2114 = vmatprep.subr.mxu0 0.0
    %2115 = vmatpush1.msra.mxu0 0.0
    %2116 = vmatprep.subr.mxu0 0.0
    %2117 = vmatpush1.msra.mxu0 0.0
    %2118 = vmatprep.subr.mxu0 0.0
    %2119 = vmatpush1.msra.mxu0 0.0
    %2120 = vmatprep.subr.mxu0 0.0
    %2121 = vmatpush1.msra.mxu0 0.0
    %2122 = vmatprep.subr.mxu0 0.0
    %2123 = vmatpush1.msra.mxu0 0.0
    %2124 = vmatprep.mubr.f32.mxu0 0.0
    %2125 = vmatmul.mubr.f32.gmra.mrb[0].mxu0 %v2058
    %v2126 = vpop.f32.mrb[0].mxu0
    %v2127 = vadd.f32 %v2056, %v2126
    %v2128 = vpop.f32.mrb[0].mxu0
    %2129 = vdwg.mxu0
    %v2130 = vadd.f32 %v1790, %v2127
    %v2131 = vld [vmem:[#allocation5 + $0x328] sm:$0xff]
    %v2132 = vld [vmem:[#allocation5 + $0x330] sm:$0xff]
    %v2133 = vld [vmem:[#allocation5 + $0x338] sm:$0xff]
    %v2134 = vld [vmem:[#allocation5 + $0x340] sm:$0xff]
    %v2135 = vld [vmem:[#allocation5 + $0x348] sm:$0xff]
    %v2136 = vld [vmem:[#allocation5 + $0x350] sm:$0xff]
    %v2137 = vld [vmem:[#allocation5 + $0x358] sm:$0xff]
    %v2138 = vld [vmem:[#allocation5 + $0x360] sm:$0x1]
    %v2139 = vlaneseq
    %v2140 = vshrl.u32 %v2139, 7
    %v2141 = vsub.s32 0, %v2140
    %v2142 = vrot.slane %v2138, %v2141
    %v2144 = vsel %vm227, %v2130, 0
    %2146 = vmatprep.subr.mxu0 0.0
    %2147 = vmatpush1.msra.mxu0 %v2131
    %2148 = vmatprep.subr.mxu0 0.0
    %2149 = vmatpush1.msra.mxu0 %v2132
    %2150 = vmatprep.subr.mxu0 0.0
    %2151 = vmatpush1.msra.mxu0 %v2133
    %2152 = vmatprep.subr.mxu0 0.0
    %2153 = vmatpush1.msra.mxu0 %v2134
    %2154 = vmatprep.subr.mxu0 0.0
    %2155 = vmatpush1.msra.mxu0 %v2135
    %2156 = vmatprep.subr.mxu0 0.0
    %2157 = vmatpush1.msra.mxu0 %v2136
    %2158 = vmatprep.subr.mxu0 0.0
    %2159 = vmatpush1.msra.mxu0 %v2137
    %2160 = vmatprep.subr.mxu0 0.0
    %2161 = vmatpush1.msra.mxu0 0.0
    %2162 = vmatprep.subr.mxu0 0.0
    %2163 = vmatpush1.msra.mxu0 0.0
    %2164 = vmatprep.subr.mxu0 0.0
    %2165 = vmatpush1.msra.mxu0 0.0
    %2166 = vmatprep.subr.mxu0 0.0
    %2167 = vmatpush1.msra.mxu0 0.0
    %2168 = vmatprep.subr.mxu0 0.0
    %2169 = vmatpush1.msra.mxu0 0.0
    %2170 = vmatprep.subr.mxu0 0.0
    %2171 = vmatpush1.msra.mxu0 0.0
    %2172 = vmatprep.subr.mxu0 0.0
    %2173 = vmatpush1.msra.mxu0 0.0
    %2174 = vmatprep.subr.mxu0 0.0
    %2175 = vmatpush1.msra.mxu0 0.0
    %2176 = vmatprep.subr.mxu0 0.0
    %2177 = vmatpush1.msra.mxu0 0.0
    %2178 = vmatprep.subr.mxu0 0.0
    %2179 = vmatpush1.msra.mxu0 0.0
    %2180 = vmatprep.subr.mxu0 0.0
    %2181 = vmatpush1.msra.mxu0 0.0
    %2182 = vmatprep.subr.mxu0 0.0
    %2183 = vmatpush1.msra.mxu0 0.0
    %2184 = vmatprep.subr.mxu0 0.0
    %2185 = vmatpush1.msra.mxu0 0.0
    %2186 = vmatprep.subr.mxu0 0.0
    %2187 = vmatpush1.msra.mxu0 0.0
    %2188 = vmatprep.subr.mxu0 0.0
    %2189 = vmatpush1.msra.mxu0 0.0
    %2190 = vmatprep.subr.mxu0 0.0
    %2191 = vmatpush1.msra.mxu0 0.0
    %2192 = vmatprep.subr.mxu0 0.0
    %2193 = vmatpush1.msra.mxu0 0.0
    %2194 = vmatprep.subr.mxu0 0.0
    %2195 = vmatpush1.msra.mxu0 0.0
    %2196 = vmatprep.subr.mxu0 0.0
    %2197 = vmatpush1.msra.mxu0 0.0
    %2198 = vmatprep.subr.mxu0 0.0
    %2199 = vmatpush1.msra.mxu0 0.0
    %2200 = vmatprep.subr.mxu0 0.0
    %2201 = vmatpush1.msra.mxu0 0.0
    %2202 = vmatprep.subr.mxu0 0.0
    %2203 = vmatpush1.msra.mxu0 0.0
    %2204 = vmatprep.subr.mxu0 0.0
    %2205 = vmatpush1.msra.mxu0 0.0
    %2206 = vmatprep.subr.mxu0 0.0
    %2207 = vmatpush1.msra.mxu0 0.0
    %2208 = vmatprep.subr.mxu0 0.0
    %2209 = vmatpush1.msra.mxu0 0.0
    %2210 = vmatprep.mubr.f32.mxu0 0.0
    %2211 = vmatmul.mubr.f32.gmra.mrb[0].mxu0 %v2144
    %v2212 = vpop.f32.mrb[0].mxu0
    %v2213 = vadd.f32 %v2142, %v2212
    %v2214 = vpop.f32.mrb[0].mxu0
    %2215 = vdwg.mxu0
    %2217 = vrot.lane.b32.xlu0 %v2213, 28
    %v2218 = vpop.permute.xlu0 %2217
    %2220 = vrot.lane.b32.xlu0 %v2213, 56
    %v2221 = vpop.permute.xlu0 %2220
    %2223 = vrot.lane.b32.xlu0 %v2213, 84
    %v2224 = vpop.permute.xlu0 %2223
    %v2226 = vsel %vm386, %v2213, %v2218
    %v2227 = vsel %vm227, %v2226, %v2221
    %vm2228 = vcmask 687104
    %v2229 = vsel %vm2228, %v2227, %v2224
    %v2230 = vld [vmem:[#allocation5 + $0x4d0] sm:$0xff]
    %v2231 = vmul.f32 %v2229, %v2230
    %v2232 = vld [vmem:[#allocation5 + $0x4d8] sm:$0x3]
    %v2234 = vsel %vm463, %v2232, 0
    %2236 = vmatprep.subr.mxu0 0.0
    %2237 = vmatpush1.msra.mxu0 %v2231
    %2238 = vmatprep.subr.mxu0 0.0
    %2239 = vmatpush1.msra.mxu0 0.0
    %2240 = vmatprep.subr.mxu0 0.0
    %2241 = vmatpush1.msra.mxu0 0.0
    %2242 = vmatprep.subr.mxu0 0.0
    %2243 = vmatpush1.msra.mxu0 0.0
    %2244 = vmatprep.subr.mxu0 0.0
    %2245 = vmatpush1.msra.mxu0 0.0
    %2246 = vmatprep.subr.mxu0 0.0
    %2247 = vmatpush1.msra.mxu0 0.0
    %2248 = vmatprep.subr.mxu0 0.0
    %2249 = vmatpush1.msra.mxu0 0.0
    %2250 = vmatprep.subr.mxu0 0.0
    %2251 = vmatpush1.msra.mxu0 0.0
    %2252 = vmatprep.subr.mxu0 0.0
    %2253 = vmatpush1.msra.mxu0 0.0
    %2254 = vmatprep.subr.mxu0 0.0
    %2255 = vmatpush1.msra.mxu0 0.0
    %2256 = vmatprep.subr.mxu0 0.0
    %2257 = vmatpush1.msra.mxu0 0.0
    %2258 = vmatprep.subr.mxu0 0.0
    %2259 = vmatpush1.msra.mxu0 0.0
    %2260 = vmatprep.subr.mxu0 0.0
    %2261 = vmatpush1.msra.mxu0 0.0
    %2262 = vmatprep.subr.mxu0 0.0
    %2263 = vmatpush1.msra.mxu0 0.0
    %2264 = vmatprep.subr.mxu0 0.0
    %2265 = vmatpush1.msra.mxu0 0.0
    %2266 = vmatprep.subr.mxu0 0.0
    %2267 = vmatpush1.msra.mxu0 0.0
    %2268 = vmatprep.subr.mxu0 0.0
    %2269 = vmatpush1.msra.mxu0 0.0
    %2270 = vmatprep.subr.mxu0 0.0
    %2271 = vmatpush1.msra.mxu0 0.0
    %2272 = vmatprep.subr.mxu0 0.0
    %2273 = vmatpush1.msra.mxu0 0.0
    %2274 = vmatprep.subr.mxu0 0.0
    %2275 = vmatpush1.msra.mxu0 0.0
    %2276 = vmatprep.subr.mxu0 0.0
    %2277 = vmatpush1.msra.mxu0 0.0
    %2278 = vmatprep.subr.mxu0 0.0
    %2279 = vmatpush1.msra.mxu0 0.0
    %2280 = vmatprep.subr.mxu0 0.0
    %2281 = vmatpush1.msra.mxu0 0.0
    %2282 = vmatprep.subr.mxu0 0.0
    %2283 = vmatpush1.msra.mxu0 0.0
    %2284 = vmatprep.subr.mxu0 0.0
    %2285 = vmatpush1.msra.mxu0 0.0
    %2286 = vmatprep.subr.mxu0 0.0
    %2287 = vmatpush1.msra.mxu0 0.0
    %2288 = vmatprep.subr.mxu0 0.0
    %2289 = vmatpush1.msra.mxu0 0.0
    %2290 = vmatprep.subr.mxu0 0.0
    %2291 = vmatpush1.msra.mxu0 0.0
    %2292 = vmatprep.subr.mxu0 0.0
    %2293 = vmatpush1.msra.mxu0 0.0
    %2294 = vmatprep.subr.mxu0 0.0
    %2295 = vmatpush1.msra.mxu0 0.0
    %2296 = vmatprep.subr.mxu0 0.0
    %2297 = vmatpush1.msra.mxu0 0.0
    %2298 = vmatprep.subr.mxu0 0.0
    %2299 = vmatpush1.msra.mxu0 0.0
    %2300 = vmatprep.mubr.f32.mxu0 0.0
    %2301 = vmatmul.mubr.f32.gmra.mrb[0].mxu0 %v2234
    %v2302 = vpop.f32.mrb[0].mxu0
    %v2303 = vadd.f32 0.0, %v2302
    %v2304 = vpop.f32.mrb[0].mxu0
    %2305 = vdwg.mxu0
    %v2306 = vld [vmem:[#allocation5 + $0x368] sm:$0xff]
    %v2307 = vld [vmem:[#allocation5 + $0x370] sm:$0xff]
    %v2308 = vld [vmem:[#allocation5 + $0x378] sm:$0xff]
    %v2309 = vld [vmem:[#allocation5 + $0x380] sm:$0xff]
    %v2310 = vld [vmem:[#allocation5 + $0x388] sm:$0xff]
    %v2311 = vld [vmem:[#allocation5 + $0x390] sm:$0xff]
    %v2312 = vld [vmem:[#allocation5 + $0x398] sm:$0xff]
    %v2313 = vld [vmem:[#allocation5 + $0x3a0] sm:$0xff]
    %v2314 = vld [vmem:[#allocation5 + $0x3a8] sm:$0xff]
    %v2315 = vld [vmem:[#allocation5 + $0x3b0] sm:$0xff]
    %v2316 = vld [vmem:[#allocation5 + $0x3b8] sm:$0xff]
    %v2317 = vld [vmem:[#allocation5 + $0x3c0] sm:$0xff]
    %v2318 = vld [vmem:[#allocation5 + $0x3c8] sm:$0xff]
    %v2319 = vld [vmem:[#allocation5 + $0x3d0] sm:$0xff]
    %v2320 = vld [vmem:[#allocation5 + $0x3d8] sm:$0x1]
    %v2321 = vlaneseq
    %v2322 = vshrl.u32 %v2321, 7
    %v2323 = vsub.s32 0, %v2322
    %v2324 = vrot.slane %v2320, %v2323
    %v2326 = vsel %vm907, %v2303, 0
    %2328 = vmatprep.subr.mxu0 0.0
    %2329 = vmatpush1.msra.mxu0 %v2306
    %2330 = vmatprep.subr.mxu0 0.0
    %2331 = vmatpush1.msra.mxu0 %v2307
    %2332 = vmatprep.subr.mxu0 0.0
    %2333 = vmatpush1.msra.mxu0 %v2308
    %2334 = vmatprep.subr.mxu0 0.0
    %2335 = vmatpush1.msra.mxu0 %v2309
    %2336 = vmatprep.subr.mxu0 0.0
    %2337 = vmatpush1.msra.mxu0 %v2310
    %2338 = vmatprep.subr.mxu0 0.0
    %2339 = vmatpush1.msra.mxu0 %v2311
    %2340 = vmatprep.subr.mxu0 0.0
    %2341 = vmatpush1.msra.mxu0 %v2312
    %2342 = vmatprep.subr.mxu0 0.0
    %2343 = vmatpush1.msra.mxu0 %v2313
    %2344 = vmatprep.subr.mxu0 0.0
    %2345 = vmatpush1.msra.mxu0 %v2314
    %2346 = vmatprep.subr.mxu0 0.0
    %2347 = vmatpush1.msra.mxu0 %v2315
    %2348 = vmatprep.subr.mxu0 0.0
    %2349 = vmatpush1.msra.mxu0 %v2316
    %2350 = vmatprep.subr.mxu0 0.0
    %2351 = vmatpush1.msra.mxu0 %v2317
    %2352 = vmatprep.subr.mxu0 0.0
    %2353 = vmatpush1.msra.mxu0 %v2318
    %2354 = vmatprep.subr.mxu0 0.0
    %2355 = vmatpush1.msra.mxu0 %v2319
    %2356 = vmatprep.subr.mxu0 0.0
    %2357 = vmatpush1.msra.mxu0 0.0
    %2358 = vmatprep.subr.mxu0 0.0
    %2359 = vmatpush1.msra.mxu0 0.0
    %2360 = vmatprep.subr.mxu0 0.0
    %2361 = vmatpush1.msra.mxu0 0.0
    %2362 = vmatprep.subr.mxu0 0.0
    %2363 = vmatpush1.msra.mxu0 0.0
    %2364 = vmatprep.subr.mxu0 0.0
    %2365 = vmatpush1.msra.mxu0 0.0
    %2366 = vmatprep.subr.mxu0 0.0
    %2367 = vmatpush1.msra.mxu0 0.0
    %2368 = vmatprep.subr.mxu0 0.0
    %2369 = vmatpush1.msra.mxu0 0.0
    %2370 = vmatprep.subr.mxu0 0.0
    %2371 = vmatpush1.msra.mxu0 0.0
    %2372 = vmatprep.subr.mxu0 0.0
    %2373 = vmatpush1.msra.mxu0 0.0
    %2374 = vmatprep.subr.mxu0 0.0
    %2375 = vmatpush1.msra.mxu0 0.0
    %2376 = vmatprep.subr.mxu0 0.0
    %2377 = vmatpush1.msra.mxu0 0.0
    %2378 = vmatprep.subr.mxu0 0.0
    %2379 = vmatpush1.msra.mxu0 0.0
    %2380 = vmatprep.subr.mxu0 0.0
    %2381 = vmatpush1.msra.mxu0 0.0
    %2382 = vmatprep.subr.mxu0 0.0
    %2383 = vmatpush1.msra.mxu0 0.0
    %2384 = vmatprep.subr.mxu0 0.0
    %2385 = vmatpush1.msra.mxu0 0.0
    %2386 = vmatprep.subr.mxu0 0.0
    %2387 = vmatpush1.msra.mxu0 0.0
    %2388 = vmatprep.subr.mxu0 0.0
    %2389 = vmatpush1.msra.mxu0 0.0
    %2390 = vmatprep.subr.mxu0 0.0
    %2391 = vmatpush1.msra.mxu0 0.0
    %2392 = vmatprep.mubr.f32.mxu0 0.0
    %2393 = vmatmul.mubr.f32.gmra.mrb[0].mxu0 %v2326
    %v2394 = vpop.f32.mrb[0].mxu0
    %v2395 = vadd.f32 %v2324, %v2394
    %v2396 = vpop.f32.mrb[0].mxu0
    %2397 = vdwg.mxu0
    %v2398 = vld [vmem:[#allocation5 + $0x490] sm:$0xff]
    %v2399 = vld [vmem:[#allocation5 + $0x498] sm:$0xff]
    %v2400 = vld [vmem:[#allocation5 + $0x4a0] sm:$0xff]
    %v2401 = vld [vmem:[#allocation5 + $0x4a8] sm:$0xff]
    %v2402 = vld [vmem:[#allocation5 + $0x4b0] sm:$0xff]
    %v2403 = vld [vmem:[#allocation5 + $0x4b8] sm:$0xff]
    %v2404 = vld [vmem:[#allocation5 + $0x4c0] sm:$0xff]
    %v2405 = vmul.f32 %v2395, %v2395
    %v2407 = vsel %vm227, %v2405, 0
    %2409 = vmatprep.subr.mxu0 0.0
    %2410 = vmatpush1.msra.mxu0 %v2398
    %2411 = vmatprep.subr.mxu0 0.0
    %2412 = vmatpush1.msra.mxu0 %v2399
    %2413 = vmatprep.subr.mxu0 0.0
    %2414 = vmatpush1.msra.mxu0 %v2400
    %2415 = vmatprep.subr.mxu0 0.0
    %2416 = vmatpush1.msra.mxu0 %v2401
    %2417 = vmatprep.subr.mxu0 0.0
    %2418 = vmatpush1.msra.mxu0 %v2402
    %2419 = vmatprep.subr.mxu0 0.0
    %2420 = vmatpush1.msra.mxu0 %v2403
    %2421 = vmatprep.subr.mxu0 0.0
    %2422 = vmatpush1.msra.mxu0 %v2404
    %2423 = vmatprep.subr.mxu0 0.0
    %2424 = vmatpush1.msra.mxu0 0.0
    %2425 = vmatprep.subr.mxu0 0.0
    %2426 = vmatpush1.msra.mxu0 0.0
    %2427 = vmatprep.subr.mxu0 0.0
    %2428 = vmatpush1.msra.mxu0 0.0
    %2429 = vmatprep.subr.mxu0 0.0
    %2430 = vmatpush1.msra.mxu0 0.0
    %2431 = vmatprep.subr.mxu0 0.0
    %2432 = vmatpush1.msra.mxu0 0.0
    %2433 = vmatprep.subr.mxu0 0.0
    %2434 = vmatpush1.msra.mxu0 0.0
    %2435 = vmatprep.subr.mxu0 0.0
    %2436 = vmatpush1.msra.mxu0 0.0
    %2437 = vmatprep.subr.mxu0 0.0
    %2438 = vmatpush1.msra.mxu0 0.0
    %2439 = vmatprep.subr.mxu0 0.0
    %2440 = vmatpush1.msra.mxu0 0.0
    %2441 = vmatprep.subr.mxu0 0.0
    %2442 = vmatpush1.msra.mxu0 0.0
    %2443 = vmatprep.subr.mxu0 0.0
    %2444 = vmatpush1.msra.mxu0 0.0
    %2445 = vmatprep.subr.mxu0 0.0
    %2446 = vmatpush1.msra.mxu0 0.0
    %2447 = vmatprep.subr.mxu0 0.0
    %2448 = vmatpush1.msra.mxu0 0.0
    %2449 = vmatprep.subr.mxu0 0.0
    %2450 = vmatpush1.msra.mxu0 0.0
    %2451 = vmatprep.subr.mxu0 0.0
    %2452 = vmatpush1.msra.mxu0 0.0
    %2453 = vmatprep.subr.mxu0 0.0
    %2454 = vmatpush1.msra.mxu0 0.0
    %2455 = vmatprep.subr.mxu0 0.0
    %2456 = vmatpush1.msra.mxu0 0.0
    %2457 = vmatprep.subr.mxu0 0.0
    %2458 = vmatpush1.msra.mxu0 0.0
    %2459 = vmatprep.subr.mxu0 0.0
    %2460 = vmatpush1.msra.mxu0 0.0
    %2461 = vmatprep.subr.mxu0 0.0
    %2462 = vmatpush1.msra.mxu0 0.0
    %2463 = vmatprep.subr.mxu0 0.0
    %2464 = vmatpush1.msra.mxu0 0.0
    %2465 = vmatprep.subr.mxu0 0.0
    %2466 = vmatpush1.msra.mxu0 0.0
    %2467 = vmatprep.subr.mxu0 0.0
    %2468 = vmatpush1.msra.mxu0 0.0
    %2469 = vmatprep.subr.mxu0 0.0
    %2470 = vmatpush1.msra.mxu0 0.0
    %2471 = vmatprep.subr.mxu0 0.0
    %2472 = vmatpush1.msra.mxu0 0.0
    %2473 = vmatprep.mubr.f32.mxu0 0.0
    %2474 = vmatmul.mubr.f32.gmra.mrb[0].mxu0 %v2407
    %v2475 = vpop.f32.mrb[0].mxu0
    %v2476 = vadd.f32 1e-06, %v2475
    %v2477 = vpop.f32.mrb[0].mxu0
    %2478 = vdwg.mxu0
    %v2479 = vrsqrt.pop %v2476
    %v2480 = vmul.f32 %v2476, %v2479
    %vm2481 = vcmp.eq.f32.partialorder %v2476, inf
    %v2482 = vsel %vm2481, %v2476, %v2480
    %vm2483 = vcmp.eq.f32.partialorder %v2476, 0.0
    %v2484 = vand.u32 %v2476, 2147483648
    %v2485 = vsel %vm2483, %v2484, %v2482
    %v2486 = vsub.f32 %v2485, 1.0
    %v2487 = vxor.u32 %v2486, 2147483648
    %v2488 = vmul.f32 %v2487, 1.442695
    %v2489 = vpow.pop %v2488
    %v2490 = vadd.f32 %v2489, 1.0
    %v2491 = vrcp.pop %v2490
    %v2492 = vmul.f32 1.0, %v2491
    %v2494 = vsel %vm463, %v2492, 0
    %v2497 = vsel %vm463, %v2398, 0
    %v2500 = vsel %vm463, %v2399, 0
    %v2503 = vsel %vm463, %v2400, 0
    %v2506 = vsel %vm463, %v2401, 0
    %v2509 = vsel %vm463, %v2402, 0
    %v2512 = vsel %vm463, %v2403, 0
    %v2515 = vsel %vm463, %v2404, 0
    %2517 = vmatprep.subr.mxu0 0.0
    %2518 = vmatpush1.xpose.msra.mxu0 %v2497
    %2519 = vmatprep.subr.mxu0 0.0
    %2520 = vmatpush1.xpose.msra.mxu0 %v2500
    %2521 = vmatprep.subr.mxu0 0.0
    %2522 = vmatpush1.xpose.msra.mxu0 %v2503
    %2523 = vmatprep.subr.mxu0 0.0
    %2524 = vmatpush1.xpose.msra.mxu0 %v2506
    %2525 = vmatprep.subr.mxu0 0.0
    %2526 = vmatpush1.xpose.msra.mxu0 %v2509
    %2527 = vmatprep.subr.mxu0 0.0
    %2528 = vmatpush1.xpose.msra.mxu0 %v2512
    %2529 = vmatprep.subr.mxu0 0.0
    %2530 = vmatpush1.xpose.msra.mxu0 %v2515
    %2531 = vmatprep.subr.mxu0 0.0
    %2532 = vmatpush1.xpose.msra.mxu0 0.0
    %2533 = vmatprep.subr.mxu0 0.0
    %2534 = vmatpush1.xpose.msra.mxu0 0.0
    %2535 = vmatprep.subr.mxu0 0.0
    %2536 = vmatpush1.xpose.msra.mxu0 0.0
    %2537 = vmatprep.subr.mxu0 0.0
    %2538 = vmatpush1.xpose.msra.mxu0 0.0
    %2539 = vmatprep.subr.mxu0 0.0
    %2540 = vmatpush1.xpose.msra.mxu0 0.0
    %2541 = vmatprep.subr.mxu0 0.0
    %2542 = vmatpush1.xpose.msra.mxu0 0.0
    %2543 = vmatprep.subr.mxu0 0.0
    %2544 = vmatpush1.xpose.msra.mxu0 0.0
    %2545 = vmatprep.subr.mxu0 0.0
    %2546 = vmatpush1.xpose.msra.mxu0 0.0
    %2547 = vmatprep.subr.mxu0 0.0
    %2548 = vmatpush1.xpose.msra.mxu0 0.0
    %2549 = vmatprep.subr.mxu0 0.0
    %2550 = vmatpush1.xpose.msra.mxu0 0.0
    %2551 = vmatprep.subr.mxu0 0.0
    %2552 = vmatpush1.xpose.msra.mxu0 0.0
    %2553 = vmatprep.subr.mxu0 0.0
    %2554 = vmatpush1.xpose.msra.mxu0 0.0
    %2555 = vmatprep.subr.mxu0 0.0
    %2556 = vmatpush1.xpose.msra.mxu0 0.0
    %2557 = vmatprep.subr.mxu0 0.0
    %2558 = vmatpush1.xpose.msra.mxu0 0.0
    %2559 = vmatprep.subr.mxu0 0.0
    %2560 = vmatpush1.xpose.msra.mxu0 0.0
    %2561 = vmatprep.subr.mxu0 0.0
    %2562 = vmatpush1.xpose.msra.mxu0 0.0
    %2563 = vmatprep.subr.mxu0 0.0
    %2564 = vmatpush1.xpose.msra.mxu0 0.0
    %2565 = vmatprep.subr.mxu0 0.0
    %2566 = vmatpush1.xpose.msra.mxu0 0.0
    %2567 = vmatprep.subr.mxu0 0.0
    %2568 = vmatpush1.xpose.msra.mxu0 0.0
    %2569 = vmatprep.subr.mxu0 0.0
    %2570 = vmatpush1.xpose.msra.mxu0 0.0
    %2571 = vmatprep.subr.mxu0 0.0
    %2572 = vmatpush1.xpose.msra.mxu0 0.0
    %2573 = vmatprep.subr.mxu0 0.0
    %2574 = vmatpush1.xpose.msra.mxu0 0.0
    %2575 = vmatprep.subr.mxu0 0.0
    %2576 = vmatpush1.xpose.msra.mxu0 0.0
    %2577 = vmatprep.subr.mxu0 0.0
    %2578 = vmatpush1.xpose.msra.mxu0 0.0
    %2579 = vmatprep.subr.mxu0 0.0
    %2580 = vmatpush1.xpose.msra.mxu0 0.0
    %2581 = vmatprep.mubr.f32.mxu0 0.0
    %2582 = vmatmul.mubr.f32.gmra.mrb[0].mxu0 %v2494
    %v2583 = vpop.f32.mrb[0].mxu0
    %v2584 = vadd.f32 0.0, %v2583
    %v2585 = vpop.f32.mrb[0].mxu0
    %2586 = vdwg.mxu0
    %v2587 = vmul.f32 %v2395, %v2584
    %v2588 = vld [vmem:[#allocation5 + $0x3e0] sm:$0xff]
    %v2589 = vld [vmem:[#allocation5 + $0x3e8] sm:$0xff]
    %v2590 = vld [vmem:[#allocation5 + $0x3f0] sm:$0xff]
    %v2591 = vld [vmem:[#allocation5 + $0x3f8] sm:$0xff]
    %v2592 = vld [vmem:[#allocation5 + $0x400] sm:$0xff]
    %v2593 = vld [vmem:[#allocation5 + $0x408] sm:$0xff]
    %v2594 = vld [vmem:[#allocation5 + $0x410] sm:$0xff]
    %v2595 = vld [vmem:[#allocation5 + $0x418] sm:$0x1]
    %v2596 = vlaneseq
    %v2597 = vshrl.u32 %v2596, 7
    %v2598 = vsub.s32 0, %v2597
    %v2599 = vrot.slane %v2595, %v2598
    %v2601 = vsel %vm227, %v2587, 0
    %2603 = vmatprep.subr.mxu0 0.0
    %2604 = vmatpush1.msra.mxu0 %v2588
    %2605 = vmatprep.subr.mxu0 0.0
    %2606 = vmatpush1.msra.mxu0 %v2589
    %2607 = vmatprep.subr.mxu0 0.0
    %2608 = vmatpush1.msra.mxu0 %v2590
    %2609 = vmatprep.subr.mxu0 0.0
    %2610 = vmatpush1.msra.mxu0 %v2591
    %2611 = vmatprep.subr.mxu0 0.0
    %2612 = vmatpush1.msra.mxu0 %v2592
    %2613 = vmatprep.subr.mxu0 0.0
    %2614 = vmatpush1.msra.mxu0 %v2593
    %2615 = vmatprep.subr.mxu0 0.0
    %2616 = vmatpush1.msra.mxu0 %v2594
    %2617 = vmatprep.subr.mxu0 0.0
    %2618 = vmatpush1.msra.mxu0 0.0
    %2619 = vmatprep.subr.mxu0 0.0
    %2620 = vmatpush1.msra.mxu0 0.0
    %2621 = vmatprep.subr.mxu0 0.0
    %2622 = vmatpush1.msra.mxu0 0.0
    %2623 = vmatprep.subr.mxu0 0.0
    %2624 = vmatpush1.msra.mxu0 0.0
    %2625 = vmatprep.subr.mxu0 0.0
    %2626 = vmatpush1.msra.mxu0 0.0
    %2627 = vmatprep.subr.mxu0 0.0
    %2628 = vmatpush1.msra.mxu0 0.0
    %2629 = vmatprep.subr.mxu0 0.0
    %2630 = vmatpush1.msra.mxu0 0.0
    %2631 = vmatprep.subr.mxu0 0.0
    %2632 = vmatpush1.msra.mxu0 0.0
    %2633 = vmatprep.subr.mxu0 0.0
    %2634 = vmatpush1.msra.mxu0 0.0
    %2635 = vmatprep.subr.mxu0 0.0
    %2636 = vmatpush1.msra.mxu0 0.0
    %2637 = vmatprep.subr.mxu0 0.0
    %2638 = vmatpush1.msra.mxu0 0.0
    %2639 = vmatprep.subr.mxu0 0.0
    %2640 = vmatpush1.msra.mxu0 0.0
    %2641 = vmatprep.subr.mxu0 0.0
    %2642 = vmatpush1.msra.mxu0 0.0
    %2643 = vmatprep.subr.mxu0 0.0
    %2644 = vmatpush1.msra.mxu0 0.0
    %2645 = vmatprep.subr.mxu0 0.0
    %2646 = vmatpush1.msra.mxu0 0.0
    %2647 = vmatprep.subr.mxu0 0.0
    %2648 = vmatpush1.msra.mxu0 0.0
    %2649 = vmatprep.subr.mxu0 0.0
    %2650 = vmatpush1.msra.mxu0 0.0
    %2651 = vmatprep.subr.mxu0 0.0
    %2652 = vmatpush1.msra.mxu0 0.0
    %2653 = vmatprep.subr.mxu0 0.0
    %2654 = vmatpush1.msra.mxu0 0.0
    %2655 = vmatprep.subr.mxu0 0.0
    %2656 = vmatpush1.msra.mxu0 0.0
    %2657 = vmatprep.subr.mxu0 0.0
    %2658 = vmatpush1.msra.mxu0 0.0
    %2659 = vmatprep.subr.mxu0 0.0
    %2660 = vmatpush1.msra.mxu0 0.0
    %2661 = vmatprep.subr.mxu0 0.0
    %2662 = vmatpush1.msra.mxu0 0.0
    %2663 = vmatprep.subr.mxu0 0.0
    %2664 = vmatpush1.msra.mxu0 0.0
    %2665 = vmatprep.subr.mxu0 0.0
    %2666 = vmatpush1.msra.mxu0 0.0
    %2667 = vmatprep.mubr.f32.mxu0 0.0
    %2668 = vmatmul.mubr.f32.gmra.mrb[0].mxu0 %v2601
    %v2669 = vpop.f32.mrb[0].mxu0
    %v2670 = vadd.f32 %v2599, %v2669
    %v2671 = vpop.f32.mrb[0].mxu0
    %2672 = vdwg.mxu0
    %vm2673 = vcmask 451584
    %2674 = vst.msk [vmem:[#allocation7] sm:$0x3] %vm2673, %v2670
    // Predicated region
    $region22: #{forward.1} parent=1 // pred_check
      _
    $region23: #{forward.1} parent=1 // pred_check_branch
      %2676 = sbr.rel (0) target = $region25
    $region24: #{forward.1} parent=1 // pred_region
      %s2678 = ssub.s32 32, 32
      %2679 = vsyncadd [#allocation4], %s2678
      %s2681 = sshll.u32 [#allocation7], 4
      %s2682 = int_to_ptr.vmem [resolvable:$true] %s2681
      %2684 = dma.vmem_to_hbm [thread:$0]  %s2682, 32, %s3, [#allocation4]
    $region25: #{forward.1} parent=1 // pred_fallthru
      _
    // Predicated region
    $region26: #{forward.1} parent=1 // pred_check
      _
    $region27: #{forward.1} parent=1 // pred_check_branch
      %2686 = sbr.rel (0) target = $region29
    $region28: #{forward.1} parent=1 // pred_region
      %2687 = dma.done [#allocation4], 32
    $region29: #{forward.1} parent=1 // pred_fallthru
      _
    %2688 = vsyncpa [#allocation3], 1
    %2689 = vsyncpa [#allocation6], 1
    %2690 = vsyncpa [#allocation4], 1

</llo_original>
